<compile_context>
chip_gen: v7x
topology: tpu7x:2x2x1
jax: 0.10.0
libtpu: 0.0.40
codegen_flags: <defaults>
</compile_context>

<pallas_src>
import functools

import numpy as np
import jax
import jax.numpy as jnp
from jax.experimental import pallas as pl
from jax.experimental.pallas import tpu as pltpu


# ==========================================================================
# Fused kernel: stem + multi-scale pool + attention + classifier + heads
# ==========================================================================
def _fused_forward_kernel(num_classes,
                          p_ref, ws_ref, bs_ref,
                          wa1_ref, ba1_ref, wa2_ref, ba2_ref,
                          w1_ref, b1_ref, wo_ref, bo_ref,
                          out_ref, feat_ref):
    """One grid step = TB images; all intermediates stay in VMEM."""
    TB, HpWp, K = p_ref.shape
    C = ws_ref.shape[1]
    Q = HpWp // 4                                  # pixels per 2x2 quadrant

    # ---- backbone stand-in: patchify conv (im2col matmul, bf16) + ReLU ----
    p2 = p_ref[...].reshape(TB * HpWp, K)                        # bf16 LHS
    fm = jnp.maximum(
        jnp.dot(p2, ws_ref[...], preferred_element_type=jnp.float32)
        + bs_ref[...],
        0.0)                                                     # (TB*HpWp, C) f32

    # ---- multi-scale pooling.  Rows are quadrant-major (h2,w2,hh,wh), so
    # each quadrant is a contiguous, sublane-aligned block of Q rows.
    fm4 = fm.reshape(TB, 4, Q, C)
    qsums = [jnp.sum(fm4[:, k], axis=1) for k in range(4)]      # 4 x (TB, C)
    q = [s * (1.0 / Q) for s in qsums]                          # quadrant means
    avg = (qsums[0] + qsums[1] + qsums[2] + qsums[3]) * (1.0 / HpWp)
    mx = jnp.max(fm.reshape(TB, HpWp, C), axis=1)               # global max

    # kernel lane order: [avg | max | q00 | q01 | q10 | q11]
    combined = jnp.concatenate([avg, mx] + q, axis=1)           # (TB, 6C) f32

    # ---- attention: Linear -> ReLU -> Linear -> Sigmoid -> scale ----------
    h = jnp.maximum(
        jnp.dot(combined.astype(jnp.bfloat16), wa1_ref[...],
                preferred_element_type=jnp.float32) + ba1_ref[...],
        0.0)                                                     # (TB, 256)
    att = jax.nn.sigmoid(
        jnp.dot(h.astype(jnp.bfloat16), wa2_ref[...],
                preferred_element_type=jnp.float32) + ba2_ref[...])
    feat = combined * att
    feat_ref[...] = feat                                         # (TB, 6C)

    # ---- classifier (BN1/BN2 folded into the Linear, Dropout = eval id) ---
    xh = jnp.maximum(
        jnp.dot(feat.astype(jnp.bfloat16), w1_ref[...],
                preferred_element_type=jnp.float32) + b1_ref[...],
        0.0)                                                     # (TB, 3C)

    # ---- fused [logits | sigmoid(uncertainty) | 0-pad] 128-lane head ------
    raw = (jnp.dot(xh.astype(jnp.bfloat16), wo_ref[...],
                   preferred_element_type=jnp.float32) + bo_ref[...])
    col = jax.lax.broadcasted_iota(jnp.int32, raw.shape, 1)
    out_ref[...] = jnp.where(col == num_classes, jax.nn.sigmoid(raw), raw)


def _fused_pallas_forward(patches, kp, *, TB, num_classes):
    B_pad, HpWp, K = patches.shape
    C = kp["w_stem"].shape[1]
    F = 6 * C
    Fh = kp["wa1"].shape[1]         # attention hidden, padded to 256 lanes
    F2 = kp["w1"].shape[1]
    kernel = functools.partial(_fused_forward_kernel, num_classes)
    const = lambda b: (0, 0)
    return pl.pallas_call(
        kernel,
        out_shape=(
            jax.ShapeDtypeStruct((B_pad, 128), jnp.float32),   # logits|uncert slab
            jax.ShapeDtypeStruct((B_pad, F), jnp.float32),     # attended features
        ),
        grid=(B_pad // TB,),
        in_specs=[
            pl.BlockSpec((TB, HpWp, K), lambda b: (b, 0, 0)),  # patches (batch tile)
            pl.BlockSpec((K, C), const),                       # w_stem (bf16)
            pl.BlockSpec((1, C), const),                       # b_stem
            pl.BlockSpec((F, Fh), const),                      # attention W1 (bf16)
            pl.BlockSpec((1, Fh), const),
            pl.BlockSpec((Fh, F), const),                      # attention W2 (bf16)
            pl.BlockSpec((1, F), const),
            pl.BlockSpec((F, F2), const),                      # BN-folded Linear
            pl.BlockSpec((1, F2), const),
            pl.BlockSpec((F2, 128), const),                    # fused heads
            pl.BlockSpec((1, 128), const),
        ],
        out_specs=(
            pl.BlockSpec((TB, 128), lambda b: (b, 0)),
            pl.BlockSpec((TB, F), lambda b: (b, 0)),
        ),
        compiler_params=pltpu.CompilerParams(
            dimension_semantics=("parallel",),
            vmem_limit_bytes=32 * 1024 * 1024),
    )(patches, kp["w_stem"], kp["b_stem"],
      kp["wa1"], kp["ba1"], kp["wa2"], kp["ba2"],
      kp["w1"], kp["b1"], kp["w_out"], kp["b_out"])


# ==========================================================================
# Parameter preparation (offline): BN fold, lane padding/reordering, bf16
# ==========================================================================
def _feature_perms(C):
    """Maps between PyTorch feature order and the kernel's lane order."""
    base = np.arange(2 * C)
    idx = np.arange(4 * C)
    # kernel index 2C + k*C + c   <->   torch index 2C + c*4 + k
    c_t, k_t = idx // 4, idx % 4
    k_of_t = np.concatenate([base, 2 * C + k_t * C + c_t])     # torch -> kernel
    k_k, c_k = idx // C, idx % C
    t_of_k = np.concatenate([base, 2 * C + c_k * 4 + k_k])     # kernel -> torch
    return jnp.asarray(t_of_k, jnp.int32), jnp.asarray(k_of_t, jnp.int32)


def prepare_kernel_params(p, *, num_features, num_classes, eps=1e-5):
    """Fold eval-mode BN into the classifier Linear, permute feature-dim
    weights into the kernel's lane order, pad the attention hidden dim to a
    lane multiple, fuse the two heads, and cast matmul weights to bf16.
    Runs once, outside the forward pass."""
    C = num_features
    F = 6 * C
    F4, F2 = F // 4, F // 2
    Fh = 128 * pl.cdiv(F4, 128)                   # 192 -> 256 lanes
    t_of_k, k_of_t = _feature_perms(C)
    bf16 = jnp.bfloat16

    # attention (rows/cols permuted into kernel lane order, hidden padded)
    wa1 = jnp.zeros((F, Fh), jnp.float32).at[:, :F4].set(p["wa1"][t_of_k, :])
    ba1 = jnp.zeros((1, Fh), jnp.float32).at[:, :F4].set(p["ba1"])
    wa2 = jnp.zeros((Fh, F), jnp.float32).at[:F4, :].set(p["wa2"][:, t_of_k])
    ba2 = p["ba2"][:, t_of_k]

    # BN1 -> Linear -> BN2 affine fold (Dropout = identity in eval mode)
    s1 = p["bn1_g"] / jnp.sqrt(p["bn1_rv"] + eps)
    t1 = p["bn1_b"] - p["bn1_rm"] * s1
    s2 = p["bn2_g"] / jnp.sqrt(p["bn2_rv"] + eps)
    t2 = p["bn2_b"] - p["bn2_rm"] * s2
    w1_eff = (s1.T * p["w1"]) * s2                      # (F, F//2)
    b1_eff = (t1 @ p["w1"] + p["b1"]) * s2 + t2         # (1, F//2)

    # fuse classifier + uncertainty heads into one 128-lane output matmul
    w_out = jnp.zeros((F2, 128), jnp.float32)
    w_out = w_out.at[:, :num_classes].set(p["wc"])
    w_out = w_out.at[:, num_classes:num_classes + 1].set(p["wu"])
    b_out = jnp.zeros((1, 128), jnp.float32)
    b_out = b_out.at[:, :num_classes].set(p["bc"])
    b_out = b_out.at[:, num_classes:num_classes + 1].set(p["bu"])

    return {
        "w_stem": p["w_stem"].astype(bf16), "b_stem": p["b_stem"],
        "wa1": wa1.astype(bf16), "ba1": ba1,
        "wa2": wa2.astype(bf16), "ba2": ba2,
        "w1": w1_eff[t_of_k, :].astype(bf16), "b1": b1_eff,
        "w_out": w_out.astype(bf16), "b_out": b_out,
        "k_of_t": k_of_t,          # features: kernel order -> torch order
    }


# ==========================================================================
# Full forward
# ==========================================================================
@functools.partial(jax.jit, static_argnames=("patch", "num_classes"))
def modern_nucleus_classifier_forward(x, kp, patch=4, num_classes=5):
    B, Cin, H, W = x.shape
    P = patch
    assert H % P == 0 and W % P == 0
    Hp, Wp = H // P, W // P
    assert Hp % 2 == 0 and Wp % 2 == 0   # TODO(synk): odd adaptive-pool bins
    Hh, Wh = Hp // 2, Wp // 2
    K = Cin * P * P

    # Quadrant-major im2col of non-overlapping PxP patches: rows ordered
    # (h2, w2, hh, wh), columns (c, pi, pj) (matches w_stem).  Kept UNPADDED
    # (K = 48 == full array dim is a legal block) and cast to bf16.
    patches = (x.reshape(B, Cin, 2, Hh, P, 2, Wh, P)
                 .transpose(0, 2, 5, 3, 6, 1, 4, 7)
                 .reshape(B, Hp * Wp, K)
                 .astype(jnp.bfloat16))

    # Batch tile: multiple of 8 for unmasked sublane-aligned stores; cap 128
    # so a large batch still gives >=2 parallel grid steps (v7x: 2 TCs).
    B_pad = 8 * pl.cdiv(B, 8)
    TB = B_pad if B_pad <= 128 else 128
    B_pad = TB * pl.cdiv(B_pad, TB)
    if B_pad != B:
        patches = jnp.pad(patches, ((0, B_pad - B), (0, 0), (0, 0)))

    out_slab, feat_k = _fused_pallas_forward(patches, kp, TB=TB,
                                             num_classes=num_classes)

    logits = out_slab[:B, :num_classes]
    uncertainty = out_slab[:B, num_classes:num_classes + 1]
    # back to PyTorch's cat([avg, max, (B,C,2,2).flatten(1)], dim=1) ordering
    features = jnp.take(feat_k[:B, :], kp["k_of_t"], axis=1)
    return {"logits": logits, "uncertainty": uncertainty, "features": features}


# ==========================================================================
# Deterministic raw parameters (PyTorch layout, eval-mode BN stats)
# ==========================================================================
def init_params(key, num_classes=5, cin=3, patch=4, num_features=128):
    F = 6 * num_features
    ks = jax.random.split(key, 16)
    f32 = jnp.float32

    def lin(k, fi, fo):
        return jax.random.normal(k, (fi, fo), f32) / jnp.sqrt(jnp.float32(fi))

    return {
        # backbone stand-in (patchify conv, kernel = stride = patch)
        "w_stem": lin(ks[0], cin * patch * patch, num_features),
        "b_stem": 0.01 * jax.random.normal(ks[1], (1, num_features), f32),
        # attention
        "wa1": lin(ks[2], F, F // 4), "ba1": jnp.zeros((1, F // 4), f32),
        "wa2": lin(ks[3], F // 4, F), "ba2": jnp.zeros((1, F), f32),
        # classifier BN1 (eval-mode running stats)
        "bn1_g": 1.0 + 0.1 * jax.random.normal(ks[4], (1, F), f32),
        "bn1_b": 0.1 * jax.random.normal(ks[5], (1, F), f32),
        "bn1_rm": 0.1 * jax.random.normal(ks[6], (1, F), f32),
        "bn1_rv": 1.0 + 0.5 * jax.random.uniform(ks[7], (1, F), f32),
        # classifier Linear F -> F//2
        "w1": lin(ks[8], F, F // 2), "b1": jnp.zeros((1, F // 2), f32),
        # classifier BN2
        "bn2_g": 1.0 + 0.1 * jax.random.normal(ks[9], (1, F // 2), f32),
        "bn2_b": 0.1 * jax.random.normal(ks[10], (1, F // 2), f32),
        "bn2_rm": 0.1 * jax.random.normal(ks[11], (1, F // 2), f32),
        "bn2_rv": 1.0 + 0.5 * jax.random.uniform(ks[12], (1, F // 2), f32),
        # heads
        "wc": lin(ks[13], F // 2, num_classes),
        "bc": jnp.zeros((1, num_classes), f32),
        "wu": lin(ks[14], F // 2, 1), "bu": jnp.zeros((1, 1), f32),
    }


# Pure-JAX f32 reference (torch ordering / eval semantics) for correctness.
def _reference_forward(x, p, *, patch, num_classes, num_features, eps=1e-5):
    B, Cin, H, W = x.shape
    P = patch
    Hp, Wp = H // P, W // P
    C = num_features
    K = Cin * P * P
    patches = (x.reshape(B, Cin, Hp, P, Wp, P)
                 .transpose(0, 2, 4, 1, 3, 5)
                 .reshape(B, Hp * Wp, K))
    fm = jnp.maximum(patches @ p["w_stem"] + p["b_stem"], 0.0)
    fm = fm.reshape(B, Hp, Wp, C)
    avg = fm.mean(axis=(1, 2))
    mx = fm.max(axis=(1, 2))
    Hh, Wh = Hp // 2, Wp // 2
    q = fm.reshape(B, 2, Hh, 2, Wh, C).mean(axis=(2, 4))       # (B, 2, 2, C)
    q_t = jnp.transpose(q, (0, 3, 1, 2)).reshape(B, 4 * C)     # torch flatten
    combined = jnp.concatenate([avg, mx, q_t], axis=1)
    h = jnp.maximum(combined @ p["wa1"] + p["ba1"], 0.0)
    att = jax.nn.sigmoid(h @ p["wa2"] + p["ba2"])
    feat = combined * att
    s1 = p["bn1_g"] / jnp.sqrt(p["bn1_rv"] + eps)
    t1 = p["bn1_b"] - p["bn1_rm"] * s1
    y = (feat * s1 + t1) @ p["w1"] + p["b1"]
    s2 = p["bn2_g"] / jnp.sqrt(p["bn2_rv"] + eps)
    t2 = p["bn2_b"] - p["bn2_rm"] * s2
    xh = jnp.maximum(y * s2 + t2, 0.0)
    logits = xh @ p["wc"] + p["bc"]
    unc = jax.nn.sigmoid(xh @ p["wu"] + p["bu"])
    return {"logits": logits, "uncertainty": unc, "features": feat}


if __name__ == "__main__":
    key = jax.random.PRNGKey(0)
    k_x, k_p = jax.random.split(key)

    B, Cin, H, W = 8, 3, 32, 32
    PATCH, NUM_CLASSES, NUM_FEATURES = 4, 5, 128
    F = 6 * NUM_FEATURES

    x = jax.random.normal(k_x, (B, Cin, H, W), jnp.float32)
    raw_params = init_params(k_p, num_classes=NUM_CLASSES, cin=Cin,
                             patch=PATCH, num_features=NUM_FEATURES)
    kparams = prepare_kernel_params(raw_params, num_features=NUM_FEATURES,
                                    num_classes=NUM_CLASSES)

    out = modern_nucleus_classifier_forward(x, kparams, patch=PATCH,
                                            num_classes=NUM_CLASSES)
    out = jax.block_until_ready(out)

    assert out["logits"].shape == (B, NUM_CLASSES)
    assert out["uncertainty"].shape == (B, 1)
    assert out["features"].shape == (B, F)
    for v in out.values():
        assert bool(jnp.all(jnp.isfinite(v)))

    ref = _reference_forward(x, raw_params, patch=PATCH,
                             num_classes=NUM_CLASSES,
                             num_features=NUM_FEATURES)
    # bf16 MXU inputs (f32 accumulation) -> bf16-appropriate tolerance.
    for name in ("logits", "uncertainty", "features"):
        assert bool(jnp.allclose(out[name], ref[name],
                                 atol=5e-2, rtol=5e-2)), f"mismatch: {name}"

    print("KERNEL_OK")
</pallas_src>

<mosaic_0001>
module attributes {stable_mosaic.version = 11 : i64} {
  func.func @_fused_forward_kernel(%arg0: i32, %arg1: memref<8x64x48xbf16, #tpu.memory_space<vmem>>, %arg2: memref<48x128xbf16, #tpu.memory_space<vmem>>, %arg3: memref<1x128xf32, #tpu.memory_space<vmem>>, %arg4: memref<768x256xbf16, #tpu.memory_space<vmem>>, %arg5: memref<1x256xf32, #tpu.memory_space<vmem>>, %arg6: memref<256x768xbf16, #tpu.memory_space<vmem>>, %arg7: memref<1x768xf32, #tpu.memory_space<vmem>>, %arg8: memref<768x384xbf16, #tpu.memory_space<vmem>>, %arg9: memref<1x384xf32, #tpu.memory_space<vmem>>, %arg10: memref<384x128xbf16, #tpu.memory_space<vmem>>, %arg11: memref<1x128xf32, #tpu.memory_space<vmem>>, %arg12: memref<8x128xf32, #tpu.memory_space<vmem>>, %arg13: memref<8x768xf32, #tpu.memory_space<vmem>>) attributes {dimension_semantics = [#tpu.dimension_semantics<parallel>], iteration_bounds = array<i64: 1>, scalar_prefetch = 0 : i64, scratch_operands = 0 : i64, tpu.core_type = #tpu.core_type<tc>, window_params = [{transform_indices = @transform_0, window_bounds = array<i64: 8, 64, 48>}, {pipeline_mode = #tpu.pipeline_mode<synchronous>, transform_indices = @transform_1, window_bounds = array<i64: 48, 128>}, {pipeline_mode = #tpu.pipeline_mode<synchronous>, transform_indices = @transform_2, window_bounds = array<i64: 1, 128>}, {pipeline_mode = #tpu.pipeline_mode<synchronous>, transform_indices = @transform_3, window_bounds = array<i64: 768, 256>}, {pipeline_mode = #tpu.pipeline_mode<synchronous>, transform_indices = @transform_4, window_bounds = array<i64: 1, 256>}, {pipeline_mode = #tpu.pipeline_mode<synchronous>, transform_indices = @transform_5, window_bounds = array<i64: 256, 768>}, {pipeline_mode = #tpu.pipeline_mode<synchronous>, transform_indices = @transform_6, window_bounds = array<i64: 1, 768>}, {pipeline_mode = #tpu.pipeline_mode<synchronous>, transform_indices = @transform_7, window_bounds = array<i64: 768, 384>}, {pipeline_mode = #tpu.pipeline_mode<synchronous>, transform_indices = @transform_8, window_bounds = array<i64: 1, 384>}, {pipeline_mode = #tpu.pipeline_mode<synchronous>, transform_indices = @transform_9, window_bounds = array<i64: 384, 128>}, {pipeline_mode = #tpu.pipeline_mode<synchronous>, transform_indices = @transform_10, window_bounds = array<i64: 1, 128>}, {transform_indices = @transform_11, window_bounds = array<i64: 8, 128>}, {transform_indices = @transform_12, window_bounds = array<i64: 8, 768>}]} {
    %c0 = arith.constant 0 : index
    %c0_0 = arith.constant 0 : index
    %c0_1 = arith.constant 0 : index
    %0 = vector.load %arg1[%c0, %c0_0, %c0_1] : memref<8x64x48xbf16, #tpu.memory_space<vmem>>, vector<8x64x48xbf16>
    %1 = vector.shape_cast %0 : vector<8x64x48xbf16> to vector<512x48xbf16>
    %c0_2 = arith.constant 0 : index
    %c0_3 = arith.constant 0 : index
    %2 = vector.load %arg2[%c0_2, %c0_3] : memref<48x128xbf16, #tpu.memory_space<vmem>>, vector<48x128xbf16>
    %cst = arith.constant dense<0.000000e+00> : vector<512x128xf32>
    %3 = tpu.matmul %1, %2, %cst {dimension_numbers = #tpu.dot_dimension_numbers<[1], [0], [0], [1], [0, 0, 1, 1], [], []>} : vector<512x48xbf16>, vector<48x128xbf16>, vector<512x128xf32> -> vector<512x128xf32>
    %c0_4 = arith.constant 0 : index
    %c0_5 = arith.constant 0 : index
    %4 = vector.load %arg3[%c0_4, %c0_5] : memref<1x128xf32, #tpu.memory_space<vmem>>, vector<1x128xf32>
    %5 = vector.broadcast %4 : vector<1x128xf32> to vector<512x128xf32>
    %6 = arith.addf %3, %5 : vector<512x128xf32>
    %cst_6 = arith.constant 0.000000e+00 : f32
    %7 = vector.broadcast %cst_6 : f32 to vector<512x128xf32>
    %8 = arith.maximumf %6, %7 : vector<512x128xf32>
    %9 = vector.shape_cast %8 : vector<512x128xf32> to vector<8x4x16x128xf32>
    %10 = vector.extract_strided_slice %9 {offsets = [0, 0, 0, 0], sizes = [8, 1, 16, 128], strides = [1, 1, 1, 1]} : vector<8x4x16x128xf32> to vector<8x1x16x128xf32>
    %11 = vector.shape_cast %10 : vector<8x1x16x128xf32> to vector<8x16x128xf32>
    %cst_7 = arith.constant dense<0.000000e+00> : vector<8x128xf32>
    %12 = vector.multi_reduction <add>, %11, %cst_7 [1] : vector<8x16x128xf32> to vector<8x128xf32>
    %13 = vector.extract_strided_slice %9 {offsets = [0, 1, 0, 0], sizes = [8, 1, 16, 128], strides = [1, 1, 1, 1]} : vector<8x4x16x128xf32> to vector<8x1x16x128xf32>
    %14 = vector.shape_cast %13 : vector<8x1x16x128xf32> to vector<8x16x128xf32>
    %cst_8 = arith.constant dense<0.000000e+00> : vector<8x128xf32>
    %15 = vector.multi_reduction <add>, %14, %cst_8 [1] : vector<8x16x128xf32> to vector<8x128xf32>
    %16 = vector.extract_strided_slice %9 {offsets = [0, 2, 0, 0], sizes = [8, 1, 16, 128], strides = [1, 1, 1, 1]} : vector<8x4x16x128xf32> to vector<8x1x16x128xf32>
    %17 = vector.shape_cast %16 : vector<8x1x16x128xf32> to vector<8x16x128xf32>
    %cst_9 = arith.constant dense<0.000000e+00> : vector<8x128xf32>
    %18 = vector.multi_reduction <add>, %17, %cst_9 [1] : vector<8x16x128xf32> to vector<8x128xf32>
    %19 = vector.extract_strided_slice %9 {offsets = [0, 3, 0, 0], sizes = [8, 1, 16, 128], strides = [1, 1, 1, 1]} : vector<8x4x16x128xf32> to vector<8x1x16x128xf32>
    %20 = vector.shape_cast %19 : vector<8x1x16x128xf32> to vector<8x16x128xf32>
    %cst_10 = arith.constant dense<0.000000e+00> : vector<8x128xf32>
    %21 = vector.multi_reduction <add>, %20, %cst_10 [1] : vector<8x16x128xf32> to vector<8x128xf32>
    %cst_11 = arith.constant 6.250000e-02 : f32
    %22 = vector.broadcast %cst_11 : f32 to vector<8x128xf32>
    %23 = arith.mulf %12, %22 : vector<8x128xf32>
    %cst_12 = arith.constant 6.250000e-02 : f32
    %24 = vector.broadcast %cst_12 : f32 to vector<8x128xf32>
    %25 = arith.mulf %15, %24 : vector<8x128xf32>
    %cst_13 = arith.constant 6.250000e-02 : f32
    %26 = vector.broadcast %cst_13 : f32 to vector<8x128xf32>
    %27 = arith.mulf %18, %26 : vector<8x128xf32>
    %cst_14 = arith.constant 6.250000e-02 : f32
    %28 = vector.broadcast %cst_14 : f32 to vector<8x128xf32>
    %29 = arith.mulf %21, %28 : vector<8x128xf32>
    %30 = arith.addf %12, %15 : vector<8x128xf32>
    %31 = arith.addf %30, %18 : vector<8x128xf32>
    %32 = arith.addf %31, %21 : vector<8x128xf32>
    %cst_15 = arith.constant 1.562500e-02 : f32
    %33 = vector.broadcast %cst_15 : f32 to vector<8x128xf32>
    %34 = arith.mulf %32, %33 : vector<8x128xf32>
    %35 = vector.shape_cast %8 : vector<512x128xf32> to vector<8x64x128xf32>
    %cst_16 = arith.constant dense<0xFF800000> : vector<8x128xf32>
    %36 = vector.multi_reduction <maximumf>, %35, %cst_16 [1] : vector<8x64x128xf32> to vector<8x128xf32>
    %37 = tpu.concatenate %34, %36, %23, %25, %27, %29 in 1 : vector<8x128xf32>, vector<8x128xf32>, vector<8x128xf32>, vector<8x128xf32>, vector<8x128xf32>, vector<8x128xf32> -> vector<8x768xf32>
    %38 = arith.truncf %37 : vector<8x768xf32> to vector<8x768xbf16>
    %c0_17 = arith.constant 0 : index
    %c0_18 = arith.constant 0 : index
    %39 = vector.load %arg4[%c0_17, %c0_18] : memref<768x256xbf16, #tpu.memory_space<vmem>>, vector<768x256xbf16>
    %cst_19 = arith.constant dense<0.000000e+00> : vector<8x256xf32>
    %40 = tpu.matmul %38, %39, %cst_19 {dimension_numbers = #tpu.dot_dimension_numbers<[1], [0], [0], [1], [0, 0, 1, 1], [], []>} : vector<8x768xbf16>, vector<768x256xbf16>, vector<8x256xf32> -> vector<8x256xf32>
    %c0_20 = arith.constant 0 : index
    %c0_21 = arith.constant 0 : index
    %41 = vector.load %arg5[%c0_20, %c0_21] : memref<1x256xf32, #tpu.memory_space<vmem>>, vector<1x256xf32>
    %42 = vector.broadcast %41 : vector<1x256xf32> to vector<8x256xf32>
    %43 = arith.addf %40, %42 : vector<8x256xf32>
    %cst_22 = arith.constant 0.000000e+00 : f32
    %44 = vector.broadcast %cst_22 : f32 to vector<8x256xf32>
    %45 = arith.maximumf %43, %44 : vector<8x256xf32>
    %46 = arith.truncf %45 : vector<8x256xf32> to vector<8x256xbf16>
    %c0_23 = arith.constant 0 : index
    %c0_24 = arith.constant 0 : index
    %47 = vector.load %arg6[%c0_23, %c0_24] : memref<256x768xbf16, #tpu.memory_space<vmem>>, vector<256x768xbf16>
    %cst_25 = arith.constant dense<0.000000e+00> : vector<8x768xf32>
    %48 = tpu.matmul %46, %47, %cst_25 {dimension_numbers = #tpu.dot_dimension_numbers<[1], [0], [0], [1], [0, 0, 1, 1], [], []>} : vector<8x256xbf16>, vector<256x768xbf16>, vector<8x768xf32> -> vector<8x768xf32>
    %c0_26 = arith.constant 0 : index
    %c0_27 = arith.constant 0 : index
    %49 = vector.load %arg7[%c0_26, %c0_27] : memref<1x768xf32, #tpu.memory_space<vmem>>, vector<1x768xf32>
    %50 = vector.broadcast %49 : vector<1x768xf32> to vector<8x768xf32>
    %51 = arith.addf %48, %50 : vector<8x768xf32>
    %52 = arith.negf %51 : vector<8x768xf32>
    %53 = math.exp %52 : vector<8x768xf32>
    %cst_28 = arith.constant 1.000000e+00 : f32
    %54 = vector.broadcast %cst_28 : f32 to vector<8x768xf32>
    %55 = arith.addf %54, %53 : vector<8x768xf32>
    %56 = arith.divf %54, %55 : vector<8x768xf32>
    %57 = arith.mulf %37, %56 : vector<8x768xf32>
    %c0_29 = arith.constant 0 : index
    %c0_30 = arith.constant 0 : index
    %58 = vector.load %arg13[%c0_29, %c0_30] : memref<8x768xf32, #tpu.memory_space<vmem>>, vector<8x768xf32>
    tpu.vector_store %arg13[%c0_29, %c0_30], %57 {strides = array<i32>} : memref<8x768xf32, #tpu.memory_space<vmem>>, vector<8x768xf32>,
    %59 = arith.truncf %57 : vector<8x768xf32> to vector<8x768xbf16>
    %c0_31 = arith.constant 0 : index
    %c0_32 = arith.constant 0 : index
    %60 = vector.load %arg8[%c0_31, %c0_32] : memref<768x384xbf16, #tpu.memory_space<vmem>>, vector<768x384xbf16>
    %cst_33 = arith.constant dense<0.000000e+00> : vector<8x384xf32>
    %61 = tpu.matmul %59, %60, %cst_33 {dimension_numbers = #tpu.dot_dimension_numbers<[1], [0], [0], [1], [0, 0, 1, 1], [], []>} : vector<8x768xbf16>, vector<768x384xbf16>, vector<8x384xf32> -> vector<8x384xf32>
    %c0_34 = arith.constant 0 : index
    %c0_35 = arith.constant 0 : index
    %62 = vector.load %arg9[%c0_34, %c0_35] : memref<1x384xf32, #tpu.memory_space<vmem>>, vector<1x384xf32>
    %63 = vector.broadcast %62 : vector<1x384xf32> to vector<8x384xf32>
    %64 = arith.addf %61, %63 : vector<8x384xf32>
    %cst_36 = arith.constant 0.000000e+00 : f32
    %65 = vector.broadcast %cst_36 : f32 to vector<8x384xf32>
    %66 = arith.maximumf %64, %65 : vector<8x384xf32>
    %67 = arith.truncf %66 : vector<8x384xf32> to vector<8x384xbf16>
    %c0_37 = arith.constant 0 : index
    %c0_38 = arith.constant 0 : index
    %68 = vector.load %arg10[%c0_37, %c0_38] : memref<384x128xbf16, #tpu.memory_space<vmem>>, vector<384x128xbf16>
    %cst_39 = arith.constant dense<0.000000e+00> : vector<8x128xf32>
    %69 = tpu.matmul %67, %68, %cst_39 {dimension_numbers = #tpu.dot_dimension_numbers<[1], [0], [0], [1], [0, 0, 1, 1], [], []>} : vector<8x384xbf16>, vector<384x128xbf16>, vector<8x128xf32> -> vector<8x128xf32>
    %c0_40 = arith.constant 0 : index
    %c0_41 = arith.constant 0 : index
    %70 = vector.load %arg11[%c0_40, %c0_41] : memref<1x128xf32, #tpu.memory_space<vmem>>, vector<1x128xf32>
    %71 = vector.broadcast %70 : vector<1x128xf32> to vector<8x128xf32>
    %72 = arith.addf %69, %71 : vector<8x128xf32>
    %73 = tpu.iota {dimensions = array<i32: 1>} : vector<8x128xi32>
    %c5_i32 = arith.constant 5 : i32
    %74 = vector.broadcast %c5_i32 : i32 to vector<8x128xi32>
    %75 = arith.cmpi eq, %73, %74 : vector<8x128xi32>
    %76 = arith.negf %72 : vector<8x128xf32>
    %77 = math.exp %76 : vector<8x128xf32>
    %cst_42 = arith.constant 1.000000e+00 : f32
    %78 = vector.broadcast %cst_42 : f32 to vector<8x128xf32>
    %79 = arith.addf %78, %77 : vector<8x128xf32>
    %80 = arith.divf %78, %79 : vector<8x128xf32>
    %81 = arith.select %75, %80, %72 : vector<8x128xi1>, vector<8x128xf32>
    %c0_43 = arith.constant 0 : index
    %c0_44 = arith.constant 0 : index
    %82 = vector.load %arg12[%c0_43, %c0_44] : memref<8x128xf32, #tpu.memory_space<vmem>>, vector<8x128xf32>
    tpu.vector_store %arg12[%c0_43, %c0_44], %81 {strides = array<i32>} : memref<8x128xf32, #tpu.memory_space<vmem>>, vector<8x128xf32>,
    return
  }
  func.func @transform_0(%arg0: i32) -> (i32, i32, i32) {
    %c0_i32 = arith.constant 0 : i32
    %c0_i32_0 = arith.constant 0 : i32
    %c0_i32_1 = arith.constant 0 : i32
    return %arg0, %c0_i32, %c0_i32_0 : i32, i32, i32
  }
  func.func @transform_1(%arg0: i32) -> (i32, i32) {
    %c0_i32 = arith.constant 0 : i32
    %c0_i32_0 = arith.constant 0 : i32
    %c0_i32_1 = arith.constant 0 : i32
    return %c0_i32, %c0_i32_0 : i32, i32
  }
  func.func @transform_2(%arg0: i32) -> (i32, i32) {
    %c0_i32 = arith.constant 0 : i32
    %c0_i32_0 = arith.constant 0 : i32
    %c0_i32_1 = arith.constant 0 : i32
    return %c0_i32, %c0_i32_0 : i32, i32
  }
  func.func @transform_3(%arg0: i32) -> (i32, i32) {
    %c0_i32 = arith.constant 0 : i32
    %c0_i32_0 = arith.constant 0 : i32
    %c0_i32_1 = arith.constant 0 : i32
    return %c0_i32, %c0_i32_0 : i32, i32
  }
  func.func @transform_4(%arg0: i32) -> (i32, i32) {
    %c0_i32 = arith.constant 0 : i32
    %c0_i32_0 = arith.constant 0 : i32
    %c0_i32_1 = arith.constant 0 : i32
    return %c0_i32, %c0_i32_0 : i32, i32
  }
  func.func @transform_5(%arg0: i32) -> (i32, i32) {
    %c0_i32 = arith.constant 0 : i32
    %c0_i32_0 = arith.constant 0 : i32
    %c0_i32_1 = arith.constant 0 : i32
    return %c0_i32, %c0_i32_0 : i32, i32
  }
  func.func @transform_6(%arg0: i32) -> (i32, i32) {
    %c0_i32 = arith.constant 0 : i32
    %c0_i32_0 = arith.constant 0 : i32
    %c0_i32_1 = arith.constant 0 : i32
    return %c0_i32, %c0_i32_0 : i32, i32
  }
  func.func @transform_7(%arg0: i32) -> (i32, i32) {
    %c0_i32 = arith.constant 0 : i32
    %c0_i32_0 = arith.constant 0 : i32
    %c0_i32_1 = arith.constant 0 : i32
    return %c0_i32, %c0_i32_0 : i32, i32
  }
  func.func @transform_8(%arg0: i32) -> (i32, i32) {
    %c0_i32 = arith.constant 0 : i32
    %c0_i32_0 = arith.constant 0 : i32
    %c0_i32_1 = arith.constant 0 : i32
    return %c0_i32, %c0_i32_0 : i32, i32
  }
  func.func @transform_9(%arg0: i32) -> (i32, i32) {
    %c0_i32 = arith.constant 0 : i32
    %c0_i32_0 = arith.constant 0 : i32
    %c0_i32_1 = arith.constant 0 : i32
    return %c0_i32, %c0_i32_0 : i32, i32
  }
  func.func @transform_10(%arg0: i32) -> (i32, i32) {
    %c0_i32 = arith.constant 0 : i32
    %c0_i32_0 = arith.constant 0 : i32
    %c0_i32_1 = arith.constant 0 : i32
    return %c0_i32, %c0_i32_0 : i32, i32
  }
  func.func @transform_11(%arg0: i32) -> (i32, i32) {
    %c0_i32 = arith.constant 0 : i32
    %c0_i32_0 = arith.constant 0 : i32
    return %arg0, %c0_i32 : i32, i32
  }
  func.func @transform_12(%arg0: i32) -> (i32, i32) {
    %c0_i32 = arith.constant 0 : i32
    %c0_i32_0 = arith.constant 0 : i32
    return %arg0, %c0_i32 : i32, i32
  }
}

</mosaic_0001>

<llo_original>
// kernel: modern_nucleus_classifier_forward.1
$region0: #{modern_nucleus_classifier_forward.1}
  #allocation0 [shape = 'u32[]', space=smem, size = 0x4, offset = 0x4, fixed_abs, tag = 'smem constant byte address 0x4 - core index']
  #allocation1 [shape = 'u32[144,128]{1,0:T(1,128)}', space=vmem, size = 0x12000, scoped, tag = 'internal scratch']
  %s0 = inlined_call_operand.vmem [shape: bf16[8,64,48], index: 0, kind: input, shape index: {}]
  %s1 = inlined_call_operand.vmem [shape: bf16[48,128], index: 1, kind: input, shape index: {}]
  %s2 = inlined_call_operand.vmem [shape: f32[1,128], index: 2, kind: input, shape index: {}]
  %s3 = inlined_call_operand.vmem [shape: bf16[768,256], index: 3, kind: input, shape index: {}]
  %s4 = inlined_call_operand.vmem [shape: f32[1,256], index: 4, kind: input, shape index: {}]
  %s5 = inlined_call_operand.vmem [shape: bf16[256,768], index: 5, kind: input, shape index: {}]
  %s6 = inlined_call_operand.vmem [shape: f32[1,768], index: 6, kind: input, shape index: {}]
  %s7 = inlined_call_operand.vmem [shape: bf16[768,384], index: 7, kind: input, shape index: {}]
  %s8 = inlined_call_operand.vmem [shape: f32[1,384], index: 8, kind: input, shape index: {}]
  %s9 = inlined_call_operand.vmem [shape: bf16[384,128], index: 9, kind: input, shape index: {}]
  %s10 = inlined_call_operand.vmem [shape: f32[1,128], index: 10, kind: input, shape index: {}]
  %s11 = inlined_call_operand.vmem [shape: f32[8,128], index: 11, kind: output, shape index: {0}]
  %s12 = inlined_call_operand.vmem [shape: f32[8,768], index: 12, kind: output, shape index: {1}]
  %13 = xla_tuple %s11, %s12
  %s14 = sld [smem:[#allocation0]]
  $region62: #{modern_nucleus_classifier_forward.1} parent=0
    _
  %s16 = ssub.s32 1, %s14
  %s17 = scalar_select 0, %s16, %s14
  // Predicated region
  $region2: #{modern_nucleus_classifier_forward.1} parent=0 // pred_check
    _
  $region3: #{modern_nucleus_classifier_forward.1} parent=0 // pred_check_branch
    %19 = sbr.rel (0) target = $region5
  $region4: #{modern_nucleus_classifier_forward.1} parent=0 // pred_region
    _
  $region5: #{modern_nucleus_classifier_forward.1} parent=0 // pred_fallthru
    _
  // Predicated region
  $region6: #{modern_nucleus_classifier_forward.1} parent=0 // pred_check
    _
  $region7: #{modern_nucleus_classifier_forward.1} parent=0 // pred_check_branch
    %21 = sbr.rel (0) target = $region9
  $region8: #{modern_nucleus_classifier_forward.1} parent=0 // pred_region
    _
  $region9: #{modern_nucleus_classifier_forward.1} parent=0 // pred_fallthru
    _
  // Predicated region
  $region10: #{modern_nucleus_classifier_forward.1} parent=0 // pred_check
    _
  $region11: #{modern_nucleus_classifier_forward.1} parent=0 // pred_check_branch
    %23 = sbr.rel (0) target = $region13
  $region12: #{modern_nucleus_classifier_forward.1} parent=0 // pred_region
    _
  $region13: #{modern_nucleus_classifier_forward.1} parent=0 // pred_fallthru
    _
  // Predicated region
  $region14: #{modern_nucleus_classifier_forward.1} parent=0 // pred_check
    _
  $region15: #{modern_nucleus_classifier_forward.1} parent=0 // pred_check_branch
    %25 = sbr.rel (0) target = $region17
  $region16: #{modern_nucleus_classifier_forward.1} parent=0 // pred_region
    _
  $region17: #{modern_nucleus_classifier_forward.1} parent=0 // pred_fallthru
    _
  // Predicated region
  $region18: #{modern_nucleus_classifier_forward.1} parent=0 // pred_check
    _
  $region19: #{modern_nucleus_classifier_forward.1} parent=0 // pred_check_branch
    %27 = sbr.rel (0) target = $region21
  $region20: #{modern_nucleus_classifier_forward.1} parent=0 // pred_region
    _
  $region21: #{modern_nucleus_classifier_forward.1} parent=0 // pred_fallthru
    _
  // Predicated region
  $region22: #{modern_nucleus_classifier_forward.1} parent=0 // pred_check
    _
  $region23: #{modern_nucleus_classifier_forward.1} parent=0 // pred_check_branch
    %29 = sbr.rel (0) target = $region25
  $region24: #{modern_nucleus_classifier_forward.1} parent=0 // pred_region
    _
  $region25: #{modern_nucleus_classifier_forward.1} parent=0 // pred_fallthru
    _
  // Predicated region
  $region26: #{modern_nucleus_classifier_forward.1} parent=0 // pred_check
    _
  $region27: #{modern_nucleus_classifier_forward.1} parent=0 // pred_check_branch
    %31 = sbr.rel (0) target = $region29
  $region28: #{modern_nucleus_classifier_forward.1} parent=0 // pred_region
    _
  $region29: #{modern_nucleus_classifier_forward.1} parent=0 // pred_fallthru
    _
  // Predicated region
  $region30: #{modern_nucleus_classifier_forward.1} parent=0 // pred_check
    _
  $region31: #{modern_nucleus_classifier_forward.1} parent=0 // pred_check_branch
    %33 = sbr.rel (0) target = $region33
  $region32: #{modern_nucleus_classifier_forward.1} parent=0 // pred_region
    _
  $region33: #{modern_nucleus_classifier_forward.1} parent=0 // pred_fallthru
    _
  // Predicated region
  $region34: #{modern_nucleus_classifier_forward.1} parent=0 // pred_check
    _
  $region35: #{modern_nucleus_classifier_forward.1} parent=0 // pred_check_branch
    %35 = sbr.rel (0) target = $region37
  $region36: #{modern_nucleus_classifier_forward.1} parent=0 // pred_region
    _
  $region37: #{modern_nucleus_classifier_forward.1} parent=0 // pred_fallthru
    _
  // Predicated region
  $region38: #{modern_nucleus_classifier_forward.1} parent=0 // pred_check
    _
  $region39: #{modern_nucleus_classifier_forward.1} parent=0 // pred_check_branch
    %37 = sbr.rel (0) target = $region41
  $region40: #{modern_nucleus_classifier_forward.1} parent=0 // pred_region
    _
  $region41: #{modern_nucleus_classifier_forward.1} parent=0 // pred_fallthru
    _
  // Predicated region
  $region42: #{modern_nucleus_classifier_forward.1} parent=0 // pred_check
    _
  $region43: #{modern_nucleus_classifier_forward.1} parent=0 // pred_check_branch
    %39 = sbr.rel (0) target = $region45
  $region44: #{modern_nucleus_classifier_forward.1} parent=0 // pred_region
    _
  $region45: #{modern_nucleus_classifier_forward.1} parent=0 // pred_fallthru
    _
  %v41 = vld [vmem:[%s0] sm:$0xf]
  %v42 = vld [vmem:[%s0 + $0x4] sm:$0xf]
  %v43 = vld [vmem:[%s0 + $0x8] sm:$0xf]
  %v44 = vld [vmem:[%s0 + $0xc] sm:$0xf]
  %v45 = vld [vmem:[%s0 + $0x10] sm:$0xf]
  %v46 = vld [vmem:[%s0 + $0x14] sm:$0xf]
  %v47 = vld [vmem:[%s0 + $0x18] sm:$0xf]
  %v48 = vld [vmem:[%s0 + $0x1c] sm:$0xf]
  %v49 = vld [vmem:[%s0 + $0x20] sm:$0xf]
  %v50 = vld [vmem:[%s0 + $0x24] sm:$0xf]
  %v51 = vld [vmem:[%s0 + $0x28] sm:$0xf]
  %v52 = vld [vmem:[%s0 + $0x2c] sm:$0xf]
  %v53 = vld [vmem:[%s0 + $0x30] sm:$0xf]
  %v54 = vld [vmem:[%s0 + $0x34] sm:$0xf]
  %v55 = vld [vmem:[%s0 + $0x38] sm:$0xf]
  %v56 = vld [vmem:[%s0 + $0x3c] sm:$0xf]
  %v57 = vld [vmem:[%s0 + $0x40] sm:$0xf]
  %v58 = vld [vmem:[%s0 + $0x44] sm:$0xf]
  %v59 = vld [vmem:[%s0 + $0x48] sm:$0xf]
  %v60 = vld [vmem:[%s0 + $0x4c] sm:$0xf]
  %v61 = vld [vmem:[%s0 + $0x50] sm:$0xf]
  %v62 = vld [vmem:[%s0 + $0x54] sm:$0xf]
  %v63 = vld [vmem:[%s0 + $0x58] sm:$0xf]
  %v64 = vld [vmem:[%s0 + $0x5c] sm:$0xf]
  %v65 = vld [vmem:[%s0 + $0x60] sm:$0xf]
  %v66 = vld [vmem:[%s0 + $0x64] sm:$0xf]
  %v67 = vld [vmem:[%s0 + $0x68] sm:$0xf]
  %v68 = vld [vmem:[%s0 + $0x6c] sm:$0xf]
  %v69 = vld [vmem:[%s0 + $0x70] sm:$0xf]
  %v70 = vld [vmem:[%s0 + $0x74] sm:$0xf]
  %v71 = vld [vmem:[%s0 + $0x78] sm:$0xf]
  %v72 = vld [vmem:[%s0 + $0x7c] sm:$0xf]
  %v73 = vld [vmem:[%s0 + $0x80] sm:$0xf]
  %v74 = vld [vmem:[%s0 + $0x84] sm:$0xf]
  %v75 = vld [vmem:[%s0 + $0x88] sm:$0xf]
  %v76 = vld [vmem:[%s0 + $0x8c] sm:$0xf]
  %v77 = vld [vmem:[%s0 + $0x90] sm:$0xf]
  %v78 = vld [vmem:[%s0 + $0x94] sm:$0xf]
  %v79 = vld [vmem:[%s0 + $0x98] sm:$0xf]
  %v80 = vld [vmem:[%s0 + $0x9c] sm:$0xf]
  %v81 = vld [vmem:[%s0 + $0xa0] sm:$0xf]
  %v82 = vld [vmem:[%s0 + $0xa4] sm:$0xf]
  %v83 = vld [vmem:[%s0 + $0xa8] sm:$0xf]
  %v84 = vld [vmem:[%s0 + $0xac] sm:$0xf]
  %v85 = vld [vmem:[%s0 + $0xb0] sm:$0xf]
  %v86 = vld [vmem:[%s0 + $0xb4] sm:$0xf]
  %v87 = vld [vmem:[%s0 + $0xb8] sm:$0xf]
  %v88 = vld [vmem:[%s0 + $0xbc] sm:$0xf]
  %v89 = vld [vmem:[%s0 + $0xc0] sm:$0xf]
  %v90 = vld [vmem:[%s0 + $0xc4] sm:$0xf]
  %v91 = vld [vmem:[%s0 + $0xc8] sm:$0xf]
  %v92 = vld [vmem:[%s0 + $0xcc] sm:$0xf]
  %v93 = vld [vmem:[%s0 + $0xd0] sm:$0xf]
  %v94 = vld [vmem:[%s0 + $0xd4] sm:$0xf]
  %v95 = vld [vmem:[%s0 + $0xd8] sm:$0xf]
  %v96 = vld [vmem:[%s0 + $0xdc] sm:$0xf]
  %v97 = vld [vmem:[%s0 + $0xe0] sm:$0xf]
  %v98 = vld [vmem:[%s0 + $0xe4] sm:$0xf]
  %v99 = vld [vmem:[%s0 + $0xe8] sm:$0xf]
  %v100 = vld [vmem:[%s0 + $0xec] sm:$0xf]
  %v101 = vld [vmem:[%s0 + $0xf0] sm:$0xf]
  %v102 = vld [vmem:[%s0 + $0xf4] sm:$0xf]
  %v103 = vld [vmem:[%s0 + $0xf8] sm:$0xf]
  %v104 = vld [vmem:[%s0 + $0xfc] sm:$0xf]
  %v105 = vld [vmem:[%s1] sm:$0xf]
  %v106 = vld [vmem:[%s1 + $0x4] sm:$0xf]
  %v107 = vld [vmem:[%s1 + $0x8] sm:$0xf]
  %v108 = vld [vmem:[%s1 + $0xc] sm:$0xf]
  %v109 = vld [vmem:[%s1 + $0x10] sm:$0xf]
  %v110 = vld [vmem:[%s1 + $0x14] sm:$0xf]
  %v111 = vld [vmem:[%s2] sm:$0x1]
  %v113 = vlaneseq
  %v114 = vshrl.u32 %v113, 7
  %v115 = vsub.s32 0, %v114
  %v116 = vrot.slane %v111, %v115
  %v182 = vunpack.c.l.b16 %v41
  %v183 = vunpack.c.l.b16 %v42
  %v184 = vunpack.c.l.b16 %v43
  %v185 = vunpack.c.l.b16 %v44
  %v186 = vunpack.c.l.b16 %v45
  %v187 = vunpack.c.l.b16 %v46
  %v188 = vunpack.c.l.b16 %v47
  %v189 = vunpack.c.l.b16 %v48
  %v190 = vunpack.c.l.b16 %v49
  %v191 = vunpack.c.l.b16 %v50
  %v192 = vunpack.c.l.b16 %v51
  %v193 = vunpack.c.l.b16 %v52
  %v194 = vunpack.c.l.b16 %v53
  %v195 = vunpack.c.l.b16 %v54
  %v196 = vunpack.c.l.b16 %v55
  %v197 = vunpack.c.l.b16 %v56
  %v198 = vunpack.c.l.b16 %v57
  %v199 = vunpack.c.l.b16 %v58
  %v200 = vunpack.c.l.b16 %v59
  %v201 = vunpack.c.l.b16 %v60
  %v202 = vunpack.c.l.b16 %v61
  %v203 = vunpack.c.l.b16 %v62
  %v204 = vunpack.c.l.b16 %v63
  %v205 = vunpack.c.l.b16 %v64
  %v206 = vunpack.c.l.b16 %v65
  %v207 = vunpack.c.l.b16 %v66
  %v208 = vunpack.c.l.b16 %v67
  %v209 = vunpack.c.l.b16 %v68
  %v210 = vunpack.c.l.b16 %v69
  %v211 = vunpack.c.l.b16 %v70
  %v212 = vunpack.c.l.b16 %v71
  %v213 = vunpack.c.l.b16 %v72
  %v214 = vunpack.c.l.b16 %v73
  %v215 = vunpack.c.l.b16 %v74
  %v216 = vunpack.c.l.b16 %v75
  %v217 = vunpack.c.l.b16 %v76
  %v218 = vunpack.c.l.b16 %v77
  %v219 = vunpack.c.l.b16 %v78
  %v220 = vunpack.c.l.b16 %v79
  %v221 = vunpack.c.l.b16 %v80
  %v222 = vunpack.c.l.b16 %v81
  %v223 = vunpack.c.l.b16 %v82
  %v224 = vunpack.c.l.b16 %v83
  %v225 = vunpack.c.l.b16 %v84
  %v226 = vunpack.c.l.b16 %v85
  %v227 = vunpack.c.l.b16 %v86
  %v228 = vunpack.c.l.b16 %v87
  %v229 = vunpack.c.l.b16 %v88
  %v230 = vunpack.c.l.b16 %v89
  %v231 = vunpack.c.l.b16 %v90
  %v232 = vunpack.c.l.b16 %v91
  %v233 = vunpack.c.l.b16 %v92
  %v234 = vunpack.c.l.b16 %v93
  %v235 = vunpack.c.l.b16 %v94
  %v236 = vunpack.c.l.b16 %v95
  %v237 = vunpack.c.l.b16 %v96
  %v238 = vunpack.c.l.b16 %v97
  %v239 = vunpack.c.l.b16 %v98
  %v240 = vunpack.c.l.b16 %v99
  %v241 = vunpack.c.l.b16 %v100
  %v242 = vunpack.c.l.b16 %v101
  %v243 = vunpack.c.l.b16 %v102
  %v244 = vunpack.c.l.b16 %v103
  %v245 = vunpack.c.l.b16 %v104
  %v246 = vpack.c.b16 %v183, %v182
  %v247 = vpack.c.b16 %v185, %v184
  %v248 = vpack.c.b16 %v187, %v186
  %v249 = vpack.c.b16 %v189, %v188
  %v250 = vpack.c.b16 %v191, %v190
  %v251 = vpack.c.b16 %v193, %v192
  %v252 = vpack.c.b16 %v195, %v194
  %v253 = vpack.c.b16 %v197, %v196
  %v254 = vpack.c.b16 %v199, %v198
  %v255 = vpack.c.b16 %v201, %v200
  %v256 = vpack.c.b16 %v203, %v202
  %v257 = vpack.c.b16 %v205, %v204
  %v258 = vpack.c.b16 %v207, %v206
  %v259 = vpack.c.b16 %v209, %v208
  %v260 = vpack.c.b16 %v211, %v210
  %v261 = vpack.c.b16 %v213, %v212
  %v262 = vpack.c.b16 %v215, %v214
  %v263 = vpack.c.b16 %v217, %v216
  %v264 = vpack.c.b16 %v219, %v218
  %v265 = vpack.c.b16 %v221, %v220
  %v266 = vpack.c.b16 %v223, %v222
  %v267 = vpack.c.b16 %v225, %v224
  %v268 = vpack.c.b16 %v227, %v226
  %v269 = vpack.c.b16 %v229, %v228
  %v270 = vpack.c.b16 %v231, %v230
  %v271 = vpack.c.b16 %v233, %v232
  %v272 = vpack.c.b16 %v235, %v234
  %v273 = vpack.c.b16 %v237, %v236
  %v274 = vpack.c.b16 %v239, %v238
  %v275 = vpack.c.b16 %v241, %v240
  %v276 = vpack.c.b16 %v243, %v242
  %v277 = vpack.c.b16 %v245, %v244
  %v284 = vunpack.c.l.b16 %v105
  %v285 = vunpack.c.l.b16 %v106
  %v286 = vunpack.c.l.b16 %v107
  %v287 = vunpack.c.l.b16 %v108
  %v288 = vunpack.c.l.b16 %v109
  %v289 = vunpack.c.l.b16 %v110
  %v290 = vpack.c.b16 %v285, %v284
  %v291 = vpack.c.b16 %v287, %v286
  %v292 = vpack.c.b16 %v289, %v288
  %vm296 = vcmask 392192
  %v298 = vsel %vm296, %v246, 0
  %v301 = vsel %vm296, %v247, 0
  %v304 = vsel %vm296, %v248, 0
  %v307 = vsel %vm296, %v249, 0
  %v310 = vsel %vm296, %v250, 0
  %v313 = vsel %vm296, %v251, 0
  %v316 = vsel %vm296, %v252, 0
  %v319 = vsel %vm296, %v253, 0
  %v322 = vsel %vm296, %v254, 0
  %v325 = vsel %vm296, %v255, 0
  %v328 = vsel %vm296, %v256, 0
  %v331 = vsel %vm296, %v257, 0
  %v334 = vsel %vm296, %v258, 0
  %v337 = vsel %vm296, %v259, 0
  %v340 = vsel %vm296, %v260, 0
  %v343 = vsel %vm296, %v261, 0
  %v346 = vsel %vm296, %v262, 0
  %v349 = vsel %vm296, %v263, 0
  %v352 = vsel %vm296, %v264, 0
  %v355 = vsel %vm296, %v265, 0
  %v358 = vsel %vm296, %v266, 0
  %v361 = vsel %vm296, %v267, 0
  %v364 = vsel %vm296, %v268, 0
  %v367 = vsel %vm296, %v269, 0
  %v370 = vsel %vm296, %v270, 0
  %v373 = vsel %vm296, %v271, 0
  %v376 = vsel %vm296, %v272, 0
  %v379 = vsel %vm296, %v273, 0
  %v382 = vsel %vm296, %v274, 0
  %v385 = vsel %vm296, %v275, 0
  %v388 = vsel %vm296, %v276, 0
  %v391 = vsel %vm296, %v277, 0
  %393 = vmatprep.subr.bf16.mxu0 0
  %394 = vmatpush1.bf16.msra.mxu0 %v290
  %395 = vmatprep.subr.bf16.mxu0 0
  %396 = vmatpush1.bf16.msra.mxu0 %v291
  %397 = vmatprep.subr.bf16.mxu0 0
  %398 = vmatpush1.bf16.msra.mxu0 %v292
  %399 = vmatprep.subr.bf16.mxu0 0
  %400 = vmatpush1.bf16.msra.mxu0 0
  %401 = vmatprep.subr.bf16.mxu0 0
  %402 = vmatpush1.bf16.msra.mxu0 0
  %403 = vmatprep.subr.bf16.mxu0 0
  %404 = vmatpush1.bf16.msra.mxu0 0
  %405 = vmatprep.subr.bf16.mxu0 0
  %406 = vmatpush1.bf16.msra.mxu0 0
  %407 = vmatprep.subr.bf16.mxu0 0
  %408 = vmatpush1.bf16.msra.mxu0 0
  %409 = vmatprep.subr.bf16.mxu0 0
  %410 = vmatpush1.bf16.msra.mxu0 0
  %411 = vmatprep.subr.bf16.mxu0 0
  %412 = vmatpush1.bf16.msra.mxu0 0
  %413 = vmatprep.subr.bf16.mxu0 0
  %414 = vmatpush1.bf16.msra.mxu0 0
  %415 = vmatprep.subr.bf16.mxu0 0
  %416 = vmatpush1.bf16.msra.mxu0 0
  %417 = vmatprep.subr.bf16.mxu0 0
  %418 = vmatpush1.bf16.msra.mxu0 0
  %419 = vmatprep.subr.bf16.mxu0 0
  %420 = vmatpush1.bf16.msra.mxu0 0
  %421 = vmatprep.subr.bf16.mxu0 0
  %422 = vmatpush1.bf16.msra.mxu0 0
  %423 = vmatprep.subr.bf16.mxu0 0
  %424 = vmatpush1.bf16.msra.mxu0 0
  %425 = vmatprep.mubr.bf16.mxu0 0
  %426 = vmatmul.mubr.bf16.gmra.mrb[0].mxu0 %v298
  %v427 = vpop.f32.mrb[0].mxu0
  %v428 = vadd.f32 %v116, %v427
  %v429 = vpop.f32.mrb[0].mxu0
  %v430 = vpop.f32.mrb[0].mxu0
  %v431 = vadd.f32 %v116, %v430
  %v432 = vpop.f32.mrb[0].mxu0
  %433 = vmatprep.mubr.bf16.mxu0 0
  %434 = vmatmul.mubr.bf16.gmra.mrb[0].mxu0 %v301
  %v435 = vpop.f32.mrb[0].mxu0
  %v436 = vadd.f32 %v116, %v435
  %v437 = vpop.f32.mrb[0].mxu0
  %v438 = vpop.f32.mrb[0].mxu0
  %v439 = vadd.f32 %v116, %v438
  %v440 = vpop.f32.mrb[0].mxu0
  %441 = vmatprep.mubr.bf16.mxu0 0
  %442 = vmatmul.mubr.bf16.gmra.mrb[0].mxu0 %v304
  %v443 = vpop.f32.mrb[0].mxu0
  %v444 = vadd.f32 %v116, %v443
  %v445 = vpop.f32.mrb[0].mxu0
  %v446 = vpop.f32.mrb[0].mxu0
  %v447 = vadd.f32 %v116, %v446
  %v448 = vpop.f32.mrb[0].mxu0
  %449 = vmatprep.mubr.bf16.mxu0 0
  %450 = vmatmul.mubr.bf16.gmra.mrb[0].mxu0 %v307
  %v451 = vpop.f32.mrb[0].mxu0
  %v452 = vadd.f32 %v116, %v451
  %v453 = vpop.f32.mrb[0].mxu0
  %v454 = vpop.f32.mrb[0].mxu0
  %v455 = vadd.f32 %v116, %v454
  %v456 = vpop.f32.mrb[0].mxu0
  %457 = vmatprep.mubr.bf16.mxu0 0
  %458 = vmatmul.mubr.bf16.gmra.mrb[0].mxu0 %v310
  %v459 = vpop.f32.mrb[0].mxu0
  %v460 = vadd.f32 %v116, %v459
  %v461 = vpop.f32.mrb[0].mxu0
  %v462 = vpop.f32.mrb[0].mxu0
  %v463 = vadd.f32 %v116, %v462
  %v464 = vpop.f32.mrb[0].mxu0
  %465 = vmatprep.mubr.bf16.mxu0 0
  %466 = vmatmul.mubr.bf16.gmra.mrb[0].mxu0 %v313
  %v467 = vpop.f32.mrb[0].mxu0
  %v468 = vadd.f32 %v116, %v467
  %v469 = vpop.f32.mrb[0].mxu0
  %v470 = vpop.f32.mrb[0].mxu0
  %v471 = vadd.f32 %v116, %v470
  %v472 = vpop.f32.mrb[0].mxu0
  %473 = vmatprep.mubr.bf16.mxu0 0
  %474 = vmatmul.mubr.bf16.gmra.mrb[0].mxu0 %v316
  %v475 = vpop.f32.mrb[0].mxu0
  %v476 = vadd.f32 %v116, %v475
  %v477 = vpop.f32.mrb[0].mxu0
  %v478 = vpop.f32.mrb[0].mxu0
  %v479 = vadd.f32 %v116, %v478
  %v480 = vpop.f32.mrb[0].mxu0
  %481 = vmatprep.mubr.bf16.mxu0 0
  %482 = vmatmul.mubr.bf16.gmra.mrb[0].mxu0 %v319
  %v483 = vpop.f32.mrb[0].mxu0
  %v484 = vadd.f32 %v116, %v483
  %v485 = vpop.f32.mrb[0].mxu0
  %v486 = vpop.f32.mrb[0].mxu0
  %v487 = vadd.f32 %v116, %v486
  %v488 = vpop.f32.mrb[0].mxu0
  %489 = vmatprep.mubr.bf16.mxu0 0
  %490 = vmatmul.mubr.bf16.gmra.mrb[0].mxu0 %v322
  %v491 = vpop.f32.mrb[0].mxu0
  %v492 = vadd.f32 %v116, %v491
  %v493 = vpop.f32.mrb[0].mxu0
  %v494 = vpop.f32.mrb[0].mxu0
  %v495 = vadd.f32 %v116, %v494
  %v496 = vpop.f32.mrb[0].mxu0
  %497 = vmatprep.mubr.bf16.mxu0 0
  %498 = vmatmul.mubr.bf16.gmra.mrb[0].mxu0 %v325
  %v499 = vpop.f32.mrb[0].mxu0
  %v500 = vadd.f32 %v116, %v499
  %v501 = vpop.f32.mrb[0].mxu0
  %v502 = vpop.f32.mrb[0].mxu0
  %v503 = vadd.f32 %v116, %v502
  %v504 = vpop.f32.mrb[0].mxu0
  %505 = vmatprep.mubr.bf16.mxu0 0
  %506 = vmatmul.mubr.bf16.gmra.mrb[0].mxu0 %v328
  %v507 = vpop.f32.mrb[0].mxu0
  %v508 = vadd.f32 %v116, %v507
  %v509 = vpop.f32.mrb[0].mxu0
  %v510 = vpop.f32.mrb[0].mxu0
  %v511 = vadd.f32 %v116, %v510
  %v512 = vpop.f32.mrb[0].mxu0
  %513 = vmatprep.mubr.bf16.mxu0 0
  %514 = vmatmul.mubr.bf16.gmra.mrb[0].mxu0 %v331
  %v515 = vpop.f32.mrb[0].mxu0
  %v516 = vadd.f32 %v116, %v515
  %v517 = vpop.f32.mrb[0].mxu0
  %v518 = vpop.f32.mrb[0].mxu0
  %v519 = vadd.f32 %v116, %v518
  %v520 = vpop.f32.mrb[0].mxu0
  %521 = vmatprep.mubr.bf16.mxu0 0
  %522 = vmatmul.mubr.bf16.gmra.mrb[0].mxu0 %v334
  %v523 = vpop.f32.mrb[0].mxu0
  %v524 = vadd.f32 %v116, %v523
  %v525 = vpop.f32.mrb[0].mxu0
  %v526 = vpop.f32.mrb[0].mxu0
  %v527 = vadd.f32 %v116, %v526
  %v528 = vpop.f32.mrb[0].mxu0
  %529 = vmatprep.mubr.bf16.mxu0 0
  %530 = vmatmul.mubr.bf16.gmra.mrb[0].mxu0 %v337
  %v531 = vpop.f32.mrb[0].mxu0
  %v532 = vadd.f32 %v116, %v531
  %v533 = vpop.f32.mrb[0].mxu0
  %v534 = vpop.f32.mrb[0].mxu0
  %v535 = vadd.f32 %v116, %v534
  %v536 = vpop.f32.mrb[0].mxu0
  %537 = vmatprep.mubr.bf16.mxu0 0
  %538 = vmatmul.mubr.bf16.gmra.mrb[0].mxu0 %v340
  %v539 = vpop.f32.mrb[0].mxu0
  %v540 = vadd.f32 %v116, %v539
  %v541 = vpop.f32.mrb[0].mxu0
  %v542 = vpop.f32.mrb[0].mxu0
  %v543 = vadd.f32 %v116, %v542
  %v544 = vpop.f32.mrb[0].mxu0
  %545 = vmatprep.mubr.bf16.mxu0 0
  %546 = vmatmul.mubr.bf16.gmra.mrb[0].mxu0 %v343
  %v547 = vpop.f32.mrb[0].mxu0
  %v548 = vadd.f32 %v116, %v547
  %v549 = vpop.f32.mrb[0].mxu0
  %v550 = vpop.f32.mrb[0].mxu0
  %v551 = vadd.f32 %v116, %v550
  %v552 = vpop.f32.mrb[0].mxu0
  %553 = vmatprep.mubr.bf16.mxu0 0
  %554 = vmatmul.mubr.bf16.gmra.mrb[0].mxu0 %v346
  %v555 = vpop.f32.mrb[0].mxu0
  %v556 = vadd.f32 %v116, %v555
  %v557 = vpop.f32.mrb[0].mxu0
  %v558 = vpop.f32.mrb[0].mxu0
  %v559 = vadd.f32 %v116, %v558
  %v560 = vpop.f32.mrb[0].mxu0
  %561 = vmatprep.mubr.bf16.mxu0 0
  %562 = vmatmul.mubr.bf16.gmra.mrb[0].mxu0 %v349
  %v563 = vpop.f32.mrb[0].mxu0
  %v564 = vadd.f32 %v116, %v563
  %v565 = vpop.f32.mrb[0].mxu0
  %v566 = vpop.f32.mrb[0].mxu0
  %v567 = vadd.f32 %v116, %v566
  %v568 = vpop.f32.mrb[0].mxu0
  %569 = vmatprep.mubr.bf16.mxu0 0
  %570 = vmatmul.mubr.bf16.gmra.mrb[0].mxu0 %v352
  %v571 = vpop.f32.mrb[0].mxu0
  %v572 = vadd.f32 %v116, %v571
  %v573 = vpop.f32.mrb[0].mxu0
  %v574 = vpop.f32.mrb[0].mxu0
  %v575 = vadd.f32 %v116, %v574
  %v576 = vpop.f32.mrb[0].mxu0
  %577 = vmatprep.mubr.bf16.mxu0 0
  %578 = vmatmul.mubr.bf16.gmra.mrb[0].mxu0 %v355
  %v579 = vpop.f32.mrb[0].mxu0
  %v580 = vadd.f32 %v116, %v579
  %v581 = vpop.f32.mrb[0].mxu0
  %v582 = vpop.f32.mrb[0].mxu0
  %v583 = vadd.f32 %v116, %v582
  %v584 = vpop.f32.mrb[0].mxu0
  %585 = vmatprep.mubr.bf16.mxu0 0
  %586 = vmatmul.mubr.bf16.gmra.mrb[0].mxu0 %v358
  %v587 = vpop.f32.mrb[0].mxu0
  %v588 = vadd.f32 %v116, %v587
  %v589 = vpop.f32.mrb[0].mxu0
  %v590 = vpop.f32.mrb[0].mxu0
  %v591 = vadd.f32 %v116, %v590
  %v592 = vpop.f32.mrb[0].mxu0
  %593 = vmatprep.mubr.bf16.mxu0 0
  %594 = vmatmul.mubr.bf16.gmra.mrb[0].mxu0 %v361
  %v595 = vpop.f32.mrb[0].mxu0
  %v596 = vadd.f32 %v116, %v595
  %v597 = vpop.f32.mrb[0].mxu0
  %v598 = vpop.f32.mrb[0].mxu0
  %v599 = vadd.f32 %v116, %v598
  %v600 = vpop.f32.mrb[0].mxu0
  %601 = vmatprep.mubr.bf16.mxu0 0
  %602 = vmatmul.mubr.bf16.gmra.mrb[0].mxu0 %v364
  %v603 = vpop.f32.mrb[0].mxu0
  %v604 = vadd.f32 %v116, %v603
  %v605 = vpop.f32.mrb[0].mxu0
  %v606 = vpop.f32.mrb[0].mxu0
  %v607 = vadd.f32 %v116, %v606
  %v608 = vpop.f32.mrb[0].mxu0
  %609 = vmatprep.mubr.bf16.mxu0 0
  %610 = vmatmul.mubr.bf16.gmra.mrb[0].mxu0 %v367
  %v611 = vpop.f32.mrb[0].mxu0
  %v612 = vadd.f32 %v116, %v611
  %v613 = vpop.f32.mrb[0].mxu0
  %v614 = vpop.f32.mrb[0].mxu0
  %v615 = vadd.f32 %v116, %v614
  %v616 = vpop.f32.mrb[0].mxu0
  %617 = vmatprep.mubr.bf16.mxu0 0
  %618 = vmatmul.mubr.bf16.gmra.mrb[0].mxu0 %v370
  %v619 = vpop.f32.mrb[0].mxu0
  %v620 = vadd.f32 %v116, %v619
  %v621 = vpop.f32.mrb[0].mxu0
  %v622 = vpop.f32.mrb[0].mxu0
  %v623 = vadd.f32 %v116, %v622
  %v624 = vpop.f32.mrb[0].mxu0
  %625 = vmatprep.mubr.bf16.mxu0 0
  %626 = vmatmul.mubr.bf16.gmra.mrb[0].mxu0 %v373
  %v627 = vpop.f32.mrb[0].mxu0
  %v628 = vadd.f32 %v116, %v627
  %v629 = vpop.f32.mrb[0].mxu0
  %v630 = vpop.f32.mrb[0].mxu0
  %v631 = vadd.f32 %v116, %v630
  %v632 = vpop.f32.mrb[0].mxu0
  %633 = vmatprep.mubr.bf16.mxu0 0
  %634 = vmatmul.mubr.bf16.gmra.mrb[0].mxu0 %v376
  %v635 = vpop.f32.mrb[0].mxu0
  %v636 = vadd.f32 %v116, %v635
  %v637 = vpop.f32.mrb[0].mxu0
  %v638 = vpop.f32.mrb[0].mxu0
  %v639 = vadd.f32 %v116, %v638
  %v640 = vpop.f32.mrb[0].mxu0
  %641 = vmatprep.mubr.bf16.mxu0 0
  %642 = vmatmul.mubr.bf16.gmra.mrb[0].mxu0 %v379
  %v643 = vpop.f32.mrb[0].mxu0
  %v644 = vadd.f32 %v116, %v643
  %v645 = vpop.f32.mrb[0].mxu0
  %v646 = vpop.f32.mrb[0].mxu0
  %v647 = vadd.f32 %v116, %v646
  %v648 = vpop.f32.mrb[0].mxu0
  %649 = vmatprep.mubr.bf16.mxu0 0
  %650 = vmatmul.mubr.bf16.gmra.mrb[0].mxu0 %v382
  %v651 = vpop.f32.mrb[0].mxu0
  %v652 = vadd.f32 %v116, %v651
  %v653 = vpop.f32.mrb[0].mxu0
  %v654 = vpop.f32.mrb[0].mxu0
  %v655 = vadd.f32 %v116, %v654
  %v656 = vpop.f32.mrb[0].mxu0
  %657 = vmatprep.mubr.bf16.mxu0 0
  %658 = vmatmul.mubr.bf16.gmra.mrb[0].mxu0 %v385
  %v659 = vpop.f32.mrb[0].mxu0
  %v660 = vadd.f32 %v116, %v659
  %v661 = vpop.f32.mrb[0].mxu0
  %v662 = vpop.f32.mrb[0].mxu0
  %v663 = vadd.f32 %v116, %v662
  %v664 = vpop.f32.mrb[0].mxu0
  %665 = vmatprep.mubr.bf16.mxu0 0
  %666 = vmatmul.mubr.bf16.gmra.mrb[0].mxu0 %v388
  %v667 = vpop.f32.mrb[0].mxu0
  %v668 = vadd.f32 %v116, %v667
  %v669 = vpop.f32.mrb[0].mxu0
  %v670 = vpop.f32.mrb[0].mxu0
  %v671 = vadd.f32 %v116, %v670
  %v672 = vpop.f32.mrb[0].mxu0
  %673 = vmatprep.mubr.bf16.mxu0 0
  %674 = vmatmul.mubr.bf16.gmra.mrb[0].mxu0 %v391
  %v675 = vpop.f32.mrb[0].mxu0
  %v676 = vadd.f32 %v116, %v675
  %v677 = vpop.f32.mrb[0].mxu0
  %v678 = vpop.f32.mrb[0].mxu0
  %v679 = vadd.f32 %v116, %v678
  %v680 = vpop.f32.mrb[0].mxu0
  %681 = vdwg.mxu0
  %v682 = vmax.f32 %v428, 0.0
  %v683 = vmax.f32 %v431, 0.0
  %v684 = vmax.f32 %v436, 0.0
  %v685 = vmax.f32 %v439, 0.0
  %v686 = vmax.f32 %v444, 0.0
  %v687 = vmax.f32 %v447, 0.0
  %v688 = vmax.f32 %v452, 0.0
  %v689 = vmax.f32 %v455, 0.0
  %v690 = vmax.f32 %v460, 0.0
  %v691 = vmax.f32 %v463, 0.0
  %v692 = vmax.f32 %v468, 0.0
  %v693 = vmax.f32 %v471, 0.0
  %v694 = vmax.f32 %v476, 0.0
  %v695 = vmax.f32 %v479, 0.0
  %v696 = vmax.f32 %v484, 0.0
  %v697 = vmax.f32 %v487, 0.0
  %v698 = vmax.f32 %v492, 0.0
  %v699 = vmax.f32 %v495, 0.0
  %v700 = vmax.f32 %v500, 0.0
  %v701 = vmax.f32 %v503, 0.0
  %v702 = vmax.f32 %v508, 0.0
  %v703 = vmax.f32 %v511, 0.0
  %v704 = vmax.f32 %v516, 0.0
  %v705 = vmax.f32 %v519, 0.0
  %v706 = vmax.f32 %v524, 0.0
  %v707 = vmax.f32 %v527, 0.0
  %v708 = vmax.f32 %v532, 0.0
  %v709 = vmax.f32 %v535, 0.0
  %v710 = vmax.f32 %v540, 0.0
  %v711 = vmax.f32 %v543, 0.0
  %v712 = vmax.f32 %v548, 0.0
  %v713 = vmax.f32 %v551, 0.0
  %v714 = vmax.f32 %v556, 0.0
  %v715 = vmax.f32 %v559, 0.0
  %v716 = vmax.f32 %v564, 0.0
  %v717 = vmax.f32 %v567, 0.0
  %v718 = vmax.f32 %v572, 0.0
  %v719 = vmax.f32 %v575, 0.0
  %v720 = vmax.f32 %v580, 0.0
  %v721 = vmax.f32 %v583, 0.0
  %v722 = vmax.f32 %v588, 0.0
  %v723 = vmax.f32 %v591, 0.0
  %v724 = vmax.f32 %v596, 0.0
  %v725 = vmax.f32 %v599, 0.0
  %v726 = vmax.f32 %v604, 0.0
  %v727 = vmax.f32 %v607, 0.0
  %v728 = vmax.f32 %v612, 0.0
  %v729 = vmax.f32 %v615, 0.0
  %v730 = vmax.f32 %v620, 0.0
  %v731 = vmax.f32 %v623, 0.0
  %v732 = vmax.f32 %v628, 0.0
  %v733 = vmax.f32 %v631, 0.0
  %v734 = vmax.f32 %v636, 0.0
  %v735 = vmax.f32 %v639, 0.0
  %v736 = vmax.f32 %v644, 0.0
  %v737 = vmax.f32 %v647, 0.0
  %v738 = vmax.f32 %v652, 0.0
  %v739 = vmax.f32 %v655, 0.0
  %v740 = vmax.f32 %v660, 0.0
  %v741 = vmax.f32 %v663, 0.0
  %v742 = vmax.f32 %v668, 0.0
  %v743 = vmax.f32 %v671, 0.0
  %v744 = vmax.f32 %v676, 0.0
  %v745 = vmax.f32 %v679, 0.0
  %v746 = vadd.f32 %v682, %v683
  %v747 = vrot.slane %v746, 4
  %v748 = vadd.f32 %v746, %v747
  %v749 = vrot.slane %v748, 2
  %v750 = vadd.f32 %v748, %v749
  %v751 = vrot.slane %v750, 1
  %v752 = vadd.f32 %v750, %v751
  %v753 = vadd.f32 %v690, %v691
  %v754 = vrot.slane %v753, 4
  %v755 = vadd.f32 %v753, %v754
  %v756 = vrot.slane %v755, 2
  %v757 = vadd.f32 %v755, %v756
  %v758 = vrot.slane %v757, 1
  %v759 = vadd.f32 %v757, %v758
  %v760 = vadd.f32 %v698, %v699
  %v761 = vrot.slane %v760, 4
  %v762 = vadd.f32 %v760, %v761
  %v763 = vrot.slane %v762, 2
  %v764 = vadd.f32 %v762, %v763
  %v765 = vrot.slane %v764, 1
  %v766 = vadd.f32 %v764, %v765
  %v767 = vadd.f32 %v706, %v707
  %v768 = vrot.slane %v767, 4
  %v769 = vadd.f32 %v767, %v768
  %v770 = vrot.slane %v769, 2
  %v771 = vadd.f32 %v769, %v770
  %v772 = vrot.slane %v771, 1
  %v773 = vadd.f32 %v771, %v772
  %v774 = vadd.f32 %v714, %v715
  %v775 = vrot.slane %v774, 4
  %v776 = vadd.f32 %v774, %v775
  %v777 = vrot.slane %v776, 2
  %v778 = vadd.f32 %v776, %v777
  %v779 = vrot.slane %v778, 1
  %v780 = vadd.f32 %v778, %v779
  %v781 = vadd.f32 %v722, %v723
  %v782 = vrot.slane %v781, 4
  %v783 = vadd.f32 %v781, %v782
  %v784 = vrot.slane %v783, 2
  %v785 = vadd.f32 %v783, %v784
  %v786 = vrot.slane %v785, 1
  %v787 = vadd.f32 %v785, %v786
  %v788 = vadd.f32 %v730, %v731
  %v789 = vrot.slane %v788, 4
  %v790 = vadd.f32 %v788, %v789
  %v791 = vrot.slane %v790, 2
  %v792 = vadd.f32 %v790, %v791
  %v793 = vrot.slane %v792, 1
  %v794 = vadd.f32 %v792, %v793
  %v795 = vadd.f32 %v738, %v739
  %v796 = vrot.slane %v795, 4
  %v797 = vadd.f32 %v795, %v796
  %v798 = vrot.slane %v797, 2
  %v799 = vadd.f32 %v797, %v798
  %v800 = vrot.slane %v799, 1
  %v801 = vadd.f32 %v799, %v800
  %v802 = vadd.f32 %v684, %v685
  %v803 = vrot.slane %v802, 4
  %v804 = vadd.f32 %v802, %v803
  %v805 = vrot.slane %v804, 2
  %v806 = vadd.f32 %v804, %v805
  %v807 = vrot.slane %v806, 1
  %v808 = vadd.f32 %v806, %v807
  %v809 = vadd.f32 %v692, %v693
  %v810 = vrot.slane %v809, 4
  %v811 = vadd.f32 %v809, %v810
  %v812 = vrot.slane %v811, 2
  %v813 = vadd.f32 %v811, %v812
  %v814 = vrot.slane %v813, 1
  %v815 = vadd.f32 %v813, %v814
  %v816 = vadd.f32 %v700, %v701
  %v817 = vrot.slane %v816, 4
  %v818 = vadd.f32 %v816, %v817
  %v819 = vrot.slane %v818, 2
  %v820 = vadd.f32 %v818, %v819
  %v821 = vrot.slane %v820, 1
  %v822 = vadd.f32 %v820, %v821
  %v823 = vadd.f32 %v708, %v709
  %v824 = vrot.slane %v823, 4
  %v825 = vadd.f32 %v823, %v824
  %v826 = vrot.slane %v825, 2
  %v827 = vadd.f32 %v825, %v826
  %v828 = vrot.slane %v827, 1
  %v829 = vadd.f32 %v827, %v828
  %v830 = vadd.f32 %v716, %v717
  %v831 = vrot.slane %v830, 4
  %v832 = vadd.f32 %v830, %v831
  %v833 = vrot.slane %v832, 2
  %v834 = vadd.f32 %v832, %v833
  %v835 = vrot.slane %v834, 1
  %v836 = vadd.f32 %v834, %v835
  %v837 = vadd.f32 %v724, %v725
  %v838 = vrot.slane %v837, 4
  %v839 = vadd.f32 %v837, %v838
  %v840 = vrot.slane %v839, 2
  %v841 = vadd.f32 %v839, %v840
  %v842 = vrot.slane %v841, 1
  %v843 = vadd.f32 %v841, %v842
  %v844 = vadd.f32 %v732, %v733
  %v845 = vrot.slane %v844, 4
  %v846 = vadd.f32 %v844, %v845
  %v847 = vrot.slane %v846, 2
  %v848 = vadd.f32 %v846, %v847
  %v849 = vrot.slane %v848, 1
  %v850 = vadd.f32 %v848, %v849
  %v851 = vadd.f32 %v740, %v741
  %v852 = vrot.slane %v851, 4
  %v853 = vadd.f32 %v851, %v852
  %v854 = vrot.slane %v853, 2
  %v855 = vadd.f32 %v853, %v854
  %v856 = vrot.slane %v855, 1
  %v857 = vadd.f32 %v855, %v856
  %v858 = vadd.f32 %v686, %v687
  %v859 = vrot.slane %v858, 4
  %v860 = vadd.f32 %v858, %v859
  %v861 = vrot.slane %v860, 2
  %v862 = vadd.f32 %v860, %v861
  %v863 = vrot.slane %v862, 1
  %v864 = vadd.f32 %v862, %v863
  %v865 = vadd.f32 %v694, %v695
  %v866 = vrot.slane %v865, 4
  %v867 = vadd.f32 %v865, %v866
  %v868 = vrot.slane %v867, 2
  %v869 = vadd.f32 %v867, %v868
  %v870 = vrot.slane %v869, 1
  %v871 = vadd.f32 %v869, %v870
  %v872 = vadd.f32 %v702, %v703
  %v873 = vrot.slane %v872, 4
  %v874 = vadd.f32 %v872, %v873
  %v875 = vrot.slane %v874, 2
  %v876 = vadd.f32 %v874, %v875
  %v877 = vrot.slane %v876, 1
  %v878 = vadd.f32 %v876, %v877
  %v879 = vadd.f32 %v710, %v711
  %v880 = vrot.slane %v879, 4
  %v881 = vadd.f32 %v879, %v880
  %v882 = vrot.slane %v881, 2
  %v883 = vadd.f32 %v881, %v882
  %v884 = vrot.slane %v883, 1
  %v885 = vadd.f32 %v883, %v884
  %v886 = vadd.f32 %v718, %v719
  %v887 = vrot.slane %v886, 4
  %v888 = vadd.f32 %v886, %v887
  %v889 = vrot.slane %v888, 2
  %v890 = vadd.f32 %v888, %v889
  %v891 = vrot.slane %v890, 1
  %v892 = vadd.f32 %v890, %v891
  %v893 = vadd.f32 %v726, %v727
  %v894 = vrot.slane %v893, 4
  %v895 = vadd.f32 %v893, %v894
  %v896 = vrot.slane %v895, 2
  %v897 = vadd.f32 %v895, %v896
  %v898 = vrot.slane %v897, 1
  %v899 = vadd.f32 %v897, %v898
  %v900 = vadd.f32 %v734, %v735
  %v901 = vrot.slane %v900, 4
  %v902 = vadd.f32 %v900, %v901
  %v903 = vrot.slane %v902, 2
  %v904 = vadd.f32 %v902, %v903
  %v905 = vrot.slane %v904, 1
  %v906 = vadd.f32 %v904, %v905
  %v907 = vadd.f32 %v742, %v743
  %v908 = vrot.slane %v907, 4
  %v909 = vadd.f32 %v907, %v908
  %v910 = vrot.slane %v909, 2
  %v911 = vadd.f32 %v909, %v910
  %v912 = vrot.slane %v911, 1
  %v913 = vadd.f32 %v911, %v912
  %v914 = vadd.f32 %v688, %v689
  %v915 = vrot.slane %v914, 4
  %v916 = vadd.f32 %v914, %v915
  %v917 = vrot.slane %v916, 2
  %v918 = vadd.f32 %v916, %v917
  %v919 = vrot.slane %v918, 1
  %v920 = vadd.f32 %v918, %v919
  %v921 = vadd.f32 %v696, %v697
  %v922 = vrot.slane %v921, 4
  %v923 = vadd.f32 %v921, %v922
  %v924 = vrot.slane %v923, 2
  %v925 = vadd.f32 %v923, %v924
  %v926 = vrot.slane %v925, 1
  %v927 = vadd.f32 %v925, %v926
  %v928 = vadd.f32 %v704, %v705
  %v929 = vrot.slane %v928, 4
  %v930 = vadd.f32 %v928, %v929
  %v931 = vrot.slane %v930, 2
  %v932 = vadd.f32 %v930, %v931
  %v933 = vrot.slane %v932, 1
  %v934 = vadd.f32 %v932, %v933
  %v935 = vadd.f32 %v712, %v713
  %v936 = vrot.slane %v935, 4
  %v937 = vadd.f32 %v935, %v936
  %v938 = vrot.slane %v937, 2
  %v939 = vadd.f32 %v937, %v938
  %v940 = vrot.slane %v939, 1
  %v941 = vadd.f32 %v939, %v940
  %v942 = vadd.f32 %v720, %v721
  %v943 = vrot.slane %v942, 4
  %v944 = vadd.f32 %v942, %v943
  %v945 = vrot.slane %v944, 2
  %v946 = vadd.f32 %v944, %v945
  %v947 = vrot.slane %v946, 1
  %v948 = vadd.f32 %v946, %v947
  %v949 = vadd.f32 %v728, %v729
  %v950 = vrot.slane %v949, 4
  %v951 = vadd.f32 %v949, %v950
  %v952 = vrot.slane %v951, 2
  %v953 = vadd.f32 %v951, %v952
  %v954 = vrot.slane %v953, 1
  %v955 = vadd.f32 %v953, %v954
  %v956 = vadd.f32 %v736, %v737
  %v957 = vrot.slane %v956, 4
  %v958 = vadd.f32 %v956, %v957
  %v959 = vrot.slane %v958, 2
  %v960 = vadd.f32 %v958, %v959
  %v961 = vrot.slane %v960, 1
  %v962 = vadd.f32 %v960, %v961
  %v963 = vadd.f32 %v744, %v745
  %v964 = vrot.slane %v963, 4
  %v965 = vadd.f32 %v963, %v964
  %v966 = vrot.slane %v965, 2
  %v967 = vadd.f32 %v965, %v966
  %v968 = vrot.slane %v967, 1
  %v969 = vadd.f32 %v967, %v968
  %v970 = vmul.f32 %v752, 0.0625
  %v971 = vmul.f32 %v759, 0.0625
  %v972 = vmul.f32 %v766, 0.0625
  %v973 = vmul.f32 %v773, 0.0625
  %v974 = vmul.f32 %v780, 0.0625
  %v975 = vmul.f32 %v787, 0.0625
  %v976 = vmul.f32 %v794, 0.0625
  %v977 = vmul.f32 %v801, 0.0625
  %v978 = vmul.f32 %v808, 0.0625
  %v979 = vmul.f32 %v815, 0.0625
  %v980 = vmul.f32 %v822, 0.0625
  %v981 = vmul.f32 %v829, 0.0625
  %v982 = vmul.f32 %v836, 0.0625
  %v983 = vmul.f32 %v843, 0.0625
  %v984 = vmul.f32 %v850, 0.0625
  %v985 = vmul.f32 %v857, 0.0625
  %v986 = vmul.f32 %v864, 0.0625
  %v987 = vmul.f32 %v871, 0.0625
  %v988 = vmul.f32 %v878, 0.0625
  %v989 = vmul.f32 %v885, 0.0625
  %v990 = vmul.f32 %v892, 0.0625
  %v991 = vmul.f32 %v899, 0.0625
  %v992 = vmul.f32 %v906, 0.0625
  %v993 = vmul.f32 %v913, 0.0625
  %v994 = vmul.f32 %v920, 0.0625
  %v995 = vmul.f32 %v927, 0.0625
  %v996 = vmul.f32 %v934, 0.0625
  %v997 = vmul.f32 %v941, 0.0625
  %v998 = vmul.f32 %v948, 0.0625
  %v999 = vmul.f32 %v955, 0.0625
  %v1000 = vmul.f32 %v962, 0.0625
  %v1001 = vmul.f32 %v969, 0.0625
  %v1002 = vadd.f32 %v752, %v808
  %v1003 = vadd.f32 %v759, %v815
  %v1004 = vadd.f32 %v766, %v822
  %v1005 = vadd.f32 %v773, %v829
  %v1006 = vadd.f32 %v780, %v836
  %v1007 = vadd.f32 %v787, %v843
  %v1008 = vadd.f32 %v794, %v850
  %v1009 = vadd.f32 %v801, %v857
  %v1010 = vadd.f32 %v1002, %v864
  %v1011 = vadd.f32 %v1003, %v871
  %v1012 = vadd.f32 %v1004, %v878
  %v1013 = vadd.f32 %v1005, %v885
  %v1014 = vadd.f32 %v1006, %v892
  %v1015 = vadd.f32 %v1007, %v899
  %v1016 = vadd.f32 %v1008, %v906
  %v1017 = vadd.f32 %v1009, %v913
  %v1018 = vadd.f32 %v1010, %v920
  %v1019 = vadd.f32 %v1011, %v927
  %v1020 = vadd.f32 %v1012, %v934
  %v1021 = vadd.f32 %v1013, %v941
  %v1022 = vadd.f32 %v1014, %v948
  %v1023 = vadd.f32 %v1015, %v955
  %v1024 = vadd.f32 %v1016, %v962
  %v1025 = vadd.f32 %v1017, %v969
  %v1026 = vmul.f32 %v1018, 0.015625
  %v1027 = vmul.f32 %v1019, 0.015625
  %v1028 = vmul.f32 %v1020, 0.015625
  %v1029 = vmul.f32 %v1021, 0.015625
  %v1030 = vmul.f32 %v1022, 0.015625
  %v1031 = vmul.f32 %v1023, 0.015625
  %v1032 = vmul.f32 %v1024, 0.015625
  %v1033 = vmul.f32 %v1025, 0.015625
  %v1034 = vmax.f32 %v682, %v683
  %v1035 = vmax.f32 %v1034, %v684
  %v1036 = vmax.f32 %v1035, %v685
  %v1037 = vmax.f32 %v1036, %v686
  %v1038 = vmax.f32 %v1037, %v687
  %v1039 = vmax.f32 %v1038, %v688
  %v1040 = vmax.f32 %v1039, %v689
  %v1041 = vrot.slane %v1040, 4
  %v1042 = vmax.f32 %v1040, %v1041
  %v1043 = vrot.slane %v1042, 2
  %v1044 = vmax.f32 %v1042, %v1043
  %v1045 = vrot.slane %v1044, 1
  %v1046 = vmax.f32 %v1044, %v1045
  %v1047 = vmax.f32 %v690, %v691
  %v1048 = vmax.f32 %v1047, %v692
  %v1049 = vmax.f32 %v1048, %v693
  %v1050 = vmax.f32 %v1049, %v694
  %v1051 = vmax.f32 %v1050, %v695
  %v1052 = vmax.f32 %v1051, %v696
  %v1053 = vmax.f32 %v1052, %v697
  %v1054 = vrot.slane %v1053, 4
  %v1055 = vmax.f32 %v1053, %v1054
  %v1056 = vrot.slane %v1055, 2
  %v1057 = vmax.f32 %v1055, %v1056
  %v1058 = vrot.slane %v1057, 1
  %v1059 = vmax.f32 %v1057, %v1058
  %v1060 = vmax.f32 %v698, %v699
  %v1061 = vmax.f32 %v1060, %v700
  %v1062 = vmax.f32 %v1061, %v701
  %v1063 = vmax.f32 %v1062, %v702
  %v1064 = vmax.f32 %v1063, %v703
  %v1065 = vmax.f32 %v1064, %v704
  %v1066 = vmax.f32 %v1065, %v705
  %v1067 = vrot.slane %v1066, 4
  %v1068 = vmax.f32 %v1066, %v1067
  %v1069 = vrot.slane %v1068, 2
  %v1070 = vmax.f32 %v1068, %v1069
  %v1071 = vrot.slane %v1070, 1
  %v1072 = vmax.f32 %v1070, %v1071
  %v1073 = vmax.f32 %v706, %v707
  %v1074 = vmax.f32 %v1073, %v708
  %v1075 = vmax.f32 %v1074, %v709
  %v1076 = vmax.f32 %v1075, %v710
  %v1077 = vmax.f32 %v1076, %v711
  %v1078 = vmax.f32 %v1077, %v712
  %v1079 = vmax.f32 %v1078, %v713
  %v1080 = vrot.slane %v1079, 4
  %v1081 = vmax.f32 %v1079, %v1080
  %v1082 = vrot.slane %v1081, 2
  %v1083 = vmax.f32 %v1081, %v1082
  %v1084 = vrot.slane %v1083, 1
  %v1085 = vmax.f32 %v1083, %v1084
  %v1086 = vmax.f32 %v714, %v715
  %v1087 = vmax.f32 %v1086, %v716
  %v1088 = vmax.f32 %v1087, %v717
  %v1089 = vmax.f32 %v1088, %v718
  %v1090 = vmax.f32 %v1089, %v719
  %v1091 = vmax.f32 %v1090, %v720
  %v1092 = vmax.f32 %v1091, %v721
  %v1093 = vrot.slane %v1092, 4
  %v1094 = vmax.f32 %v1092, %v1093
  %v1095 = vrot.slane %v1094, 2
  %v1096 = vmax.f32 %v1094, %v1095
  %v1097 = vrot.slane %v1096, 1
  %v1098 = vmax.f32 %v1096, %v1097
  %v1099 = vmax.f32 %v722, %v723
  %v1100 = vmax.f32 %v1099, %v724
  %v1101 = vmax.f32 %v1100, %v725
  %v1102 = vmax.f32 %v1101, %v726
  %v1103 = vmax.f32 %v1102, %v727
  %v1104 = vmax.f32 %v1103, %v728
  %v1105 = vmax.f32 %v1104, %v729
  %v1106 = vrot.slane %v1105, 4
  %v1107 = vmax.f32 %v1105, %v1106
  %v1108 = vrot.slane %v1107, 2
  %v1109 = vmax.f32 %v1107, %v1108
  %v1110 = vrot.slane %v1109, 1
  %v1111 = vmax.f32 %v1109, %v1110
  %v1112 = vmax.f32 %v730, %v731
  %v1113 = vmax.f32 %v1112, %v732
  %v1114 = vmax.f32 %v1113, %v733
  %v1115 = vmax.f32 %v1114, %v734
  %v1116 = vmax.f32 %v1115, %v735
  %v1117 = vmax.f32 %v1116, %v736
  %v1118 = vmax.f32 %v1117, %v737
  %v1119 = vrot.slane %v1118, 4
  %v1120 = vmax.f32 %v1118, %v1119
  %v1121 = vrot.slane %v1120, 2
  %v1122 = vmax.f32 %v1120, %v1121
  %v1123 = vrot.slane %v1122, 1
  %v1124 = vmax.f32 %v1122, %v1123
  %v1125 = vmax.f32 %v738, %v739
  %v1126 = vmax.f32 %v1125, %v740
  %v1127 = vmax.f32 %v1126, %v741
  %v1128 = vmax.f32 %v1127, %v742
  %v1129 = vmax.f32 %v1128, %v743
  %v1130 = vmax.f32 %v1129, %v744
  %v1131 = vmax.f32 %v1130, %v745
  %v1132 = vrot.slane %v1131, 4
  %v1133 = vmax.f32 %v1131, %v1132
  %v1134 = vrot.slane %v1133, 2
  %v1135 = vmax.f32 %v1133, %v1134
  %v1136 = vrot.slane %v1135, 1
  %v1137 = vmax.f32 %v1135, %v1136
  %vm1146 = vcmask 1041409
  %v1147 = vsel %vm1146, %v1027, %v1026
  %vm1148 = vcmask 1042434
  %v1149 = vsel %vm1148, %v1028, %v1147
  %vm1150 = vcmask 1043459
  %v1151 = vsel %vm1150, %v1029, %v1149
  %vm1152 = vcmask 1044484
  %v1153 = vsel %vm1152, %v1030, %v1151
  %vm1154 = vcmask 1045509
  %v1155 = vsel %vm1154, %v1031, %v1153
  %vm1156 = vcmask 1046534
  %v1157 = vsel %vm1156, %v1032, %v1155
  %vm1158 = vcmask 1047559
  %v1159 = vsel %vm1158, %v1033, %v1157
  %v1169 = vsel %vm1146, %v1059, %v1046
  %v1170 = vsel %vm1148, %v1072, %v1169
  %v1171 = vsel %vm1150, %v1085, %v1170
  %v1172 = vsel %vm1152, %v1098, %v1171
  %v1173 = vsel %vm1154, %v1111, %v1172
  %v1174 = vsel %vm1156, %v1124, %v1173
  %v1175 = vsel %vm1158, %v1137, %v1174
  %v1185 = vsel %vm1146, %v971, %v970
  %v1186 = vsel %vm1148, %v972, %v1185
  %v1187 = vsel %vm1150, %v973, %v1186
  %v1188 = vsel %vm1152, %v974, %v1187
  %v1189 = vsel %vm1154, %v975, %v1188
  %v1190 = vsel %vm1156, %v976, %v1189
  %v1191 = vsel %vm1158, %v977, %v1190
  %v1201 = vsel %vm1146, %v979, %v978
  %v1202 = vsel %vm1148, %v980, %v1201
  %v1203 = vsel %vm1150, %v981, %v1202
  %v1204 = vsel %vm1152, %v982, %v1203
  %v1205 = vsel %vm1154, %v983, %v1204
  %v1206 = vsel %vm1156, %v984, %v1205
  %v1207 = vsel %vm1158, %v985, %v1206
  %v1217 = vsel %vm1146, %v987, %v986
  %v1218 = vsel %vm1148, %v988, %v1217
  %v1219 = vsel %vm1150, %v989, %v1218
  %v1220 = vsel %vm1152, %v990, %v1219
  %v1221 = vsel %vm1154, %v991, %v1220
  %v1222 = vsel %vm1156, %v992, %v1221
  %v1223 = vsel %vm1158, %v993, %v1222
  %v1233 = vsel %vm1146, %v995, %v994
  %v1234 = vsel %vm1148, %v996, %v1233
  %v1235 = vsel %vm1150, %v997, %v1234
  %v1236 = vsel %vm1152, %v998, %v1235
  %v1237 = vsel %vm1154, %v999, %v1236
  %v1238 = vsel %vm1156, %v1000, %v1237
  %v1239 = vsel %vm1158, %v1001, %v1238
  %v1241 = vpack.c.bf16 %v1159, %v1159
  %v1242 = vpack.c.bf16 %v1175, %v1175
  %v1243 = vpack.c.bf16 %v1191, %v1191
  %v1244 = vpack.c.bf16 %v1207, %v1207
  %v1245 = vpack.c.bf16 %v1223, %v1223
  %v1246 = vpack.c.bf16 %v1239, %v1239
  %v1247 = vld [vmem:[%s3] sm:$0xff]
  %v1248 = vld [vmem:[%s3 + $0x8] sm:$0xff]
  %v1249 = vld [vmem:[%s3 + $0x10] sm:$0xff]
  %v1250 = vld [vmem:[%s3 + $0x18] sm:$0xff]
  %v1251 = vld [vmem:[%s3 + $0x20] sm:$0xff]
  %v1252 = vld [vmem:[%s3 + $0x28] sm:$0xff]
  %v1253 = vld [vmem:[%s3 + $0x30] sm:$0xff]
  %v1254 = vld [vmem:[%s3 + $0x38] sm:$0xff]
  %v1255 = vld [vmem:[%s3 + $0x40] sm:$0xff]
  %v1256 = vld [vmem:[%s3 + $0x48] sm:$0xff]
  %v1257 = vld [vmem:[%s3 + $0x50] sm:$0xff]
  %v1258 = vld [vmem:[%s3 + $0x58] sm:$0xff]
  %v1259 = vld [vmem:[%s3 + $0x60] sm:$0xff]
  %v1260 = vld [vmem:[%s3 + $0x68] sm:$0xff]
  %v1261 = vld [vmem:[%s3 + $0x70] sm:$0xff]
  %v1262 = vld [vmem:[%s3 + $0x78] sm:$0xff]
  %v1263 = vld [vmem:[%s3 + $0x80] sm:$0xff]
  %v1264 = vld [vmem:[%s3 + $0x88] sm:$0xff]
  %v1265 = vld [vmem:[%s3 + $0x90] sm:$0xff]
  %v1266 = vld [vmem:[%s3 + $0x98] sm:$0xff]
  %v1267 = vld [vmem:[%s3 + $0xa0] sm:$0xff]
  %v1268 = vld [vmem:[%s3 + $0xa8] sm:$0xff]
  %v1269 = vld [vmem:[%s3 + $0xb0] sm:$0xff]
  %v1270 = vld [vmem:[%s3 + $0xb8] sm:$0xff]
  %v1271 = vld [vmem:[%s3 + $0xc0] sm:$0xff]
  %v1272 = vld [vmem:[%s3 + $0xc8] sm:$0xff]
  %v1273 = vld [vmem:[%s3 + $0xd0] sm:$0xff]
  %v1274 = vld [vmem:[%s3 + $0xd8] sm:$0xff]
  %v1275 = vld [vmem:[%s3 + $0xe0] sm:$0xff]
  %v1276 = vld [vmem:[%s3 + $0xe8] sm:$0xff]
  %v1277 = vld [vmem:[%s3 + $0xf0] sm:$0xff]
  %v1278 = vld [vmem:[%s3 + $0xf8] sm:$0xff]
  %v1279 = vld [vmem:[%s3 + $0x100] sm:$0xff]
  %v1280 = vld [vmem:[%s3 + $0x108] sm:$0xff]
  %v1281 = vld [vmem:[%s3 + $0x110] sm:$0xff]
  %v1282 = vld [vmem:[%s3 + $0x118] sm:$0xff]
  %v1283 = vld [vmem:[%s3 + $0x120] sm:$0xff]
  %v1284 = vld [vmem:[%s3 + $0x128] sm:$0xff]
  %v1285 = vld [vmem:[%s3 + $0x130] sm:$0xff]
  %v1286 = vld [vmem:[%s3 + $0x138] sm:$0xff]
  %v1287 = vld [vmem:[%s3 + $0x140] sm:$0xff]
  %v1288 = vld [vmem:[%s3 + $0x148] sm:$0xff]
  %v1289 = vld [vmem:[%s3 + $0x150] sm:$0xff]
  %v1290 = vld [vmem:[%s3 + $0x158] sm:$0xff]
  %v1291 = vld [vmem:[%s3 + $0x160] sm:$0xff]
  %v1292 = vld [vmem:[%s3 + $0x168] sm:$0xff]
  %v1293 = vld [vmem:[%s3 + $0x170] sm:$0xff]
  %v1294 = vld [vmem:[%s3 + $0x178] sm:$0xff]
  %v1295 = vld [vmem:[%s3 + $0x180] sm:$0xff]
  %v1296 = vld [vmem:[%s3 + $0x188] sm:$0xff]
  %v1297 = vld [vmem:[%s3 + $0x190] sm:$0xff]
  %v1298 = vld [vmem:[%s3 + $0x198] sm:$0xff]
  %v1299 = vld [vmem:[%s3 + $0x1a0] sm:$0xff]
  %v1300 = vld [vmem:[%s3 + $0x1a8] sm:$0xff]
  %v1301 = vld [vmem:[%s3 + $0x1b0] sm:$0xff]
  %v1302 = vld [vmem:[%s3 + $0x1b8] sm:$0xff]
  %v1303 = vld [vmem:[%s3 + $0x1c0] sm:$0xff]
  %v1304 = vld [vmem:[%s3 + $0x1c8] sm:$0xff]
  %v1305 = vld [vmem:[%s3 + $0x1d0] sm:$0xff]
  %v1306 = vld [vmem:[%s3 + $0x1d8] sm:$0xff]
  %v1307 = vld [vmem:[%s3 + $0x1e0] sm:$0xff]
  %v1308 = vld [vmem:[%s3 + $0x1e8] sm:$0xff]
  %v1309 = vld [vmem:[%s3 + $0x1f0] sm:$0xff]
  %v1310 = vld [vmem:[%s3 + $0x1f8] sm:$0xff]
  %v1311 = vld [vmem:[%s3 + $0x200] sm:$0xff]
  %v1312 = vld [vmem:[%s3 + $0x208] sm:$0xff]
  %v1313 = vld [vmem:[%s3 + $0x210] sm:$0xff]
  %v1314 = vld [vmem:[%s3 + $0x218] sm:$0xff]
  %v1315 = vld [vmem:[%s3 + $0x220] sm:$0xff]
  %v1316 = vld [vmem:[%s3 + $0x228] sm:$0xff]
  %v1317 = vld [vmem:[%s3 + $0x230] sm:$0xff]
  %v1318 = vld [vmem:[%s3 + $0x238] sm:$0xff]
  %v1319 = vld [vmem:[%s3 + $0x240] sm:$0xff]
  %v1320 = vld [vmem:[%s3 + $0x248] sm:$0xff]
  %v1321 = vld [vmem:[%s3 + $0x250] sm:$0xff]
  %v1322 = vld [vmem:[%s3 + $0x258] sm:$0xff]
  %v1323 = vld [vmem:[%s3 + $0x260] sm:$0xff]
  %v1324 = vld [vmem:[%s3 + $0x268] sm:$0xff]
  %v1325 = vld [vmem:[%s3 + $0x270] sm:$0xff]
  %v1326 = vld [vmem:[%s3 + $0x278] sm:$0xff]
  %v1327 = vld [vmem:[%s3 + $0x280] sm:$0xff]
  %v1328 = vld [vmem:[%s3 + $0x288] sm:$0xff]
  %v1329 = vld [vmem:[%s3 + $0x290] sm:$0xff]
  %v1330 = vld [vmem:[%s3 + $0x298] sm:$0xff]
  %v1331 = vld [vmem:[%s3 + $0x2a0] sm:$0xff]
  %v1332 = vld [vmem:[%s3 + $0x2a8] sm:$0xff]
  %v1333 = vld [vmem:[%s3 + $0x2b0] sm:$0xff]
  %v1334 = vld [vmem:[%s3 + $0x2b8] sm:$0xff]
  %v1335 = vld [vmem:[%s3 + $0x2c0] sm:$0xff]
  %v1336 = vld [vmem:[%s3 + $0x2c8] sm:$0xff]
  %v1337 = vld [vmem:[%s3 + $0x2d0] sm:$0xff]
  %v1338 = vld [vmem:[%s3 + $0x2d8] sm:$0xff]
  %v1339 = vld [vmem:[%s3 + $0x2e0] sm:$0xff]
  %v1340 = vld [vmem:[%s3 + $0x2e8] sm:$0xff]
  %v1341 = vld [vmem:[%s3 + $0x2f0] sm:$0xff]
  %v1342 = vld [vmem:[%s3 + $0x2f8] sm:$0xff]
  %v1343 = vld [vmem:[%s4] sm:$0x3]
  %v1345 = vlaneseq
  %v1346 = vshrl.u32 %v1345, 7
  %v1347 = vsub.s32 0, %v1346
  %v1348 = vrot.slane %v1343, %v1347
  %v1349 = vlaneseq
  %v1350 = vshrl.u32 %v1349, 7
  %v1351 = vsub.s32 1, %v1350
  %v1352 = vrot.slane %v1343, %v1351
  %v1451 = vunpack.c.l.b16 %v1247
  %v1452 = vunpack.c.h.b16 %v1247
  %v1453 = vunpack.c.l.b16 %v1248
  %v1454 = vunpack.c.h.b16 %v1248
  %v1455 = vunpack.c.l.b16 %v1249
  %v1456 = vunpack.c.h.b16 %v1249
  %v1457 = vunpack.c.l.b16 %v1250
  %v1458 = vunpack.c.h.b16 %v1250
  %v1459 = vunpack.c.l.b16 %v1251
  %v1460 = vunpack.c.h.b16 %v1251
  %v1461 = vunpack.c.l.b16 %v1252
  %v1462 = vunpack.c.h.b16 %v1252
  %v1463 = vunpack.c.l.b16 %v1253
  %v1464 = vunpack.c.h.b16 %v1253
  %v1465 = vunpack.c.l.b16 %v1254
  %v1466 = vunpack.c.h.b16 %v1254
  %v1467 = vunpack.c.l.b16 %v1255
  %v1468 = vunpack.c.h.b16 %v1255
  %v1469 = vunpack.c.l.b16 %v1256
  %v1470 = vunpack.c.h.b16 %v1256
  %v1471 = vunpack.c.l.b16 %v1257
  %v1472 = vunpack.c.h.b16 %v1257
  %v1473 = vunpack.c.l.b16 %v1258
  %v1474 = vunpack.c.h.b16 %v1258
  %v1475 = vunpack.c.l.b16 %v1259
  %v1476 = vunpack.c.h.b16 %v1259
  %v1477 = vunpack.c.l.b16 %v1260
  %v1478 = vunpack.c.h.b16 %v1260
  %v1479 = vunpack.c.l.b16 %v1261
  %v1480 = vunpack.c.h.b16 %v1261
  %v1481 = vunpack.c.l.b16 %v1262
  %v1482 = vunpack.c.h.b16 %v1262
  %v1483 = vunpack.c.l.b16 %v1263
  %v1484 = vunpack.c.h.b16 %v1263
  %v1485 = vunpack.c.l.b16 %v1264
  %v1486 = vunpack.c.h.b16 %v1264
  %v1487 = vunpack.c.l.b16 %v1265
  %v1488 = vunpack.c.h.b16 %v1265
  %v1489 = vunpack.c.l.b16 %v1266
  %v1490 = vunpack.c.h.b16 %v1266
  %v1491 = vunpack.c.l.b16 %v1267
  %v1492 = vunpack.c.h.b16 %v1267
  %v1493 = vunpack.c.l.b16 %v1268
  %v1494 = vunpack.c.h.b16 %v1268
  %v1495 = vunpack.c.l.b16 %v1269
  %v1496 = vunpack.c.h.b16 %v1269
  %v1497 = vunpack.c.l.b16 %v1270
  %v1498 = vunpack.c.h.b16 %v1270
  %v1499 = vunpack.c.l.b16 %v1271
  %v1500 = vunpack.c.h.b16 %v1271
  %v1501 = vunpack.c.l.b16 %v1272
  %v1502 = vunpack.c.h.b16 %v1272
  %v1503 = vunpack.c.l.b16 %v1273
  %v1504 = vunpack.c.h.b16 %v1273
  %v1505 = vunpack.c.l.b16 %v1274
  %v1506 = vunpack.c.h.b16 %v1274
  %v1507 = vunpack.c.l.b16 %v1275
  %v1508 = vunpack.c.h.b16 %v1275
  %v1509 = vunpack.c.l.b16 %v1276
  %v1510 = vunpack.c.h.b16 %v1276
  %v1511 = vunpack.c.l.b16 %v1277
  %v1512 = vunpack.c.h.b16 %v1277
  %v1513 = vunpack.c.l.b16 %v1278
  %v1514 = vunpack.c.h.b16 %v1278
  %v1515 = vunpack.c.l.b16 %v1279
  %v1516 = vunpack.c.h.b16 %v1279
  %v1517 = vunpack.c.l.b16 %v1280
  %v1518 = vunpack.c.h.b16 %v1280
  %v1519 = vunpack.c.l.b16 %v1281
  %v1520 = vunpack.c.h.b16 %v1281
  %v1521 = vunpack.c.l.b16 %v1282
  %v1522 = vunpack.c.h.b16 %v1282
  %v1523 = vunpack.c.l.b16 %v1283
  %v1524 = vunpack.c.h.b16 %v1283
  %v1525 = vunpack.c.l.b16 %v1284
  %v1526 = vunpack.c.h.b16 %v1284
  %v1527 = vunpack.c.l.b16 %v1285
  %v1528 = vunpack.c.h.b16 %v1285
  %v1529 = vunpack.c.l.b16 %v1286
  %v1530 = vunpack.c.h.b16 %v1286
  %v1531 = vunpack.c.l.b16 %v1287
  %v1532 = vunpack.c.h.b16 %v1287
  %v1533 = vunpack.c.l.b16 %v1288
  %v1534 = vunpack.c.h.b16 %v1288
  %v1535 = vunpack.c.l.b16 %v1289
  %v1536 = vunpack.c.h.b16 %v1289
  %v1537 = vunpack.c.l.b16 %v1290
  %v1538 = vunpack.c.h.b16 %v1290
  %v1539 = vunpack.c.l.b16 %v1291
  %v1540 = vunpack.c.h.b16 %v1291
  %v1541 = vunpack.c.l.b16 %v1292
  %v1542 = vunpack.c.h.b16 %v1292
  %v1543 = vunpack.c.l.b16 %v1293
  %v1544 = vunpack.c.h.b16 %v1293
  %v1545 = vunpack.c.l.b16 %v1294
  %v1546 = vunpack.c.h.b16 %v1294
  %v1547 = vunpack.c.l.b16 %v1295
  %v1548 = vunpack.c.h.b16 %v1295
  %v1549 = vunpack.c.l.b16 %v1296
  %v1550 = vunpack.c.h.b16 %v1296
  %v1551 = vunpack.c.l.b16 %v1297
  %v1552 = vunpack.c.h.b16 %v1297
  %v1553 = vunpack.c.l.b16 %v1298
  %v1554 = vunpack.c.h.b16 %v1298
  %v1555 = vunpack.c.l.b16 %v1299
  %v1556 = vunpack.c.h.b16 %v1299
  %v1557 = vunpack.c.l.b16 %v1300
  %v1558 = vunpack.c.h.b16 %v1300
  %v1559 = vunpack.c.l.b16 %v1301
  %v1560 = vunpack.c.h.b16 %v1301
  %v1561 = vunpack.c.l.b16 %v1302
  %v1562 = vunpack.c.h.b16 %v1302
  %v1563 = vunpack.c.l.b16 %v1303
  %v1564 = vunpack.c.h.b16 %v1303
  %v1565 = vunpack.c.l.b16 %v1304
  %v1566 = vunpack.c.h.b16 %v1304
  %v1567 = vunpack.c.l.b16 %v1305
  %v1568 = vunpack.c.h.b16 %v1305
  %v1569 = vunpack.c.l.b16 %v1306
  %v1570 = vunpack.c.h.b16 %v1306
  %v1571 = vunpack.c.l.b16 %v1307
  %v1572 = vunpack.c.h.b16 %v1307
  %v1573 = vunpack.c.l.b16 %v1308
  %v1574 = vunpack.c.h.b16 %v1308
  %v1575 = vunpack.c.l.b16 %v1309
  %v1576 = vunpack.c.h.b16 %v1309
  %v1577 = vunpack.c.l.b16 %v1310
  %v1578 = vunpack.c.h.b16 %v1310
  %v1579 = vunpack.c.l.b16 %v1311
  %v1580 = vunpack.c.h.b16 %v1311
  %v1581 = vunpack.c.l.b16 %v1312
  %v1582 = vunpack.c.h.b16 %v1312
  %v1583 = vunpack.c.l.b16 %v1313
  %v1584 = vunpack.c.h.b16 %v1313
  %v1585 = vunpack.c.l.b16 %v1314
  %v1586 = vunpack.c.h.b16 %v1314
  %v1587 = vunpack.c.l.b16 %v1315
  %v1588 = vunpack.c.h.b16 %v1315
  %v1589 = vunpack.c.l.b16 %v1316
  %v1590 = vunpack.c.h.b16 %v1316
  %v1591 = vunpack.c.l.b16 %v1317
  %v1592 = vunpack.c.h.b16 %v1317
  %v1593 = vunpack.c.l.b16 %v1318
  %v1594 = vunpack.c.h.b16 %v1318
  %v1595 = vunpack.c.l.b16 %v1319
  %v1596 = vunpack.c.h.b16 %v1319
  %v1597 = vunpack.c.l.b16 %v1320
  %v1598 = vunpack.c.h.b16 %v1320
  %v1599 = vunpack.c.l.b16 %v1321
  %v1600 = vunpack.c.h.b16 %v1321
  %v1601 = vunpack.c.l.b16 %v1322
  %v1602 = vunpack.c.h.b16 %v1322
  %v1603 = vunpack.c.l.b16 %v1323
  %v1604 = vunpack.c.h.b16 %v1323
  %v1605 = vunpack.c.l.b16 %v1324
  %v1606 = vunpack.c.h.b16 %v1324
  %v1607 = vunpack.c.l.b16 %v1325
  %v1608 = vunpack.c.h.b16 %v1325
  %v1609 = vunpack.c.l.b16 %v1326
  %v1610 = vunpack.c.h.b16 %v1326
  %v1611 = vunpack.c.l.b16 %v1327
  %v1612 = vunpack.c.h.b16 %v1327
  %v1613 = vunpack.c.l.b16 %v1328
  %v1614 = vunpack.c.h.b16 %v1328
  %v1615 = vunpack.c.l.b16 %v1329
  %v1616 = vunpack.c.h.b16 %v1329
  %v1617 = vunpack.c.l.b16 %v1330
  %v1618 = vunpack.c.h.b16 %v1330
  %v1619 = vunpack.c.l.b16 %v1331
  %v1620 = vunpack.c.h.b16 %v1331
  %v1621 = vunpack.c.l.b16 %v1332
  %v1622 = vunpack.c.h.b16 %v1332
  %v1623 = vunpack.c.l.b16 %v1333
  %v1624 = vunpack.c.h.b16 %v1333
  %v1625 = vunpack.c.l.b16 %v1334
  %v1626 = vunpack.c.h.b16 %v1334
  %v1627 = vunpack.c.l.b16 %v1335
  %v1628 = vunpack.c.h.b16 %v1335
  %v1629 = vunpack.c.l.b16 %v1336
  %v1630 = vunpack.c.h.b16 %v1336
  %v1631 = vunpack.c.l.b16 %v1337
  %v1632 = vunpack.c.h.b16 %v1337
  %v1633 = vunpack.c.l.b16 %v1338
  %v1634 = vunpack.c.h.b16 %v1338
  %v1635 = vunpack.c.l.b16 %v1339
  %v1636 = vunpack.c.h.b16 %v1339
  %v1637 = vunpack.c.l.b16 %v1340
  %v1638 = vunpack.c.h.b16 %v1340
  %v1639 = vunpack.c.l.b16 %v1341
  %v1640 = vunpack.c.h.b16 %v1341
  %v1641 = vunpack.c.l.b16 %v1342
  %v1642 = vunpack.c.h.b16 %v1342
  %v1643 = vpack.c.b16 %v1453, %v1451
  %v1644 = vpack.c.b16 %v1454, %v1452
  %v1645 = vpack.c.b16 %v1457, %v1455
  %v1646 = vpack.c.b16 %v1458, %v1456
  %v1647 = vpack.c.b16 %v1461, %v1459
  %v1648 = vpack.c.b16 %v1462, %v1460
  %v1649 = vpack.c.b16 %v1465, %v1463
  %v1650 = vpack.c.b16 %v1466, %v1464
  %v1651 = vpack.c.b16 %v1469, %v1467
  %v1652 = vpack.c.b16 %v1470, %v1468
  %v1653 = vpack.c.b16 %v1473, %v1471
  %v1654 = vpack.c.b16 %v1474, %v1472
  %v1655 = vpack.c.b16 %v1477, %v1475
  %v1656 = vpack.c.b16 %v1478, %v1476
  %v1657 = vpack.c.b16 %v1481, %v1479
  %v1658 = vpack.c.b16 %v1482, %v1480
  %v1659 = vpack.c.b16 %v1485, %v1483
  %v1660 = vpack.c.b16 %v1486, %v1484
  %v1661 = vpack.c.b16 %v1489, %v1487
  %v1662 = vpack.c.b16 %v1490, %v1488
  %v1663 = vpack.c.b16 %v1493, %v1491
  %v1664 = vpack.c.b16 %v1494, %v1492
  %v1665 = vpack.c.b16 %v1497, %v1495
  %v1666 = vpack.c.b16 %v1498, %v1496
  %v1667 = vpack.c.b16 %v1501, %v1499
  %v1668 = vpack.c.b16 %v1502, %v1500
  %v1669 = vpack.c.b16 %v1505, %v1503
  %v1670 = vpack.c.b16 %v1506, %v1504
  %v1671 = vpack.c.b16 %v1509, %v1507
  %v1672 = vpack.c.b16 %v1510, %v1508
  %v1673 = vpack.c.b16 %v1513, %v1511
  %v1674 = vpack.c.b16 %v1514, %v1512
  %v1675 = vpack.c.b16 %v1517, %v1515
  %v1676 = vpack.c.b16 %v1518, %v1516
  %v1677 = vpack.c.b16 %v1521, %v1519
  %v1678 = vpack.c.b16 %v1522, %v1520
  %v1679 = vpack.c.b16 %v1525, %v1523
  %v1680 = vpack.c.b16 %v1526, %v1524
  %v1681 = vpack.c.b16 %v1529, %v1527
  %v1682 = vpack.c.b16 %v1530, %v1528
  %v1683 = vpack.c.b16 %v1533, %v1531
  %v1684 = vpack.c.b16 %v1534, %v1532
  %v1685 = vpack.c.b16 %v1537, %v1535
  %v1686 = vpack.c.b16 %v1538, %v1536
  %v1687 = vpack.c.b16 %v1541, %v1539
  %v1688 = vpack.c.b16 %v1542, %v1540
  %v1689 = vpack.c.b16 %v1545, %v1543
  %v1690 = vpack.c.b16 %v1546, %v1544
  %v1691 = vpack.c.b16 %v1549, %v1547
  %v1692 = vpack.c.b16 %v1550, %v1548
  %v1693 = vpack.c.b16 %v1553, %v1551
  %v1694 = vpack.c.b16 %v1554, %v1552
  %v1695 = vpack.c.b16 %v1557, %v1555
  %v1696 = vpack.c.b16 %v1558, %v1556
  %v1697 = vpack.c.b16 %v1561, %v1559
  %v1698 = vpack.c.b16 %v1562, %v1560
  %v1699 = vpack.c.b16 %v1565, %v1563
  %v1700 = vpack.c.b16 %v1566, %v1564
  %v1701 = vpack.c.b16 %v1569, %v1567
  %v1702 = vpack.c.b16 %v1570, %v1568
  %v1703 = vpack.c.b16 %v1573, %v1571
  %v1704 = vpack.c.b16 %v1574, %v1572
  %v1705 = vpack.c.b16 %v1577, %v1575
  %v1706 = vpack.c.b16 %v1578, %v1576
  %v1707 = vpack.c.b16 %v1581, %v1579
  %v1708 = vpack.c.b16 %v1582, %v1580
  %v1709 = vpack.c.b16 %v1585, %v1583
  %v1710 = vpack.c.b16 %v1586, %v1584
  %v1711 = vpack.c.b16 %v1589, %v1587
  %v1712 = vpack.c.b16 %v1590, %v1588
  %v1713 = vpack.c.b16 %v1593, %v1591
  %v1714 = vpack.c.b16 %v1594, %v1592
  %v1715 = vpack.c.b16 %v1597, %v1595
  %v1716 = vpack.c.b16 %v1598, %v1596
  %v1717 = vpack.c.b16 %v1601, %v1599
  %v1718 = vpack.c.b16 %v1602, %v1600
  %v1719 = vpack.c.b16 %v1605, %v1603
  %v1720 = vpack.c.b16 %v1606, %v1604
  %v1721 = vpack.c.b16 %v1609, %v1607
  %v1722 = vpack.c.b16 %v1610, %v1608
  %v1723 = vpack.c.b16 %v1613, %v1611
  %v1724 = vpack.c.b16 %v1614, %v1612
  %v1725 = vpack.c.b16 %v1617, %v1615
  %v1726 = vpack.c.b16 %v1618, %v1616
  %v1727 = vpack.c.b16 %v1621, %v1619
  %v1728 = vpack.c.b16 %v1622, %v1620
  %v1729 = vpack.c.b16 %v1625, %v1623
  %v1730 = vpack.c.b16 %v1626, %v1624
  %v1731 = vpack.c.b16 %v1629, %v1627
  %v1732 = vpack.c.b16 %v1630, %v1628
  %v1733 = vpack.c.b16 %v1633, %v1631
  %v1734 = vpack.c.b16 %v1634, %v1632
  %v1735 = vpack.c.b16 %v1637, %v1635
  %v1736 = vpack.c.b16 %v1638, %v1636
  %v1737 = vpack.c.b16 %v1641, %v1639
  %v1738 = vpack.c.b16 %v1642, %v1640
  %1835 = vmatprep.subr.bf16.mxu0 %v1644
  %1836 = vmatpush1.bf16.msra.mxu0 %v1643
  %1837 = vmatprep.subr.bf16.mxu0 %v1646
  %1838 = vmatpush1.bf16.msra.mxu0 %v1645
  %1839 = vmatprep.subr.bf16.mxu0 %v1648
  %1840 = vmatpush1.bf16.msra.mxu0 %v1647
  %1841 = vmatprep.subr.bf16.mxu0 %v1650
  %1842 = vmatpush1.bf16.msra.mxu0 %v1649
  %1843 = vmatprep.subr.bf16.mxu0 %v1652
  %1844 = vmatpush1.bf16.msra.mxu0 %v1651
  %1845 = vmatprep.subr.bf16.mxu0 %v1654
  %1846 = vmatpush1.bf16.msra.mxu0 %v1653
  %1847 = vmatprep.subr.bf16.mxu0 %v1656
  %1848 = vmatpush1.bf16.msra.mxu0 %v1655
  %1849 = vmatprep.subr.bf16.mxu0 %v1658
  %1850 = vmatpush1.bf16.msra.mxu0 %v1657
  %1851 = vmatprep.subr.bf16.mxu0 %v1660
  %1852 = vmatpush1.bf16.msra.mxu0 %v1659
  %1853 = vmatprep.subr.bf16.mxu0 %v1662
  %1854 = vmatpush1.bf16.msra.mxu0 %v1661
  %1855 = vmatprep.subr.bf16.mxu0 %v1664
  %1856 = vmatpush1.bf16.msra.mxu0 %v1663
  %1857 = vmatprep.subr.bf16.mxu0 %v1666
  %1858 = vmatpush1.bf16.msra.mxu0 %v1665
  %1859 = vmatprep.subr.bf16.mxu0 %v1668
  %1860 = vmatpush1.bf16.msra.mxu0 %v1667
  %1861 = vmatprep.subr.bf16.mxu0 %v1670
  %1862 = vmatpush1.bf16.msra.mxu0 %v1669
  %1863 = vmatprep.subr.bf16.mxu0 %v1672
  %1864 = vmatpush1.bf16.msra.mxu0 %v1671
  %1865 = vmatprep.subr.bf16.mxu0 %v1674
  %1866 = vmatpush1.bf16.msra.mxu0 %v1673
  %1867 = vmatprep.mubr.bf16.mxu0 %v1242
  %1868 = vmatmul.mubr.bf16.gmra.mrb[0].mxu0 %v1241
  %v1869 = vpop.f32.mrb[0].mxu0
  %v1870 = vadd.f32 %v1348, %v1869
  %v1871 = vpop.f32.mrb[0].mxu0
  %v1872 = vadd.f32 %v1352, %v1871
  %v1873 = vpop.f32.mrb[0].mxu0
  %v1874 = vpop.f32.mrb[0].mxu0
  %1875 = vdwg.mxu0
  %1876 = vmatprep.subr.bf16.mxu0 %v1676
  %1877 = vmatpush1.bf16.msra.mxu0 %v1675
  %1878 = vmatprep.subr.bf16.mxu0 %v1678
  %1879 = vmatpush1.bf16.msra.mxu0 %v1677
  %1880 = vmatprep.subr.bf16.mxu0 %v1680
  %1881 = vmatpush1.bf16.msra.mxu0 %v1679
  %1882 = vmatprep.subr.bf16.mxu0 %v1682
  %1883 = vmatpush1.bf16.msra.mxu0 %v1681
  %1884 = vmatprep.subr.bf16.mxu0 %v1684
  %1885 = vmatpush1.bf16.msra.mxu0 %v1683
  %1886 = vmatprep.subr.bf16.mxu0 %v1686
  %1887 = vmatpush1.bf16.msra.mxu0 %v1685
  %1888 = vmatprep.subr.bf16.mxu0 %v1688
  %1889 = vmatpush1.bf16.msra.mxu0 %v1687
  %1890 = vmatprep.subr.bf16.mxu0 %v1690
  %1891 = vmatpush1.bf16.msra.mxu0 %v1689
  %1892 = vmatprep.subr.bf16.mxu0 %v1692
  %1893 = vmatpush1.bf16.msra.mxu0 %v1691
  %1894 = vmatprep.subr.bf16.mxu0 %v1694
  %1895 = vmatpush1.bf16.msra.mxu0 %v1693
  %1896 = vmatprep.subr.bf16.mxu0 %v1696
  %1897 = vmatpush1.bf16.msra.mxu0 %v1695
  %1898 = vmatprep.subr.bf16.mxu0 %v1698
  %1899 = vmatpush1.bf16.msra.mxu0 %v1697
  %1900 = vmatprep.subr.bf16.mxu0 %v1700
  %1901 = vmatpush1.bf16.msra.mxu0 %v1699
  %1902 = vmatprep.subr.bf16.mxu0 %v1702
  %1903 = vmatpush1.bf16.msra.mxu0 %v1701
  %1904 = vmatprep.subr.bf16.mxu0 %v1704
  %1905 = vmatpush1.bf16.msra.mxu0 %v1703
  %1906 = vmatprep.subr.bf16.mxu0 %v1706
  %1907 = vmatpush1.bf16.msra.mxu0 %v1705
  %1908 = vmatprep.mubr.bf16.mxu0 %v1244
  %1909 = vmatmul.mubr.bf16.gmra.mrb[0].mxu0 %v1243
  %v1910 = vpop.f32.mrb[0].mxu0
  %v1911 = vadd.f32 %v1870, %v1910
  %v1912 = vpop.f32.mrb[0].mxu0
  %v1913 = vadd.f32 %v1872, %v1912
  %v1914 = vpop.f32.mrb[0].mxu0
  %v1915 = vpop.f32.mrb[0].mxu0
  %1916 = vdwg.mxu0
  %1917 = vmatprep.subr.bf16.mxu0 %v1708
  %1918 = vmatpush1.bf16.msra.mxu0 %v1707
  %1919 = vmatprep.subr.bf16.mxu0 %v1710
  %1920 = vmatpush1.bf16.msra.mxu0 %v1709
  %1921 = vmatprep.subr.bf16.mxu0 %v1712
  %1922 = vmatpush1.bf16.msra.mxu0 %v1711
  %1923 = vmatprep.subr.bf16.mxu0 %v1714
  %1924 = vmatpush1.bf16.msra.mxu0 %v1713
  %1925 = vmatprep.subr.bf16.mxu0 %v1716
  %1926 = vmatpush1.bf16.msra.mxu0 %v1715
  %1927 = vmatprep.subr.bf16.mxu0 %v1718
  %1928 = vmatpush1.bf16.msra.mxu0 %v1717
  %1929 = vmatprep.subr.bf16.mxu0 %v1720
  %1930 = vmatpush1.bf16.msra.mxu0 %v1719
  %1931 = vmatprep.subr.bf16.mxu0 %v1722
  %1932 = vmatpush1.bf16.msra.mxu0 %v1721
  %1933 = vmatprep.subr.bf16.mxu0 %v1724
  %1934 = vmatpush1.bf16.msra.mxu0 %v1723
  %1935 = vmatprep.subr.bf16.mxu0 %v1726
  %1936 = vmatpush1.bf16.msra.mxu0 %v1725
  %1937 = vmatprep.subr.bf16.mxu0 %v1728
  %1938 = vmatpush1.bf16.msra.mxu0 %v1727
  %1939 = vmatprep.subr.bf16.mxu0 %v1730
  %1940 = vmatpush1.bf16.msra.mxu0 %v1729
  %1941 = vmatprep.subr.bf16.mxu0 %v1732
  %1942 = vmatpush1.bf16.msra.mxu0 %v1731
  %1943 = vmatprep.subr.bf16.mxu0 %v1734
  %1944 = vmatpush1.bf16.msra.mxu0 %v1733
  %1945 = vmatprep.subr.bf16.mxu0 %v1736
  %1946 = vmatpush1.bf16.msra.mxu0 %v1735
  %1947 = vmatprep.subr.bf16.mxu0 %v1738
  %1948 = vmatpush1.bf16.msra.mxu0 %v1737
  %1949 = vmatprep.mubr.bf16.mxu0 %v1246
  %1950 = vmatmul.mubr.bf16.gmra.mrb[0].mxu0 %v1245
  %v1951 = vpop.f32.mrb[0].mxu0
  %v1952 = vadd.f32 %v1911, %v1951
  %v1953 = vpop.f32.mrb[0].mxu0
  %v1954 = vadd.f32 %v1913, %v1953
  %v1955 = vpop.f32.mrb[0].mxu0
  %v1956 = vpop.f32.mrb[0].mxu0
  %1957 = vdwg.mxu0
  %v1958 = vmax.f32 %v1952, 0.0
  %v1959 = vmax.f32 %v1954, 0.0
  %v1960 = vpack.c.bf16 %v1958, %v1958
  %v1961 = vpack.c.bf16 %v1959, %v1959
  %v1962 = vld [vmem:[%s5] sm:$0xff]
  %v1963 = vld [vmem:[%s5 + $0x8] sm:$0xff]
  %v1964 = vld [vmem:[%s5 + $0x10] sm:$0xff]
  %v1965 = vld [vmem:[%s5 + $0x18] sm:$0xff]
  %v1966 = vld [vmem:[%s5 + $0x20] sm:$0xff]
  %v1967 = vld [vmem:[%s5 + $0x28] sm:$0xff]
  %v1968 = vld [vmem:[%s5 + $0x30] sm:$0xff]
  %v1969 = vld [vmem:[%s5 + $0x38] sm:$0xff]
  %v1970 = vld [vmem:[%s5 + $0x40] sm:$0xff]
  %v1971 = vld [vmem:[%s5 + $0x48] sm:$0xff]
  %v1972 = vld [vmem:[%s5 + $0x50] sm:$0xff]
  %v1973 = vld [vmem:[%s5 + $0x58] sm:$0xff]
  %v1974 = vld [vmem:[%s5 + $0x60] sm:$0xff]
  %v1975 = vld [vmem:[%s5 + $0x68] sm:$0xff]
  %v1976 = vld [vmem:[%s5 + $0x70] sm:$0xff]
  %v1977 = vld [vmem:[%s5 + $0x78] sm:$0xff]
  %v1978 = vld [vmem:[%s5 + $0x80] sm:$0xff]
  %v1979 = vld [vmem:[%s5 + $0x88] sm:$0xff]
  %v1980 = vld [vmem:[%s5 + $0x90] sm:$0xff]
  %v1981 = vld [vmem:[%s5 + $0x98] sm:$0xff]
  %v1982 = vld [vmem:[%s5 + $0xa0] sm:$0xff]
  %v1983 = vld [vmem:[%s5 + $0xa8] sm:$0xff]
  %v1984 = vld [vmem:[%s5 + $0xb0] sm:$0xff]
  %v1985 = vld [vmem:[%s5 + $0xb8] sm:$0xff]
  %v1986 = vld [vmem:[%s5 + $0xc0] sm:$0xff]
  %v1987 = vld [vmem:[%s5 + $0xc8] sm:$0xff]
  %v1988 = vld [vmem:[%s5 + $0xd0] sm:$0xff]
  %v1989 = vld [vmem:[%s5 + $0xd8] sm:$0xff]
  %v1990 = vld [vmem:[%s5 + $0xe0] sm:$0xff]
  %v1991 = vld [vmem:[%s5 + $0xe8] sm:$0xff]
  %v1992 = vld [vmem:[%s5 + $0xf0] sm:$0xff]
  %v1993 = vld [vmem:[%s5 + $0xf8] sm:$0xff]
  %v1994 = vld [vmem:[%s5 + $0x100] sm:$0xff]
  %v1995 = vld [vmem:[%s5 + $0x108] sm:$0xff]
  %v1996 = vld [vmem:[%s5 + $0x110] sm:$0xff]
  %v1997 = vld [vmem:[%s5 + $0x118] sm:$0xff]
  %v1998 = vld [vmem:[%s5 + $0x120] sm:$0xff]
  %v1999 = vld [vmem:[%s5 + $0x128] sm:$0xff]
  %v2000 = vld [vmem:[%s5 + $0x130] sm:$0xff]
  %v2001 = vld [vmem:[%s5 + $0x138] sm:$0xff]
  %v2002 = vld [vmem:[%s5 + $0x140] sm:$0xff]
  %v2003 = vld [vmem:[%s5 + $0x148] sm:$0xff]
  %v2004 = vld [vmem:[%s5 + $0x150] sm:$0xff]
  %v2005 = vld [vmem:[%s5 + $0x158] sm:$0xff]
  %v2006 = vld [vmem:[%s5 + $0x160] sm:$0xff]
  %v2007 = vld [vmem:[%s5 + $0x168] sm:$0xff]
  %v2008 = vld [vmem:[%s5 + $0x170] sm:$0xff]
  %v2009 = vld [vmem:[%s5 + $0x178] sm:$0xff]
  %v2010 = vld [vmem:[%s5 + $0x180] sm:$0xff]
  %v2011 = vld [vmem:[%s5 + $0x188] sm:$0xff]
  %v2012 = vld [vmem:[%s5 + $0x190] sm:$0xff]
  %v2013 = vld [vmem:[%s5 + $0x198] sm:$0xff]
  %v2014 = vld [vmem:[%s5 + $0x1a0] sm:$0xff]
  %v2015 = vld [vmem:[%s5 + $0x1a8] sm:$0xff]
  %v2016 = vld [vmem:[%s5 + $0x1b0] sm:$0xff]
  %v2017 = vld [vmem:[%s5 + $0x1b8] sm:$0xff]
  %v2018 = vld [vmem:[%s5 + $0x1c0] sm:$0xff]
  %v2019 = vld [vmem:[%s5 + $0x1c8] sm:$0xff]
  %v2020 = vld [vmem:[%s5 + $0x1d0] sm:$0xff]
  %v2021 = vld [vmem:[%s5 + $0x1d8] sm:$0xff]
  %v2022 = vld [vmem:[%s5 + $0x1e0] sm:$0xff]
  %v2023 = vld [vmem:[%s5 + $0x1e8] sm:$0xff]
  %v2024 = vld [vmem:[%s5 + $0x1f0] sm:$0xff]
  %v2025 = vld [vmem:[%s5 + $0x1f8] sm:$0xff]
  %v2026 = vld [vmem:[%s5 + $0x200] sm:$0xff]
  %v2027 = vld [vmem:[%s5 + $0x208] sm:$0xff]
  %v2028 = vld [vmem:[%s5 + $0x210] sm:$0xff]
  %v2029 = vld [vmem:[%s5 + $0x218] sm:$0xff]
  %v2030 = vld [vmem:[%s5 + $0x220] sm:$0xff]
  %v2031 = vld [vmem:[%s5 + $0x228] sm:$0xff]
  %v2032 = vld [vmem:[%s5 + $0x230] sm:$0xff]
  %v2033 = vld [vmem:[%s5 + $0x238] sm:$0xff]
  %v2034 = vld [vmem:[%s5 + $0x240] sm:$0xff]
  %v2035 = vld [vmem:[%s5 + $0x248] sm:$0xff]
  %v2036 = vld [vmem:[%s5 + $0x250] sm:$0xff]
  %v2037 = vld [vmem:[%s5 + $0x258] sm:$0xff]
  %v2038 = vld [vmem:[%s5 + $0x260] sm:$0xff]
  %v2039 = vld [vmem:[%s5 + $0x268] sm:$0xff]
  %v2040 = vld [vmem:[%s5 + $0x270] sm:$0xff]
  %v2041 = vld [vmem:[%s5 + $0x278] sm:$0xff]
  %v2042 = vld [vmem:[%s5 + $0x280] sm:$0xff]
  %v2043 = vld [vmem:[%s5 + $0x288] sm:$0xff]
  %v2044 = vld [vmem:[%s5 + $0x290] sm:$0xff]
  %v2045 = vld [vmem:[%s5 + $0x298] sm:$0xff]
  %v2046 = vld [vmem:[%s5 + $0x2a0] sm:$0xff]
  %v2047 = vld [vmem:[%s5 + $0x2a8] sm:$0xff]
  %v2048 = vld [vmem:[%s5 + $0x2b0] sm:$0xff]
  %v2049 = vld [vmem:[%s5 + $0x2b8] sm:$0xff]
  %v2050 = vld [vmem:[%s5 + $0x2c0] sm:$0xff]
  %v2051 = vld [vmem:[%s5 + $0x2c8] sm:$0xff]
  %v2052 = vld [vmem:[%s5 + $0x2d0] sm:$0xff]
  %v2053 = vld [vmem:[%s5 + $0x2d8] sm:$0xff]
  %v2054 = vld [vmem:[%s5 + $0x2e0] sm:$0xff]
  %v2055 = vld [vmem:[%s5 + $0x2e8] sm:$0xff]
  %v2056 = vld [vmem:[%s5 + $0x2f0] sm:$0xff]
  %v2057 = vld [vmem:[%s5 + $0x2f8] sm:$0xff]
  %v2058 = vld [vmem:[%s6] sm:$0x3f]
  %v2060 = vlaneseq
  %v2061 = vshrl.u32 %v2060, 7
  %v2062 = vsub.s32 0, %v2061
  %v2063 = vrot.slane %v2058, %v2062
  %v2064 = vlaneseq
  %v2065 = vshrl.u32 %v2064, 7
  %v2066 = vsub.s32 1, %v2065
  %v2067 = vrot.slane %v2058, %v2066
  %v2068 = vlaneseq
  %v2069 = vshrl.u32 %v2068, 7
  %v2070 = vsub.s32 2, %v2069
  %v2071 = vrot.slane %v2058, %v2070
  %v2072 = vlaneseq
  %v2073 = vshrl.u32 %v2072, 7
  %v2074 = vsub.s32 3, %v2073
  %v2075 = vrot.slane %v2058, %v2074
  %v2076 = vlaneseq
  %v2077 = vshrl.u32 %v2076, 7
  %v2078 = vsub.s32 4, %v2077
  %v2079 = vrot.slane %v2058, %v2078
  %v2080 = vlaneseq
  %v2081 = vshrl.u32 %v2080, 7
  %v2082 = vsub.s32 5, %v2081
  %v2083 = vrot.slane %v2058, %v2082
  %v2186 = vunpack.c.l.b16 %v1962
  %v2187 = vunpack.c.h.b16 %v1962
  %v2188 = vunpack.c.l.b16 %v1963
  %v2189 = vunpack.c.h.b16 %v1963
  %v2190 = vunpack.c.l.b16 %v1964
  %v2191 = vunpack.c.h.b16 %v1964
  %v2192 = vunpack.c.l.b16 %v1965
  %v2193 = vunpack.c.h.b16 %v1965
  %v2194 = vunpack.c.l.b16 %v1966
  %v2195 = vunpack.c.h.b16 %v1966
  %v2196 = vunpack.c.l.b16 %v1967
  %v2197 = vunpack.c.h.b16 %v1967
  %v2198 = vunpack.c.l.b16 %v1968
  %v2199 = vunpack.c.h.b16 %v1968
  %v2200 = vunpack.c.l.b16 %v1969
  %v2201 = vunpack.c.h.b16 %v1969
  %v2202 = vunpack.c.l.b16 %v1970
  %v2203 = vunpack.c.h.b16 %v1970
  %v2204 = vunpack.c.l.b16 %v1971
  %v2205 = vunpack.c.h.b16 %v1971
  %v2206 = vunpack.c.l.b16 %v1972
  %v2207 = vunpack.c.h.b16 %v1972
  %v2208 = vunpack.c.l.b16 %v1973
  %v2209 = vunpack.c.h.b16 %v1973
  %v2210 = vunpack.c.l.b16 %v1974
  %v2211 = vunpack.c.h.b16 %v1974
  %v2212 = vunpack.c.l.b16 %v1975
  %v2213 = vunpack.c.h.b16 %v1975
  %v2214 = vunpack.c.l.b16 %v1976
  %v2215 = vunpack.c.h.b16 %v1976
  %v2216 = vunpack.c.l.b16 %v1977
  %v2217 = vunpack.c.h.b16 %v1977
  %v2218 = vunpack.c.l.b16 %v1978
  %v2219 = vunpack.c.h.b16 %v1978
  %v2220 = vunpack.c.l.b16 %v1979
  %v2221 = vunpack.c.h.b16 %v1979
  %v2222 = vunpack.c.l.b16 %v1980
  %v2223 = vunpack.c.h.b16 %v1980
  %v2224 = vunpack.c.l.b16 %v1981
  %v2225 = vunpack.c.h.b16 %v1981
  %v2226 = vunpack.c.l.b16 %v1982
  %v2227 = vunpack.c.h.b16 %v1982
  %v2228 = vunpack.c.l.b16 %v1983
  %v2229 = vunpack.c.h.b16 %v1983
  %v2230 = vunpack.c.l.b16 %v1984
  %v2231 = vunpack.c.h.b16 %v1984
  %v2232 = vunpack.c.l.b16 %v1985
  %v2233 = vunpack.c.h.b16 %v1985
  %v2234 = vunpack.c.l.b16 %v1986
  %v2235 = vunpack.c.h.b16 %v1986
  %v2236 = vunpack.c.l.b16 %v1987
  %v2237 = vunpack.c.h.b16 %v1987
  %v2238 = vunpack.c.l.b16 %v1988
  %v2239 = vunpack.c.h.b16 %v1988
  %v2240 = vunpack.c.l.b16 %v1989
  %v2241 = vunpack.c.h.b16 %v1989
  %v2242 = vunpack.c.l.b16 %v1990
  %v2243 = vunpack.c.h.b16 %v1990
  %v2244 = vunpack.c.l.b16 %v1991
  %v2245 = vunpack.c.h.b16 %v1991
  %v2246 = vunpack.c.l.b16 %v1992
  %v2247 = vunpack.c.h.b16 %v1992
  %v2248 = vunpack.c.l.b16 %v1993
  %v2249 = vunpack.c.h.b16 %v1993
  %v2250 = vunpack.c.l.b16 %v1994
  %v2251 = vunpack.c.h.b16 %v1994
  %v2252 = vunpack.c.l.b16 %v1995
  %v2253 = vunpack.c.h.b16 %v1995
  %v2254 = vunpack.c.l.b16 %v1996
  %v2255 = vunpack.c.h.b16 %v1996
  %v2256 = vunpack.c.l.b16 %v1997
  %v2257 = vunpack.c.h.b16 %v1997
  %v2258 = vunpack.c.l.b16 %v1998
  %v2259 = vunpack.c.h.b16 %v1998
  %v2260 = vunpack.c.l.b16 %v1999
  %v2261 = vunpack.c.h.b16 %v1999
  %v2262 = vunpack.c.l.b16 %v2000
  %v2263 = vunpack.c.h.b16 %v2000
  %v2264 = vunpack.c.l.b16 %v2001
  %v2265 = vunpack.c.h.b16 %v2001
  %v2266 = vunpack.c.l.b16 %v2002
  %v2267 = vunpack.c.h.b16 %v2002
  %v2268 = vunpack.c.l.b16 %v2003
  %v2269 = vunpack.c.h.b16 %v2003
  %v2270 = vunpack.c.l.b16 %v2004
  %v2271 = vunpack.c.h.b16 %v2004
  %v2272 = vunpack.c.l.b16 %v2005
  %v2273 = vunpack.c.h.b16 %v2005
  %v2274 = vunpack.c.l.b16 %v2006
  %v2275 = vunpack.c.h.b16 %v2006
  %v2276 = vunpack.c.l.b16 %v2007
  %v2277 = vunpack.c.h.b16 %v2007
  %v2278 = vunpack.c.l.b16 %v2008
  %v2279 = vunpack.c.h.b16 %v2008
  %v2280 = vunpack.c.l.b16 %v2009
  %v2281 = vunpack.c.h.b16 %v2009
  %v2282 = vunpack.c.l.b16 %v2010
  %v2283 = vunpack.c.h.b16 %v2010
  %v2284 = vunpack.c.l.b16 %v2011
  %v2285 = vunpack.c.h.b16 %v2011
  %v2286 = vunpack.c.l.b16 %v2012
  %v2287 = vunpack.c.h.b16 %v2012
  %v2288 = vunpack.c.l.b16 %v2013
  %v2289 = vunpack.c.h.b16 %v2013
  %v2290 = vunpack.c.l.b16 %v2014
  %v2291 = vunpack.c.h.b16 %v2014
  %v2292 = vunpack.c.l.b16 %v2015
  %v2293 = vunpack.c.h.b16 %v2015
  %v2294 = vunpack.c.l.b16 %v2016
  %v2295 = vunpack.c.h.b16 %v2016
  %v2296 = vunpack.c.l.b16 %v2017
  %v2297 = vunpack.c.h.b16 %v2017
  %v2298 = vunpack.c.l.b16 %v2018
  %v2299 = vunpack.c.h.b16 %v2018
  %v2300 = vunpack.c.l.b16 %v2019
  %v2301 = vunpack.c.h.b16 %v2019
  %v2302 = vunpack.c.l.b16 %v2020
  %v2303 = vunpack.c.h.b16 %v2020
  %v2304 = vunpack.c.l.b16 %v2021
  %v2305 = vunpack.c.h.b16 %v2021
  %v2306 = vunpack.c.l.b16 %v2022
  %v2307 = vunpack.c.h.b16 %v2022
  %v2308 = vunpack.c.l.b16 %v2023
  %v2309 = vunpack.c.h.b16 %v2023
  %v2310 = vunpack.c.l.b16 %v2024
  %v2311 = vunpack.c.h.b16 %v2024
  %v2312 = vunpack.c.l.b16 %v2025
  %v2313 = vunpack.c.h.b16 %v2025
  %v2314 = vunpack.c.l.b16 %v2026
  %v2315 = vunpack.c.h.b16 %v2026
  %v2316 = vunpack.c.l.b16 %v2027
  %v2317 = vunpack.c.h.b16 %v2027
  %v2318 = vunpack.c.l.b16 %v2028
  %v2319 = vunpack.c.h.b16 %v2028
  %v2320 = vunpack.c.l.b16 %v2029
  %v2321 = vunpack.c.h.b16 %v2029
  %v2322 = vunpack.c.l.b16 %v2030
  %v2323 = vunpack.c.h.b16 %v2030
  %v2324 = vunpack.c.l.b16 %v2031
  %v2325 = vunpack.c.h.b16 %v2031
  %v2326 = vunpack.c.l.b16 %v2032
  %v2327 = vunpack.c.h.b16 %v2032
  %v2328 = vunpack.c.l.b16 %v2033
  %v2329 = vunpack.c.h.b16 %v2033
  %v2330 = vunpack.c.l.b16 %v2034
  %v2331 = vunpack.c.h.b16 %v2034
  %v2332 = vunpack.c.l.b16 %v2035
  %v2333 = vunpack.c.h.b16 %v2035
  %v2334 = vunpack.c.l.b16 %v2036
  %v2335 = vunpack.c.h.b16 %v2036
  %v2336 = vunpack.c.l.b16 %v2037
  %v2337 = vunpack.c.h.b16 %v2037
  %v2338 = vunpack.c.l.b16 %v2038
  %v2339 = vunpack.c.h.b16 %v2038
  %v2340 = vunpack.c.l.b16 %v2039
  %v2341 = vunpack.c.h.b16 %v2039
  %v2342 = vunpack.c.l.b16 %v2040
  %v2343 = vunpack.c.h.b16 %v2040
  %v2344 = vunpack.c.l.b16 %v2041
  %v2345 = vunpack.c.h.b16 %v2041
  %v2346 = vunpack.c.l.b16 %v2042
  %v2347 = vunpack.c.h.b16 %v2042
  %v2348 = vunpack.c.l.b16 %v2043
  %v2349 = vunpack.c.h.b16 %v2043
  %v2350 = vunpack.c.l.b16 %v2044
  %v2351 = vunpack.c.h.b16 %v2044
  %v2352 = vunpack.c.l.b16 %v2045
  %v2353 = vunpack.c.h.b16 %v2045
  %v2354 = vunpack.c.l.b16 %v2046
  %v2355 = vunpack.c.h.b16 %v2046
  %v2356 = vunpack.c.l.b16 %v2047
  %v2357 = vunpack.c.h.b16 %v2047
  %v2358 = vunpack.c.l.b16 %v2048
  %v2359 = vunpack.c.h.b16 %v2048
  %v2360 = vunpack.c.l.b16 %v2049
  %v2361 = vunpack.c.h.b16 %v2049
  %v2362 = vunpack.c.l.b16 %v2050
  %v2363 = vunpack.c.h.b16 %v2050
  %v2364 = vunpack.c.l.b16 %v2051
  %v2365 = vunpack.c.h.b16 %v2051
  %v2366 = vunpack.c.l.b16 %v2052
  %v2367 = vunpack.c.h.b16 %v2052
  %v2368 = vunpack.c.l.b16 %v2053
  %v2369 = vunpack.c.h.b16 %v2053
  %v2370 = vunpack.c.l.b16 %v2054
  %v2371 = vunpack.c.h.b16 %v2054
  %v2372 = vunpack.c.l.b16 %v2055
  %v2373 = vunpack.c.h.b16 %v2055
  %v2374 = vunpack.c.l.b16 %v2056
  %v2375 = vunpack.c.h.b16 %v2056
  %v2376 = vunpack.c.l.b16 %v2057
  %v2377 = vunpack.c.h.b16 %v2057
  %v2378 = vpack.c.b16 %v2192, %v2186
  %v2379 = vpack.c.b16 %v2193, %v2187
  %v2380 = vpack.c.b16 %v2194, %v2188
  %v2381 = vpack.c.b16 %v2195, %v2189
  %v2382 = vpack.c.b16 %v2196, %v2190
  %v2383 = vpack.c.b16 %v2197, %v2191
  %v2384 = vpack.c.b16 %v2204, %v2198
  %v2385 = vpack.c.b16 %v2205, %v2199
  %v2386 = vpack.c.b16 %v2206, %v2200
  %v2387 = vpack.c.b16 %v2207, %v2201
  %v2388 = vpack.c.b16 %v2208, %v2202
  %v2389 = vpack.c.b16 %v2209, %v2203
  %v2390 = vpack.c.b16 %v2216, %v2210
  %v2391 = vpack.c.b16 %v2217, %v2211
  %v2392 = vpack.c.b16 %v2218, %v2212
  %v2393 = vpack.c.b16 %v2219, %v2213
  %v2394 = vpack.c.b16 %v2220, %v2214
  %v2395 = vpack.c.b16 %v2221, %v2215
  %v2396 = vpack.c.b16 %v2228, %v2222
  %v2397 = vpack.c.b16 %v2229, %v2223
  %v2398 = vpack.c.b16 %v2230, %v2224
  %v2399 = vpack.c.b16 %v2231, %v2225
  %v2400 = vpack.c.b16 %v2232, %v2226
  %v2401 = vpack.c.b16 %v2233, %v2227
  %v2402 = vpack.c.b16 %v2240, %v2234
  %v2403 = vpack.c.b16 %v2241, %v2235
  %v2404 = vpack.c.b16 %v2242, %v2236
  %v2405 = vpack.c.b16 %v2243, %v2237
  %v2406 = vpack.c.b16 %v2244, %v2238
  %v2407 = vpack.c.b16 %v2245, %v2239
  %v2408 = vpack.c.b16 %v2252, %v2246
  %v2409 = vpack.c.b16 %v2253, %v2247
  %v2410 = vpack.c.b16 %v2254, %v2248
  %v2411 = vpack.c.b16 %v2255, %v2249
  %v2412 = vpack.c.b16 %v2256, %v2250
  %v2413 = vpack.c.b16 %v2257, %v2251
  %v2414 = vpack.c.b16 %v2264, %v2258
  %v2415 = vpack.c.b16 %v2265, %v2259
  %v2416 = vpack.c.b16 %v2266, %v2260
  %v2417 = vpack.c.b16 %v2267, %v2261
  %v2418 = vpack.c.b16 %v2268, %v2262
  %v2419 = vpack.c.b16 %v2269, %v2263
  %v2420 = vpack.c.b16 %v2276, %v2270
  %v2421 = vpack.c.b16 %v2277, %v2271
  %v2422 = vpack.c.b16 %v2278, %v2272
  %v2423 = vpack.c.b16 %v2279, %v2273
  %v2424 = vpack.c.b16 %v2280, %v2274
  %v2425 = vpack.c.b16 %v2281, %v2275
  %v2426 = vpack.c.b16 %v2288, %v2282
  %v2427 = vpack.c.b16 %v2289, %v2283
  %v2428 = vpack.c.b16 %v2290, %v2284
  %v2429 = vpack.c.b16 %v2291, %v2285
  %v2430 = vpack.c.b16 %v2292, %v2286
  %v2431 = vpack.c.b16 %v2293, %v2287
  %v2432 = vpack.c.b16 %v2300, %v2294
  %v2433 = vpack.c.b16 %v2301, %v2295
  %v2434 = vpack.c.b16 %v2302, %v2296
  %v2435 = vpack.c.b16 %v2303, %v2297
  %v2436 = vpack.c.b16 %v2304, %v2298
  %v2437 = vpack.c.b16 %v2305, %v2299
  %v2438 = vpack.c.b16 %v2312, %v2306
  %v2439 = vpack.c.b16 %v2313, %v2307
  %v2440 = vpack.c.b16 %v2314, %v2308
  %v2441 = vpack.c.b16 %v2315, %v2309
  %v2442 = vpack.c.b16 %v2316, %v2310
  %v2443 = vpack.c.b16 %v2317, %v2311
  %v2444 = vpack.c.b16 %v2324, %v2318
  %v2445 = vpack.c.b16 %v2325, %v2319
  %v2446 = vpack.c.b16 %v2326, %v2320
  %v2447 = vpack.c.b16 %v2327, %v2321
  %v2448 = vpack.c.b16 %v2328, %v2322
  %v2449 = vpack.c.b16 %v2329, %v2323
  %v2450 = vpack.c.b16 %v2336, %v2330
  %v2451 = vpack.c.b16 %v2337, %v2331
  %v2452 = vpack.c.b16 %v2338, %v2332
  %v2453 = vpack.c.b16 %v2339, %v2333
  %v2454 = vpack.c.b16 %v2340, %v2334
  %v2455 = vpack.c.b16 %v2341, %v2335
  %v2456 = vpack.c.b16 %v2348, %v2342
  %v2457 = vpack.c.b16 %v2349, %v2343
  %v2458 = vpack.c.b16 %v2350, %v2344
  %v2459 = vpack.c.b16 %v2351, %v2345
  %v2460 = vpack.c.b16 %v2352, %v2346
  %v2461 = vpack.c.b16 %v2353, %v2347
  %v2462 = vpack.c.b16 %v2360, %v2354
  %v2463 = vpack.c.b16 %v2361, %v2355
  %v2464 = vpack.c.b16 %v2362, %v2356
  %v2465 = vpack.c.b16 %v2363, %v2357
  %v2466 = vpack.c.b16 %v2364, %v2358
  %v2467 = vpack.c.b16 %v2365, %v2359
  %v2468 = vpack.c.b16 %v2372, %v2366
  %v2469 = vpack.c.b16 %v2373, %v2367
  %v2470 = vpack.c.b16 %v2374, %v2368
  %v2471 = vpack.c.b16 %v2375, %v2369
  %v2472 = vpack.c.b16 %v2376, %v2370
  %v2473 = vpack.c.b16 %v2377, %v2371
  %2570 = vmatprep.subr.bf16.mxu0 %v2379
  %2571 = vmatpush1.bf16.msra.mxu0 %v2378
  %2572 = vmatprep.subr.bf16.mxu0 %v2385
  %2573 = vmatpush1.bf16.msra.mxu0 %v2384
  %2574 = vmatprep.subr.bf16.mxu0 %v2391
  %2575 = vmatpush1.bf16.msra.mxu0 %v2390
  %2576 = vmatprep.subr.bf16.mxu0 %v2397
  %2577 = vmatpush1.bf16.msra.mxu0 %v2396
  %2578 = vmatprep.subr.bf16.mxu0 %v2403
  %2579 = vmatpush1.bf16.msra.mxu0 %v2402
  %2580 = vmatprep.subr.bf16.mxu0 %v2409
  %2581 = vmatpush1.bf16.msra.mxu0 %v2408
  %2582 = vmatprep.subr.bf16.mxu0 %v2415
  %2583 = vmatpush1.bf16.msra.mxu0 %v2414
  %2584 = vmatprep.subr.bf16.mxu0 %v2421
  %2585 = vmatpush1.bf16.msra.mxu0 %v2420
  %2586 = vmatprep.subr.bf16.mxu0 %v2427
  %2587 = vmatpush1.bf16.msra.mxu0 %v2426
  %2588 = vmatprep.subr.bf16.mxu0 %v2433
  %2589 = vmatpush1.bf16.msra.mxu0 %v2432
  %2590 = vmatprep.subr.bf16.mxu0 %v2439
  %2591 = vmatpush1.bf16.msra.mxu0 %v2438
  %2592 = vmatprep.subr.bf16.mxu0 %v2445
  %2593 = vmatpush1.bf16.msra.mxu0 %v2444
  %2594 = vmatprep.subr.bf16.mxu0 %v2451
  %2595 = vmatpush1.bf16.msra.mxu0 %v2450
  %2596 = vmatprep.subr.bf16.mxu0 %v2457
  %2597 = vmatpush1.bf16.msra.mxu0 %v2456
  %2598 = vmatprep.subr.bf16.mxu0 %v2463
  %2599 = vmatpush1.bf16.msra.mxu0 %v2462
  %2600 = vmatprep.subr.bf16.mxu0 %v2469
  %2601 = vmatpush1.bf16.msra.mxu0 %v2468
  %2602 = vmatprep.mubr.bf16.mxu0 %v1961
  %2603 = vmatmul.mubr.bf16.gmra.mrb[0].mxu0 %v1960
  %v2604 = vpop.f32.mrb[0].mxu0
  %v2605 = vadd.f32 %v2063, %v2604
  %v2606 = vpop.f32.mrb[0].mxu0
  %v2607 = vadd.f32 %v2067, %v2606
  %v2608 = vpop.f32.mrb[0].mxu0
  %v2609 = vpop.f32.mrb[0].mxu0
  %2610 = vdwg.mxu0
  %2611 = vmatprep.subr.bf16.mxu0 %v2381
  %2612 = vmatpush1.bf16.msra.mxu0 %v2380
  %2613 = vmatprep.subr.bf16.mxu0 %v2387
  %2614 = vmatpush1.bf16.msra.mxu0 %v2386
  %2615 = vmatprep.subr.bf16.mxu0 %v2393
  %2616 = vmatpush1.bf16.msra.mxu0 %v2392
  %2617 = vmatprep.subr.bf16.mxu0 %v2399
  %2618 = vmatpush1.bf16.msra.mxu0 %v2398
  %2619 = vmatprep.subr.bf16.mxu0 %v2405
  %2620 = vmatpush1.bf16.msra.mxu0 %v2404
  %2621 = vmatprep.subr.bf16.mxu0 %v2411
  %2622 = vmatpush1.bf16.msra.mxu0 %v2410
  %2623 = vmatprep.subr.bf16.mxu0 %v2417
  %2624 = vmatpush1.bf16.msra.mxu0 %v2416
  %2625 = vmatprep.subr.bf16.mxu0 %v2423
  %2626 = vmatpush1.bf16.msra.mxu0 %v2422
  %2627 = vmatprep.subr.bf16.mxu0 %v2429
  %2628 = vmatpush1.bf16.msra.mxu0 %v2428
  %2629 = vmatprep.subr.bf16.mxu0 %v2435
  %2630 = vmatpush1.bf16.msra.mxu0 %v2434
  %2631 = vmatprep.subr.bf16.mxu0 %v2441
  %2632 = vmatpush1.bf16.msra.mxu0 %v2440
  %2633 = vmatprep.subr.bf16.mxu0 %v2447
  %2634 = vmatpush1.bf16.msra.mxu0 %v2446
  %2635 = vmatprep.subr.bf16.mxu0 %v2453
  %2636 = vmatpush1.bf16.msra.mxu0 %v2452
  %2637 = vmatprep.subr.bf16.mxu0 %v2459
  %2638 = vmatpush1.bf16.msra.mxu0 %v2458
  %2639 = vmatprep.subr.bf16.mxu0 %v2465
  %2640 = vmatpush1.bf16.msra.mxu0 %v2464
  %2641 = vmatprep.subr.bf16.mxu0 %v2471
  %2642 = vmatpush1.bf16.msra.mxu0 %v2470
  %2643 = vmatprep.mubr.bf16.mxu0 %v1961
  %2644 = vmatmul.mubr.bf16.gmra.mrb[0].mxu0 %v1960
  %v2645 = vpop.f32.mrb[0].mxu0
  %v2646 = vadd.f32 %v2071, %v2645
  %v2647 = vpop.f32.mrb[0].mxu0
  %v2648 = vadd.f32 %v2075, %v2647
  %v2649 = vpop.f32.mrb[0].mxu0
  %v2650 = vpop.f32.mrb[0].mxu0
  %2651 = vdwg.mxu0
  %2652 = vmatprep.subr.bf16.mxu0 %v2383
  %2653 = vmatpush1.bf16.msra.mxu0 %v2382
  %2654 = vmatprep.subr.bf16.mxu0 %v2389
  %2655 = vmatpush1.bf16.msra.mxu0 %v2388
  %2656 = vmatprep.subr.bf16.mxu0 %v2395
  %2657 = vmatpush1.bf16.msra.mxu0 %v2394
  %2658 = vmatprep.subr.bf16.mxu0 %v2401
  %2659 = vmatpush1.bf16.msra.mxu0 %v2400
  %2660 = vmatprep.subr.bf16.mxu0 %v2407
  %2661 = vmatpush1.bf16.msra.mxu0 %v2406
  %2662 = vmatprep.subr.bf16.mxu0 %v2413
  %2663 = vmatpush1.bf16.msra.mxu0 %v2412
  %2664 = vmatprep.subr.bf16.mxu0 %v2419
  %2665 = vmatpush1.bf16.msra.mxu0 %v2418
  %2666 = vmatprep.subr.bf16.mxu0 %v2425
  %2667 = vmatpush1.bf16.msra.mxu0 %v2424
  %2668 = vmatprep.subr.bf16.mxu0 %v2431
  %2669 = vmatpush1.bf16.msra.mxu0 %v2430
  %2670 = vmatprep.subr.bf16.mxu0 %v2437
  %2671 = vmatpush1.bf16.msra.mxu0 %v2436
  %2672 = vmatprep.subr.bf16.mxu0 %v2443
  %2673 = vmatpush1.bf16.msra.mxu0 %v2442
  %2674 = vmatprep.subr.bf16.mxu0 %v2449
  %2675 = vmatpush1.bf16.msra.mxu0 %v2448
  %2676 = vmatprep.subr.bf16.mxu0 %v2455
  %2677 = vmatpush1.bf16.msra.mxu0 %v2454
  %2678 = vmatprep.subr.bf16.mxu0 %v2461
  %2679 = vmatpush1.bf16.msra.mxu0 %v2460
  %2680 = vmatprep.subr.bf16.mxu0 %v2467
  %2681 = vmatpush1.bf16.msra.mxu0 %v2466
  %2682 = vmatprep.subr.bf16.mxu0 %v2473
  %2683 = vmatpush1.bf16.msra.mxu0 %v2472
  %2684 = vmatprep.mubr.bf16.mxu0 %v1961
  %2685 = vmatmul.mubr.bf16.gmra.mrb[0].mxu0 %v1960
  %v2686 = vpop.f32.mrb[0].mxu0
  %v2687 = vadd.f32 %v2079, %v2686
  %v2688 = vpop.f32.mrb[0].mxu0
  %v2689 = vadd.f32 %v2083, %v2688
  %v2690 = vpop.f32.mrb[0].mxu0
  %v2691 = vpop.f32.mrb[0].mxu0
  %2692 = vdwg.mxu0
  %v2693 = vxor.u32 %v2605, 2147483648
  %v2694 = vxor.u32 %v2607, 2147483648
  %v2695 = vxor.u32 %v2646, 2147483648
  %v2696 = vxor.u32 %v2648, 2147483648
  %v2697 = vxor.u32 %v2687, 2147483648
  %v2698 = vxor.u32 %v2689, 2147483648
  %v2699 = vmul.f32 %v2693, 1.442695
  %v2700 = vpow.pop %v2699
  %v2701 = vmul.f32 %v2694, 1.442695
  %v2702 = vpow.pop %v2701
  %v2703 = vmul.f32 %v2695, 1.442695
  %v2704 = vpow.pop %v2703
  %v2705 = vmul.f32 %v2696, 1.442695
  %v2706 = vpow.pop %v2705
  %v2707 = vmul.f32 %v2697, 1.442695
  %v2708 = vpow.pop %v2707
  %v2709 = vmul.f32 %v2698, 1.442695
  %v2710 = vpow.pop %v2709
  %v2711 = vadd.f32 %v2700, 1.0
  %v2712 = vadd.f32 %v2702, 1.0
  %v2713 = vadd.f32 %v2704, 1.0
  %v2714 = vadd.f32 %v2706, 1.0
  %v2715 = vadd.f32 %v2708, 1.0
  %v2716 = vadd.f32 %v2710, 1.0
  %v2717 = vrcp.pop %v2711
  %v2718 = vmul.f32 1.0, %v2717
  %v2719 = vrcp.pop %v2712
  %v2720 = vmul.f32 1.0, %v2719
  %v2721 = vrcp.pop %v2713
  %v2722 = vmul.f32 1.0, %v2721
  %v2723 = vrcp.pop %v2714
  %v2724 = vmul.f32 1.0, %v2723
  %v2725 = vrcp.pop %v2715
  %v2726 = vmul.f32 1.0, %v2725
  %v2727 = vrcp.pop %v2716
  %v2728 = vmul.f32 1.0, %v2727
  %v2729 = vmul.f32 %v1159, %v2718
  %v2730 = vmul.f32 %v1175, %v2720
  %v2731 = vmul.f32 %v1191, %v2722
  %v2732 = vmul.f32 %v1207, %v2724
  %v2733 = vmul.f32 %v1223, %v2726
  %v2734 = vmul.f32 %v1239, %v2728
  %2735 = vst [vmem:[%s12] sm:$0xff] %v2729
  %2736 = vst [vmem:[%s12 + $0x8] sm:$0xff] %v2730
  %2737 = vst [vmem:[%s12 + $0x10] sm:$0xff] %v2731
  %2738 = vst [vmem:[%s12 + $0x18] sm:$0xff] %v2732
  %2739 = vst [vmem:[%s12 + $0x20] sm:$0xff] %v2733
  %2740 = vst [vmem:[%s12 + $0x28] sm:$0xff] %v2734
  %v2741 = vpack.c.bf16 %v2729, %v2729
  %v2742 = vpack.c.bf16 %v2730, %v2730
  %v2743 = vpack.c.bf16 %v2731, %v2731
  %v2744 = vpack.c.bf16 %v2732, %v2732
  %v2745 = vpack.c.bf16 %v2733, %v2733
  %v2746 = vpack.c.bf16 %v2734, %v2734
  %v2747 = vld [vmem:[%s7] sm:$0xff]
  %v2748 = vld [vmem:[%s7 + $0x8] sm:$0xf]
  %v2749 = vld [vmem:[%s7 + $0xc] sm:$0xff]
  %v2750 = vld [vmem:[%s7 + $0x14] sm:$0xf]
  %v2751 = vld [vmem:[%s7 + $0x18] sm:$0xff]
  %v2752 = vld [vmem:[%s7 + $0x20] sm:$0xf]
  %v2753 = vld [vmem:[%s7 + $0x24] sm:$0xff]
  %v2754 = vld [vmem:[%s7 + $0x2c] sm:$0xf]
  %v2755 = vld [vmem:[%s7 + $0x30] sm:$0xff]
  %v2756 = vld [vmem:[%s7 + $0x38] sm:$0xf]
  %v2757 = vld [vmem:[%s7 + $0x3c] sm:$0xff]
  %v2758 = vld [vmem:[%s7 + $0x44] sm:$0xf]
  %v2759 = vld [vmem:[%s7 + $0x48] sm:$0xff]
  %v2760 = vld [vmem:[%s7 + $0x50] sm:$0xf]
  %v2761 = vld [vmem:[%s7 + $0x54] sm:$0xff]
  %v2762 = vld [vmem:[%s7 + $0x5c] sm:$0xf]
  %v2763 = vld [vmem:[%s7 + $0x60] sm:$0xff]
  %v2764 = vld [vmem:[%s7 + $0x68] sm:$0xf]
  %v2765 = vld [vmem:[%s7 + $0x6c] sm:$0xff]
  %v2766 = vld [vmem:[%s7 + $0x74] sm:$0xf]
  %v2767 = vld [vmem:[%s7 + $0x78] sm:$0xff]
  %v2768 = vld [vmem:[%s7 + $0x80] sm:$0xf]
  %v2769 = vld [vmem:[%s7 + $0x84] sm:$0xff]
  %v2770 = vld [vmem:[%s7 + $0x8c] sm:$0xf]
  %v2771 = vld [vmem:[%s7 + $0x90] sm:$0xff]
  %v2772 = vld [vmem:[%s7 + $0x98] sm:$0xf]
  %v2773 = vld [vmem:[%s7 + $0x9c] sm:$0xff]
  %v2774 = vld [vmem:[%s7 + $0xa4] sm:$0xf]
  %v2775 = vld [vmem:[%s7 + $0xa8] sm:$0xff]
  %v2776 = vld [vmem:[%s7 + $0xb0] sm:$0xf]
  %v2777 = vld [vmem:[%s7 + $0xb4] sm:$0xff]
  %v2778 = vld [vmem:[%s7 + $0xbc] sm:$0xf]
  %v2779 = vld [vmem:[%s7 + $0xc0] sm:$0xff]
  %v2780 = vld [vmem:[%s7 + $0xc8] sm:$0xf]
  %v2781 = vld [vmem:[%s7 + $0xcc] sm:$0xff]
  %v2782 = vld [vmem:[%s7 + $0xd4] sm:$0xf]
  %v2783 = vld [vmem:[%s7 + $0xd8] sm:$0xff]
  %v2784 = vld [vmem:[%s7 + $0xe0] sm:$0xf]
  %v2785 = vld [vmem:[%s7 + $0xe4] sm:$0xff]
  %v2786 = vld [vmem:[%s7 + $0xec] sm:$0xf]
  %v2787 = vld [vmem:[%s7 + $0xf0] sm:$0xff]
  %v2788 = vld [vmem:[%s7 + $0xf8] sm:$0xf]
  %v2789 = vld [vmem:[%s7 + $0xfc] sm:$0xff]
  %v2790 = vld [vmem:[%s7 + $0x104] sm:$0xf]
  %v2791 = vld [vmem:[%s7 + $0x108] sm:$0xff]
  %v2792 = vld [vmem:[%s7 + $0x110] sm:$0xf]
  %v2793 = vld [vmem:[%s7 + $0x114] sm:$0xff]
  %v2794 = vld [vmem:[%s7 + $0x11c] sm:$0xf]
  %v2795 = vld [vmem:[%s7 + $0x120] sm:$0xff]
  %v2796 = vld [vmem:[%s7 + $0x128] sm:$0xf]
  %v2797 = vld [vmem:[%s7 + $0x12c] sm:$0xff]
  %v2798 = vld [vmem:[%s7 + $0x134] sm:$0xf]
  %v2799 = vld [vmem:[%s7 + $0x138] sm:$0xff]
  %v2800 = vld [vmem:[%s7 + $0x140] sm:$0xf]
  %v2801 = vld [vmem:[%s7 + $0x144] sm:$0xff]
  %v2802 = vld [vmem:[%s7 + $0x14c] sm:$0xf]
  %v2803 = vld [vmem:[%s7 + $0x150] sm:$0xff]
  %v2804 = vld [vmem:[%s7 + $0x158] sm:$0xf]
  %v2805 = vld [vmem:[%s7 + $0x15c] sm:$0xff]
  %v2806 = vld [vmem:[%s7 + $0x164] sm:$0xf]
  %v2807 = vld [vmem:[%s7 + $0x168] sm:$0xff]
  %v2808 = vld [vmem:[%s7 + $0x170] sm:$0xf]
  %v2809 = vld [vmem:[%s7 + $0x174] sm:$0xff]
  %v2810 = vld [vmem:[%s7 + $0x17c] sm:$0xf]
  %v2811 = vld [vmem:[%s7 + $0x180] sm:$0xff]
  %v2812 = vld [vmem:[%s7 + $0x188] sm:$0xf]
  %v2813 = vld [vmem:[%s7 + $0x18c] sm:$0xff]
  %v2814 = vld [vmem:[%s7 + $0x194] sm:$0xf]
  %v2815 = vld [vmem:[%s7 + $0x198] sm:$0xff]
  %v2816 = vld [vmem:[%s7 + $0x1a0] sm:$0xf]
  %v2817 = vld [vmem:[%s7 + $0x1a4] sm:$0xff]
  %v2818 = vld [vmem:[%s7 + $0x1ac] sm:$0xf]
  %v2819 = vld [vmem:[%s7 + $0x1b0] sm:$0xff]
  %v2820 = vld [vmem:[%s7 + $0x1b8] sm:$0xf]
  %v2821 = vld [vmem:[%s7 + $0x1bc] sm:$0xff]
  %v2822 = vld [vmem:[%s7 + $0x1c4] sm:$0xf]
  %v2823 = vld [vmem:[%s7 + $0x1c8] sm:$0xff]
  %v2824 = vld [vmem:[%s7 + $0x1d0] sm:$0xf]
  %v2825 = vld [vmem:[%s7 + $0x1d4] sm:$0xff]
  %v2826 = vld [vmem:[%s7 + $0x1dc] sm:$0xf]
  %v2827 = vld [vmem:[%s7 + $0x1e0] sm:$0xff]
  %v2828 = vld [vmem:[%s7 + $0x1e8] sm:$0xf]
  %v2829 = vld [vmem:[%s7 + $0x1ec] sm:$0xff]
  %v2830 = vld [vmem:[%s7 + $0x1f4] sm:$0xf]
  %v2831 = vld [vmem:[%s7 + $0x1f8] sm:$0xff]
  %v2832 = vld [vmem:[%s7 + $0x200] sm:$0xf]
  %v2833 = vld [vmem:[%s7 + $0x204] sm:$0xff]
  %v2834 = vld [vmem:[%s7 + $0x20c] sm:$0xf]
  %v2835 = vld [vmem:[%s7 + $0x210] sm:$0xff]
  %v2836 = vld [vmem:[%s7 + $0x218] sm:$0xf]
  %v2837 = vld [vmem:[%s7 + $0x21c] sm:$0xff]
  %v2838 = vld [vmem:[%s7 + $0x224] sm:$0xf]
  %v2839 = vld [vmem:[%s7 + $0x228] sm:$0xff]
  %v2840 = vld [vmem:[%s7 + $0x230] sm:$0xf]
  %v2841 = vld [vmem:[%s7 + $0x234] sm:$0xff]
  %v2842 = vld [vmem:[%s7 + $0x23c] sm:$0xf]
  %v2843 = vld [vmem:[%s7 + $0x240] sm:$0xff]
  %v2844 = vld [vmem:[%s7 + $0x248] sm:$0xf]
  %v2845 = vld [vmem:[%s7 + $0x24c] sm:$0xff]
  %v2846 = vld [vmem:[%s7 + $0x254] sm:$0xf]
  %v2847 = vld [vmem:[%s7 + $0x258] sm:$0xff]
  %v2848 = vld [vmem:[%s7 + $0x260] sm:$0xf]
  %v2849 = vld [vmem:[%s7 + $0x264] sm:$0xff]
  %v2850 = vld [vmem:[%s7 + $0x26c] sm:$0xf]
  %v2851 = vld [vmem:[%s7 + $0x270] sm:$0xff]
  %v2852 = vld [vmem:[%s7 + $0x278] sm:$0xf]
  %v2853 = vld [vmem:[%s7 + $0x27c] sm:$0xff]
  %v2854 = vld [vmem:[%s7 + $0x284] sm:$0xf]
  %v2855 = vld [vmem:[%s7 + $0x288] sm:$0xff]
  %v2856 = vld [vmem:[%s7 + $0x290] sm:$0xf]
  %v2857 = vld [vmem:[%s7 + $0x294] sm:$0xff]
  %v2858 = vld [vmem:[%s7 + $0x29c] sm:$0xf]
  %v2859 = vld [vmem:[%s7 + $0x2a0] sm:$0xff]
  %v2860 = vld [vmem:[%s7 + $0x2a8] sm:$0xf]
  %v2861 = vld [vmem:[%s7 + $0x2ac] sm:$0xff]
  %v2862 = vld [vmem:[%s7 + $0x2b4] sm:$0xf]
  %v2863 = vld [vmem:[%s7 + $0x2b8] sm:$0xff]
  %v2864 = vld [vmem:[%s7 + $0x2c0] sm:$0xf]
  %v2865 = vld [vmem:[%s7 + $0x2c4] sm:$0xff]
  %v2866 = vld [vmem:[%s7 + $0x2cc] sm:$0xf]
  %v2867 = vld [vmem:[%s7 + $0x2d0] sm:$0xff]
  %v2868 = vld [vmem:[%s7 + $0x2d8] sm:$0xf]
  %v2869 = vld [vmem:[%s7 + $0x2dc] sm:$0xff]
  %v2870 = vld [vmem:[%s7 + $0x2e4] sm:$0xf]
  %v2871 = vld [vmem:[%s7 + $0x2e8] sm:$0xff]
  %v2872 = vld [vmem:[%s7 + $0x2f0] sm:$0xf]
  %v2873 = vld [vmem:[%s7 + $0x2f4] sm:$0xff]
  %v2874 = vld [vmem:[%s7 + $0x2fc] sm:$0xf]
  %v2875 = vld [vmem:[%s7 + $0x300] sm:$0xff]
  %v2876 = vld [vmem:[%s7 + $0x308] sm:$0xf]
  %v2877 = vld [vmem:[%s7 + $0x30c] sm:$0xff]
  %v2878 = vld [vmem:[%s7 + $0x314] sm:$0xf]
  %v2879 = vld [vmem:[%s7 + $0x318] sm:$0xff]
  %v2880 = vld [vmem:[%s7 + $0x320] sm:$0xf]
  %v2881 = vld [vmem:[%s7 + $0x324] sm:$0xff]
  %v2882 = vld [vmem:[%s7 + $0x32c] sm:$0xf]
  %v2883 = vld [vmem:[%s7 + $0x330] sm:$0xff]
  %v2884 = vld [vmem:[%s7 + $0x338] sm:$0xf]
  %v2885 = vld [vmem:[%s7 + $0x33c] sm:$0xff]
  %v2886 = vld [vmem:[%s7 + $0x344] sm:$0xf]
  %v2887 = vld [vmem:[%s7 + $0x348] sm:$0xff]
  %v2888 = vld [vmem:[%s7 + $0x350] sm:$0xf]
  %v2889 = vld [vmem:[%s7 + $0x354] sm:$0xff]
  %v2890 = vld [vmem:[%s7 + $0x35c] sm:$0xf]
  %v2891 = vld [vmem:[%s7 + $0x360] sm:$0xff]
  %v2892 = vld [vmem:[%s7 + $0x368] sm:$0xf]
  %v2893 = vld [vmem:[%s7 + $0x36c] sm:$0xff]
  %v2894 = vld [vmem:[%s7 + $0x374] sm:$0xf]
  %v2895 = vld [vmem:[%s7 + $0x378] sm:$0xff]
  %v2896 = vld [vmem:[%s7 + $0x380] sm:$0xf]
  %v2897 = vld [vmem:[%s7 + $0x384] sm:$0xff]
  %v2898 = vld [vmem:[%s7 + $0x38c] sm:$0xf]
  %v2899 = vld [vmem:[%s7 + $0x390] sm:$0xff]
  %v2900 = vld [vmem:[%s7 + $0x398] sm:$0xf]
  %v2901 = vld [vmem:[%s7 + $0x39c] sm:$0xff]
  %v2902 = vld [vmem:[%s7 + $0x3a4] sm:$0xf]
  %v2903 = vld [vmem:[%s7 + $0x3a8] sm:$0xff]
  %v2904 = vld [vmem:[%s7 + $0x3b0] sm:$0xf]
  %v2905 = vld [vmem:[%s7 + $0x3b4] sm:$0xff]
  %v2906 = vld [vmem:[%s7 + $0x3bc] sm:$0xf]
  %v2907 = vld [vmem:[%s7 + $0x3c0] sm:$0xff]
  %v2908 = vld [vmem:[%s7 + $0x3c8] sm:$0xf]
  %v2909 = vld [vmem:[%s7 + $0x3cc] sm:$0xff]
  %v2910 = vld [vmem:[%s7 + $0x3d4] sm:$0xf]
  %v2911 = vld [vmem:[%s7 + $0x3d8] sm:$0xff]
  %v2912 = vld [vmem:[%s7 + $0x3e0] sm:$0xf]
  %v2913 = vld [vmem:[%s7 + $0x3e4] sm:$0xff]
  %v2914 = vld [vmem:[%s7 + $0x3ec] sm:$0xf]
  %v2915 = vld [vmem:[%s7 + $0x3f0] sm:$0xff]
  %v2916 = vld [vmem:[%s7 + $0x3f8] sm:$0xf]
  %v2917 = vld [vmem:[%s7 + $0x3fc] sm:$0xff]
  %v2918 = vld [vmem:[%s7 + $0x404] sm:$0xf]
  %v2919 = vld [vmem:[%s7 + $0x408] sm:$0xff]
  %v2920 = vld [vmem:[%s7 + $0x410] sm:$0xf]
  %v2921 = vld [vmem:[%s7 + $0x414] sm:$0xff]
  %v2922 = vld [vmem:[%s7 + $0x41c] sm:$0xf]
  %v2923 = vld [vmem:[%s7 + $0x420] sm:$0xff]
  %v2924 = vld [vmem:[%s7 + $0x428] sm:$0xf]
  %v2925 = vld [vmem:[%s7 + $0x42c] sm:$0xff]
  %v2926 = vld [vmem:[%s7 + $0x434] sm:$0xf]
  %v2927 = vld [vmem:[%s7 + $0x438] sm:$0xff]
  %v2928 = vld [vmem:[%s7 + $0x440] sm:$0xf]
  %v2929 = vld [vmem:[%s7 + $0x444] sm:$0xff]
  %v2930 = vld [vmem:[%s7 + $0x44c] sm:$0xf]
  %v2931 = vld [vmem:[%s7 + $0x450] sm:$0xff]
  %v2932 = vld [vmem:[%s7 + $0x458] sm:$0xf]
  %v2933 = vld [vmem:[%s7 + $0x45c] sm:$0xff]
  %v2934 = vld [vmem:[%s7 + $0x464] sm:$0xf]
  %v2935 = vld [vmem:[%s7 + $0x468] sm:$0xff]
  %v2936 = vld [vmem:[%s7 + $0x470] sm:$0xf]
  %v2937 = vld [vmem:[%s7 + $0x474] sm:$0xff]
  %v2938 = vld [vmem:[%s7 + $0x47c] sm:$0xf]
  %v2939 = vld [vmem:[%s8] sm:$0x7]
  %v2941 = vlaneseq
  %v2942 = vshrl.u32 %v2941, 7
  %v2943 = vsub.s32 0, %v2942
  %v2944 = vrot.slane %v2939, %v2943
  %v2945 = vlaneseq
  %v2946 = vshrl.u32 %v2945, 7
  %v2947 = vsub.s32 1, %v2946
  %v2948 = vrot.slane %v2939, %v2947
  %v2949 = vlaneseq
  %v2950 = vshrl.u32 %v2949, 7
  %v2951 = vsub.s32 2, %v2950
  %v2952 = vrot.slane %v2939, %v2951
  %v3148 = vunpack.c.l.b16 %v2747
  %v3149 = vunpack.c.h.b16 %v2747
  %v3150 = vunpack.c.l.b16 %v2748
  %v3151 = vunpack.c.l.b16 %v2749
  %v3152 = vunpack.c.h.b16 %v2749
  %v3153 = vunpack.c.l.b16 %v2750
  %v3154 = vunpack.c.l.b16 %v2751
  %v3155 = vunpack.c.h.b16 %v2751
  %v3156 = vunpack.c.l.b16 %v2752
  %v3157 = vunpack.c.l.b16 %v2753
  %v3158 = vunpack.c.h.b16 %v2753
  %v3159 = vunpack.c.l.b16 %v2754
  %v3160 = vunpack.c.l.b16 %v2755
  %v3161 = vunpack.c.h.b16 %v2755
  %v3162 = vunpack.c.l.b16 %v2756
  %v3163 = vunpack.c.l.b16 %v2757
  %v3164 = vunpack.c.h.b16 %v2757
  %v3165 = vunpack.c.l.b16 %v2758
  %v3166 = vunpack.c.l.b16 %v2759
  %v3167 = vunpack.c.h.b16 %v2759
  %v3168 = vunpack.c.l.b16 %v2760
  %v3169 = vunpack.c.l.b16 %v2761
  %v3170 = vunpack.c.h.b16 %v2761
  %v3171 = vunpack.c.l.b16 %v2762
  %v3172 = vunpack.c.l.b16 %v2763
  %v3173 = vunpack.c.h.b16 %v2763
  %v3174 = vunpack.c.l.b16 %v2764
  %v3175 = vunpack.c.l.b16 %v2765
  %v3176 = vunpack.c.h.b16 %v2765
  %v3177 = vunpack.c.l.b16 %v2766
  %v3178 = vunpack.c.l.b16 %v2767
  %v3179 = vunpack.c.h.b16 %v2767
  %v3180 = vunpack.c.l.b16 %v2768
  %v3181 = vunpack.c.l.b16 %v2769
  %v3182 = vunpack.c.h.b16 %v2769
  %v3183 = vunpack.c.l.b16 %v2770
  %v3184 = vunpack.c.l.b16 %v2771
  %v3185 = vunpack.c.h.b16 %v2771
  %v3186 = vunpack.c.l.b16 %v2772
  %v3187 = vunpack.c.l.b16 %v2773
  %v3188 = vunpack.c.h.b16 %v2773
  %v3189 = vunpack.c.l.b16 %v2774
  %v3190 = vunpack.c.l.b16 %v2775
  %v3191 = vunpack.c.h.b16 %v2775
  %v3192 = vunpack.c.l.b16 %v2776
  %v3193 = vunpack.c.l.b16 %v2777
  %v3194 = vunpack.c.h.b16 %v2777
  %v3195 = vunpack.c.l.b16 %v2778
  %v3196 = vunpack.c.l.b16 %v2779
  %v3197 = vunpack.c.h.b16 %v2779
  %v3198 = vunpack.c.l.b16 %v2780
  %v3199 = vunpack.c.l.b16 %v2781
  %v3200 = vunpack.c.h.b16 %v2781
  %v3201 = vunpack.c.l.b16 %v2782
  %v3202 = vunpack.c.l.b16 %v2783
  %v3203 = vunpack.c.h.b16 %v2783
  %v3204 = vunpack.c.l.b16 %v2784
  %v3205 = vunpack.c.l.b16 %v2785
  %v3206 = vunpack.c.h.b16 %v2785
  %v3207 = vunpack.c.l.b16 %v2786
  %v3208 = vunpack.c.l.b16 %v2787
  %v3209 = vunpack.c.h.b16 %v2787
  %v3210 = vunpack.c.l.b16 %v2788
  %v3211 = vunpack.c.l.b16 %v2789
  %v3212 = vunpack.c.h.b16 %v2789
  %v3213 = vunpack.c.l.b16 %v2790
  %v3214 = vunpack.c.l.b16 %v2791
  %v3215 = vunpack.c.h.b16 %v2791
  %v3216 = vunpack.c.l.b16 %v2792
  %v3217 = vunpack.c.l.b16 %v2793
  %v3218 = vunpack.c.h.b16 %v2793
  %v3219 = vunpack.c.l.b16 %v2794
  %v3220 = vunpack.c.l.b16 %v2795
  %v3221 = vunpack.c.h.b16 %v2795
  %v3222 = vunpack.c.l.b16 %v2796
  %v3223 = vunpack.c.l.b16 %v2797
  %v3224 = vunpack.c.h.b16 %v2797
  %v3225 = vunpack.c.l.b16 %v2798
  %v3226 = vunpack.c.l.b16 %v2799
  %v3227 = vunpack.c.h.b16 %v2799
  %v3228 = vunpack.c.l.b16 %v2800
  %v3229 = vunpack.c.l.b16 %v2801
  %v3230 = vunpack.c.h.b16 %v2801
  %v3231 = vunpack.c.l.b16 %v2802
  %v3232 = vunpack.c.l.b16 %v2803
  %v3233 = vunpack.c.h.b16 %v2803
  %v3234 = vunpack.c.l.b16 %v2804
  %v3235 = vunpack.c.l.b16 %v2805
  %v3236 = vunpack.c.h.b16 %v2805
  %v3237 = vunpack.c.l.b16 %v2806
  %v3238 = vunpack.c.l.b16 %v2807
  %v3239 = vunpack.c.h.b16 %v2807
  %v3240 = vunpack.c.l.b16 %v2808
  %v3241 = vunpack.c.l.b16 %v2809
  %v3242 = vunpack.c.h.b16 %v2809
  %v3243 = vunpack.c.l.b16 %v2810
  %v3244 = vunpack.c.l.b16 %v2811
  %v3245 = vunpack.c.h.b16 %v2811
  %v3246 = vunpack.c.l.b16 %v2812
  %v3247 = vunpack.c.l.b16 %v2813
  %v3248 = vunpack.c.h.b16 %v2813
  %v3249 = vunpack.c.l.b16 %v2814
  %v3250 = vunpack.c.l.b16 %v2815
  %v3251 = vunpack.c.h.b16 %v2815
  %v3252 = vunpack.c.l.b16 %v2816
  %v3253 = vunpack.c.l.b16 %v2817
  %v3254 = vunpack.c.h.b16 %v2817
  %v3255 = vunpack.c.l.b16 %v2818
  %v3256 = vunpack.c.l.b16 %v2819
  %v3257 = vunpack.c.h.b16 %v2819
  %v3258 = vunpack.c.l.b16 %v2820
  %v3259 = vunpack.c.l.b16 %v2821
  %v3260 = vunpack.c.h.b16 %v2821
  %v3261 = vunpack.c.l.b16 %v2822
  %v3262 = vunpack.c.l.b16 %v2823
  %v3263 = vunpack.c.h.b16 %v2823
  %v3264 = vunpack.c.l.b16 %v2824
  %v3265 = vunpack.c.l.b16 %v2825
  %v3266 = vunpack.c.h.b16 %v2825
  %v3267 = vunpack.c.l.b16 %v2826
  %v3268 = vunpack.c.l.b16 %v2827
  %v3269 = vunpack.c.h.b16 %v2827
  %v3270 = vunpack.c.l.b16 %v2828
  %v3271 = vunpack.c.l.b16 %v2829
  %v3272 = vunpack.c.h.b16 %v2829
  %v3273 = vunpack.c.l.b16 %v2830
  %v3274 = vunpack.c.l.b16 %v2831
  %v3275 = vunpack.c.h.b16 %v2831
  %v3276 = vunpack.c.l.b16 %v2832
  %v3277 = vunpack.c.l.b16 %v2833
  %v3278 = vunpack.c.h.b16 %v2833
  %v3279 = vunpack.c.l.b16 %v2834
  %v3280 = vunpack.c.l.b16 %v2835
  %v3281 = vunpack.c.h.b16 %v2835
  %v3282 = vunpack.c.l.b16 %v2836
  %v3283 = vunpack.c.l.b16 %v2837
  %v3284 = vunpack.c.h.b16 %v2837
  %v3285 = vunpack.c.l.b16 %v2838
  %v3286 = vunpack.c.l.b16 %v2839
  %v3287 = vunpack.c.h.b16 %v2839
  %v3288 = vunpack.c.l.b16 %v2840
  %v3289 = vunpack.c.l.b16 %v2841
  %v3290 = vunpack.c.h.b16 %v2841
  %v3291 = vunpack.c.l.b16 %v2842
  %v3292 = vunpack.c.l.b16 %v2843
  %v3293 = vunpack.c.h.b16 %v2843
  %v3294 = vunpack.c.l.b16 %v2844
  %v3295 = vunpack.c.l.b16 %v2845
  %v3296 = vunpack.c.h.b16 %v2845
  %v3297 = vunpack.c.l.b16 %v2846
  %v3298 = vunpack.c.l.b16 %v2847
  %v3299 = vunpack.c.h.b16 %v2847
  %v3300 = vunpack.c.l.b16 %v2848
  %v3301 = vunpack.c.l.b16 %v2849
  %v3302 = vunpack.c.h.b16 %v2849
  %v3303 = vunpack.c.l.b16 %v2850
  %v3304 = vunpack.c.l.b16 %v2851
  %v3305 = vunpack.c.h.b16 %v2851
  %v3306 = vunpack.c.l.b16 %v2852
  %v3307 = vunpack.c.l.b16 %v2853
  %v3308 = vunpack.c.h.b16 %v2853
  %v3309 = vunpack.c.l.b16 %v2854
  %v3310 = vunpack.c.l.b16 %v2855
  %v3311 = vunpack.c.h.b16 %v2855
  %v3312 = vunpack.c.l.b16 %v2856
  %v3313 = vunpack.c.l.b16 %v2857
  %v3314 = vunpack.c.h.b16 %v2857
  %v3315 = vunpack.c.l.b16 %v2858
  %v3316 = vunpack.c.l.b16 %v2859
  %v3317 = vunpack.c.h.b16 %v2859
  %v3318 = vunpack.c.l.b16 %v2860
  %v3319 = vunpack.c.l.b16 %v2861
  %v3320 = vunpack.c.h.b16 %v2861
  %v3321 = vunpack.c.l.b16 %v2862
  %v3322 = vunpack.c.l.b16 %v2863
  %v3323 = vunpack.c.h.b16 %v2863
  %v3324 = vunpack.c.l.b16 %v2864
  %v3325 = vunpack.c.l.b16 %v2865
  %v3326 = vunpack.c.h.b16 %v2865
  %v3327 = vunpack.c.l.b16 %v2866
  %v3328 = vunpack.c.l.b16 %v2867
  %v3329 = vunpack.c.h.b16 %v2867
  %v3330 = vunpack.c.l.b16 %v2868
  %v3331 = vunpack.c.l.b16 %v2869
  %v3332 = vunpack.c.h.b16 %v2869
  %v3333 = vunpack.c.l.b16 %v2870
  %v3334 = vunpack.c.l.b16 %v2871
  %v3335 = vunpack.c.h.b16 %v2871
  %v3336 = vunpack.c.l.b16 %v2872
  %v3337 = vunpack.c.l.b16 %v2873
  %v3338 = vunpack.c.h.b16 %v2873
  %v3339 = vunpack.c.l.b16 %v2874
  %v3340 = vunpack.c.l.b16 %v2875
  %v3341 = vunpack.c.h.b16 %v2875
  %v3342 = vunpack.c.l.b16 %v2876
  %v3343 = vunpack.c.l.b16 %v2877
  %v3344 = vunpack.c.h.b16 %v2877
  %v3345 = vunpack.c.l.b16 %v2878
  %v3346 = vunpack.c.l.b16 %v2879
  %v3347 = vunpack.c.h.b16 %v2879
  %v3348 = vunpack.c.l.b16 %v2880
  %v3349 = vunpack.c.l.b16 %v2881
  %v3350 = vunpack.c.h.b16 %v2881
  %v3351 = vunpack.c.l.b16 %v2882
  %v3352 = vunpack.c.l.b16 %v2883
  %v3353 = vunpack.c.h.b16 %v2883
  %v3354 = vunpack.c.l.b16 %v2884
  %v3355 = vunpack.c.l.b16 %v2885
  %v3356 = vunpack.c.h.b16 %v2885
  %v3357 = vunpack.c.l.b16 %v2886
  %v3358 = vunpack.c.l.b16 %v2887
  %v3359 = vunpack.c.h.b16 %v2887
  %v3360 = vunpack.c.l.b16 %v2888
  %v3361 = vunpack.c.l.b16 %v2889
  %v3362 = vunpack.c.h.b16 %v2889
  %v3363 = vunpack.c.l.b16 %v2890
  %v3364 = vunpack.c.l.b16 %v2891
  %v3365 = vunpack.c.h.b16 %v2891
  %v3366 = vunpack.c.l.b16 %v2892
  %v3367 = vunpack.c.l.b16 %v2893
  %v3368 = vunpack.c.h.b16 %v2893
  %v3369 = vunpack.c.l.b16 %v2894
  %v3370 = vunpack.c.l.b16 %v2895
  %v3371 = vunpack.c.h.b16 %v2895
  %v3372 = vunpack.c.l.b16 %v2896
  %v3373 = vunpack.c.l.b16 %v2897
  %v3374 = vunpack.c.h.b16 %v2897
  %v3375 = vunpack.c.l.b16 %v2898
  %v3376 = vunpack.c.l.b16 %v2899
  %v3377 = vunpack.c.h.b16 %v2899
  %v3378 = vunpack.c.l.b16 %v2900
  %v3379 = vunpack.c.l.b16 %v2901
  %v3380 = vunpack.c.h.b16 %v2901
  %v3381 = vunpack.c.l.b16 %v2902
  %v3382 = vunpack.c.l.b16 %v2903
  %v3383 = vunpack.c.h.b16 %v2903
  %v3384 = vunpack.c.l.b16 %v2904
  %v3385 = vunpack.c.l.b16 %v2905
  %v3386 = vunpack.c.h.b16 %v2905
  %v3387 = vunpack.c.l.b16 %v2906
  %v3388 = vunpack.c.l.b16 %v2907
  %v3389 = vunpack.c.h.b16 %v2907
  %v3390 = vunpack.c.l.b16 %v2908
  %v3391 = vunpack.c.l.b16 %v2909
  %v3392 = vunpack.c.h.b16 %v2909
  %v3393 = vunpack.c.l.b16 %v2910
  %v3394 = vunpack.c.l.b16 %v2911
  %v3395 = vunpack.c.h.b16 %v2911
  %v3396 = vunpack.c.l.b16 %v2912
  %v3397 = vunpack.c.l.b16 %v2913
  %v3398 = vunpack.c.h.b16 %v2913
  %v3399 = vunpack.c.l.b16 %v2914
  %v3400 = vunpack.c.l.b16 %v2915
  %v3401 = vunpack.c.h.b16 %v2915
  %v3402 = vunpack.c.l.b16 %v2916
  %v3403 = vunpack.c.l.b16 %v2917
  %v3404 = vunpack.c.h.b16 %v2917
  %v3405 = vunpack.c.l.b16 %v2918
  %v3406 = vunpack.c.l.b16 %v2919
  %v3407 = vunpack.c.h.b16 %v2919
  %v3408 = vunpack.c.l.b16 %v2920
  %v3409 = vunpack.c.l.b16 %v2921
  %v3410 = vunpack.c.h.b16 %v2921
  %v3411 = vunpack.c.l.b16 %v2922
  %v3412 = vunpack.c.l.b16 %v2923
  %v3413 = vunpack.c.h.b16 %v2923
  %v3414 = vunpack.c.l.b16 %v2924
  %v3415 = vunpack.c.l.b16 %v2925
  %v3416 = vunpack.c.h.b16 %v2925
  %v3417 = vunpack.c.l.b16 %v2926
  %v3418 = vunpack.c.l.b16 %v2927
  %v3419 = vunpack.c.h.b16 %v2927
  %v3420 = vunpack.c.l.b16 %v2928
  %v3421 = vunpack.c.l.b16 %v2929
  %v3422 = vunpack.c.h.b16 %v2929
  %v3423 = vunpack.c.l.b16 %v2930
  %v3424 = vunpack.c.l.b16 %v2931
  %v3425 = vunpack.c.h.b16 %v2931
  %v3426 = vunpack.c.l.b16 %v2932
  %v3427 = vunpack.c.l.b16 %v2933
  %v3428 = vunpack.c.h.b16 %v2933
  %v3429 = vunpack.c.l.b16 %v2934
  %v3430 = vunpack.c.l.b16 %v2935
  %v3431 = vunpack.c.h.b16 %v2935
  %v3432 = vunpack.c.l.b16 %v2936
  %v3433 = vunpack.c.l.b16 %v2937
  %v3434 = vunpack.c.h.b16 %v2937
  %v3435 = vunpack.c.l.b16 %v2938
  %v3436 = vpack.c.b16 %v3151, %v3148
  %v3437 = vpack.c.b16 %v3152, %v3149
  %v3438 = vpack.c.b16 %v3153, %v3150
  %v3439 = vpack.c.b16 %v3157, %v3154
  %v3440 = vpack.c.b16 %v3158, %v3155
  %v3441 = vpack.c.b16 %v3159, %v3156
  %v3442 = vpack.c.b16 %v3163, %v3160
  %v3443 = vpack.c.b16 %v3164, %v3161
  %v3444 = vpack.c.b16 %v3165, %v3162
  %v3445 = vpack.c.b16 %v3169, %v3166
  %v3446 = vpack.c.b16 %v3170, %v3167
  %v3447 = vpack.c.b16 %v3171, %v3168
  %v3448 = vpack.c.b16 %v3175, %v3172
  %v3449 = vpack.c.b16 %v3176, %v3173
  %v3450 = vpack.c.b16 %v3177, %v3174
  %v3451 = vpack.c.b16 %v3181, %v3178
  %v3452 = vpack.c.b16 %v3182, %v3179
  %v3453 = vpack.c.b16 %v3183, %v3180
  %v3454 = vpack.c.b16 %v3187, %v3184
  %v3455 = vpack.c.b16 %v3188, %v3185
  %v3456 = vpack.c.b16 %v3189, %v3186
  %v3457 = vpack.c.b16 %v3193, %v3190
  %v3458 = vpack.c.b16 %v3194, %v3191
  %v3459 = vpack.c.b16 %v3195, %v3192
  %v3460 = vpack.c.b16 %v3199, %v3196
  %v3461 = vpack.c.b16 %v3200, %v3197
  %v3462 = vpack.c.b16 %v3201, %v3198
  %v3463 = vpack.c.b16 %v3205, %v3202
  %v3464 = vpack.c.b16 %v3206, %v3203
  %v3465 = vpack.c.b16 %v3207, %v3204
  %v3466 = vpack.c.b16 %v3211, %v3208
  %v3467 = vpack.c.b16 %v3212, %v3209
  %v3468 = vpack.c.b16 %v3213, %v3210
  %v3469 = vpack.c.b16 %v3217, %v3214
  %v3470 = vpack.c.b16 %v3218, %v3215
  %v3471 = vpack.c.b16 %v3219, %v3216
  %v3472 = vpack.c.b16 %v3223, %v3220
  %v3473 = vpack.c.b16 %v3224, %v3221
  %v3474 = vpack.c.b16 %v3225, %v3222
  %v3475 = vpack.c.b16 %v3229, %v3226
  %v3476 = vpack.c.b16 %v3230, %v3227
  %v3477 = vpack.c.b16 %v3231, %v3228
  %v3478 = vpack.c.b16 %v3235, %v3232
  %v3479 = vpack.c.b16 %v3236, %v3233
  %v3480 = vpack.c.b16 %v3237, %v3234
  %v3481 = vpack.c.b16 %v3241, %v3238
  %v3482 = vpack.c.b16 %v3242, %v3239
  %v3483 = vpack.c.b16 %v3243, %v3240
  %v3484 = vpack.c.b16 %v3247, %v3244
  %v3485 = vpack.c.b16 %v3248, %v3245
  %v3486 = vpack.c.b16 %v3249, %v3246
  %v3487 = vpack.c.b16 %v3253, %v3250
  %v3488 = vpack.c.b16 %v3254, %v3251
  %v3489 = vpack.c.b16 %v3255, %v3252
  %v3490 = vpack.c.b16 %v3259, %v3256
  %v3491 = vpack.c.b16 %v3260, %v3257
  %v3492 = vpack.c.b16 %v3261, %v3258
  %v3493 = vpack.c.b16 %v3265, %v3262
  %v3494 = vpack.c.b16 %v3266, %v3263
  %v3495 = vpack.c.b16 %v3267, %v3264
  %v3496 = vpack.c.b16 %v3271, %v3268
  %v3497 = vpack.c.b16 %v3272, %v3269
  %v3498 = vpack.c.b16 %v3273, %v3270
  %v3499 = vpack.c.b16 %v3277, %v3274
  %v3500 = vpack.c.b16 %v3278, %v3275
  %v3501 = vpack.c.b16 %v3279, %v3276
  %v3502 = vpack.c.b16 %v3283, %v3280
  %v3503 = vpack.c.b16 %v3284, %v3281
  %v3504 = vpack.c.b16 %v3285, %v3282
  %v3505 = vpack.c.b16 %v3289, %v3286
  %v3506 = vpack.c.b16 %v3290, %v3287
  %v3507 = vpack.c.b16 %v3291, %v3288
  %v3508 = vpack.c.b16 %v3295, %v3292
  %v3509 = vpack.c.b16 %v3296, %v3293
  %v3510 = vpack.c.b16 %v3297, %v3294
  %v3511 = vpack.c.b16 %v3301, %v3298
  %v3512 = vpack.c.b16 %v3302, %v3299
  %v3513 = vpack.c.b16 %v3303, %v3300
  %v3514 = vpack.c.b16 %v3307, %v3304
  %v3515 = vpack.c.b16 %v3308, %v3305
  %v3516 = vpack.c.b16 %v3309, %v3306
  %v3517 = vpack.c.b16 %v3313, %v3310
  %v3518 = vpack.c.b16 %v3314, %v3311
  %v3519 = vpack.c.b16 %v3315, %v3312
  %v3520 = vpack.c.b16 %v3319, %v3316
  %v3521 = vpack.c.b16 %v3320, %v3317
  %v3522 = vpack.c.b16 %v3321, %v3318
  %v3523 = vpack.c.b16 %v3325, %v3322
  %v3524 = vpack.c.b16 %v3326, %v3323
  %v3525 = vpack.c.b16 %v3327, %v3324
  %v3526 = vpack.c.b16 %v3331, %v3328
  %v3527 = vpack.c.b16 %v3332, %v3329
  %v3528 = vpack.c.b16 %v3333, %v3330
  %v3529 = vpack.c.b16 %v3337, %v3334
  %v3530 = vpack.c.b16 %v3338, %v3335
  %v3531 = vpack.c.b16 %v3339, %v3336
  %v3532 = vpack.c.b16 %v3343, %v3340
  %v3533 = vpack.c.b16 %v3344, %v3341
  %v3534 = vpack.c.b16 %v3345, %v3342
  %v3535 = vpack.c.b16 %v3349, %v3346
  %v3536 = vpack.c.b16 %v3350, %v3347
  %v3537 = vpack.c.b16 %v3351, %v3348
  %v3538 = vpack.c.b16 %v3355, %v3352
  %v3539 = vpack.c.b16 %v3356, %v3353
  %v3540 = vpack.c.b16 %v3357, %v3354
  %v3541 = vpack.c.b16 %v3361, %v3358
  %v3542 = vpack.c.b16 %v3362, %v3359
  %v3543 = vpack.c.b16 %v3363, %v3360
  %v3544 = vpack.c.b16 %v3367, %v3364
  %v3545 = vpack.c.b16 %v3368, %v3365
  %v3546 = vpack.c.b16 %v3369, %v3366
  %v3547 = vpack.c.b16 %v3373, %v3370
  %v3548 = vpack.c.b16 %v3374, %v3371
  %v3549 = vpack.c.b16 %v3375, %v3372
  %v3550 = vpack.c.b16 %v3379, %v3376
  %v3551 = vpack.c.b16 %v3380, %v3377
  %v3552 = vpack.c.b16 %v3381, %v3378
  %v3553 = vpack.c.b16 %v3385, %v3382
  %v3554 = vpack.c.b16 %v3386, %v3383
  %v3555 = vpack.c.b16 %v3387, %v3384
  %v3556 = vpack.c.b16 %v3391, %v3388
  %v3557 = vpack.c.b16 %v3392, %v3389
  %v3558 = vpack.c.b16 %v3393, %v3390
  %v3559 = vpack.c.b16 %v3397, %v3394
  %v3560 = vpack.c.b16 %v3398, %v3395
  %v3561 = vpack.c.b16 %v3399, %v3396
  %v3562 = vpack.c.b16 %v3403, %v3400
  %v3563 = vpack.c.b16 %v3404, %v3401
  %v3564 = vpack.c.b16 %v3405, %v3402
  %v3565 = vpack.c.b16 %v3409, %v3406
  %v3566 = vpack.c.b16 %v3410, %v3407
  %v3567 = vpack.c.b16 %v3411, %v3408
  %v3568 = vpack.c.b16 %v3415, %v3412
  %v3569 = vpack.c.b16 %v3416, %v3413
  %v3570 = vpack.c.b16 %v3417, %v3414
  %v3571 = vpack.c.b16 %v3421, %v3418
  %v3572 = vpack.c.b16 %v3422, %v3419
  %v3573 = vpack.c.b16 %v3423, %v3420
  %v3574 = vpack.c.b16 %v3427, %v3424
  %v3575 = vpack.c.b16 %v3428, %v3425
  %v3576 = vpack.c.b16 %v3429, %v3426
  %v3577 = vpack.c.b16 %v3433, %v3430
  %v3578 = vpack.c.b16 %v3434, %v3431
  %v3579 = vpack.c.b16 %v3435, %v3432
  %3724 = vmatprep.subr.bf16.mxu0 %v3437
  %3725 = vmatpush1.bf16.msra.mxu0 %v3436
  %3726 = vmatprep.subr.bf16.mxu0 %v3440
  %3727 = vmatpush1.bf16.msra.mxu0 %v3439
  %3728 = vmatprep.subr.bf16.mxu0 %v3443
  %3729 = vmatpush1.bf16.msra.mxu0 %v3442
  %3730 = vmatprep.subr.bf16.mxu0 %v3446
  %3731 = vmatpush1.bf16.msra.mxu0 %v3445
  %3732 = vmatprep.subr.bf16.mxu0 %v3449
  %3733 = vmatpush1.bf16.msra.mxu0 %v3448
  %3734 = vmatprep.subr.bf16.mxu0 %v3452
  %3735 = vmatpush1.bf16.msra.mxu0 %v3451
  %3736 = vmatprep.subr.bf16.mxu0 %v3455
  %3737 = vmatpush1.bf16.msra.mxu0 %v3454
  %3738 = vmatprep.subr.bf16.mxu0 %v3458
  %3739 = vmatpush1.bf16.msra.mxu0 %v3457
  %3740 = vmatprep.subr.bf16.mxu0 %v3461
  %3741 = vmatpush1.bf16.msra.mxu0 %v3460
  %3742 = vmatprep.subr.bf16.mxu0 %v3464
  %3743 = vmatpush1.bf16.msra.mxu0 %v3463
  %3744 = vmatprep.subr.bf16.mxu0 %v3467
  %3745 = vmatpush1.bf16.msra.mxu0 %v3466
  %3746 = vmatprep.subr.bf16.mxu0 %v3470
  %3747 = vmatpush1.bf16.msra.mxu0 %v3469
  %3748 = vmatprep.subr.bf16.mxu0 %v3473
  %3749 = vmatpush1.bf16.msra.mxu0 %v3472
  %3750 = vmatprep.subr.bf16.mxu0 %v3476
  %3751 = vmatpush1.bf16.msra.mxu0 %v3475
  %3752 = vmatprep.subr.bf16.mxu0 %v3479
  %3753 = vmatpush1.bf16.msra.mxu0 %v3478
  %3754 = vmatprep.subr.bf16.mxu0 %v3482
  %3755 = vmatpush1.bf16.msra.mxu0 %v3481
  %3756 = vmatprep.mubr.bf16.mxu0 %v2742
  %3757 = vmatmul.mubr.bf16.gmra.mrb[0].mxu0 %v2741
  %v3758 = vpop.f32.mrb[0].mxu0
  %v3759 = vadd.f32 %v2944, %v3758
  %v3760 = vpop.f32.mrb[0].mxu0
  %v3761 = vadd.f32 %v2948, %v3760
  %v3762 = vpop.f32.mrb[0].mxu0
  %v3763 = vpop.f32.mrb[0].mxu0
  %3764 = vdwg.mxu0
  %3765 = vmatprep.subr.bf16.mxu0 %v3485
  %3766 = vmatpush1.bf16.msra.mxu0 %v3484
  %3767 = vmatprep.subr.bf16.mxu0 %v3488
  %3768 = vmatpush1.bf16.msra.mxu0 %v3487
  %3769 = vmatprep.subr.bf16.mxu0 %v3491
  %3770 = vmatpush1.bf16.msra.mxu0 %v3490
  %3771 = vmatprep.subr.bf16.mxu0 %v3494
  %3772 = vmatpush1.bf16.msra.mxu0 %v3493
  %3773 = vmatprep.subr.bf16.mxu0 %v3497
  %3774 = vmatpush1.bf16.msra.mxu0 %v3496
  %3775 = vmatprep.subr.bf16.mxu0 %v3500
  %3776 = vmatpush1.bf16.msra.mxu0 %v3499
  %3777 = vmatprep.subr.bf16.mxu0 %v3503
  %3778 = vmatpush1.bf16.msra.mxu0 %v3502
  %3779 = vmatprep.subr.bf16.mxu0 %v3506
  %3780 = vmatpush1.bf16.msra.mxu0 %v3505
  %3781 = vmatprep.subr.bf16.mxu0 %v3509
  %3782 = vmatpush1.bf16.msra.mxu0 %v3508
  %3783 = vmatprep.subr.bf16.mxu0 %v3512
  %3784 = vmatpush1.bf16.msra.mxu0 %v3511
  %3785 = vmatprep.subr.bf16.mxu0 %v3515
  %3786 = vmatpush1.bf16.msra.mxu0 %v3514
  %3787 = vmatprep.subr.bf16.mxu0 %v3518
  %3788 = vmatpush1.bf16.msra.mxu0 %v3517
  %3789 = vmatprep.subr.bf16.mxu0 %v3521
  %3790 = vmatpush1.bf16.msra.mxu0 %v3520
  %3791 = vmatprep.subr.bf16.mxu0 %v3524
  %3792 = vmatpush1.bf16.msra.mxu0 %v3523
  %3793 = vmatprep.subr.bf16.mxu0 %v3527
  %3794 = vmatpush1.bf16.msra.mxu0 %v3526
  %3795 = vmatprep.subr.bf16.mxu0 %v3530
  %3796 = vmatpush1.bf16.msra.mxu0 %v3529
  %3797 = vmatprep.mubr.bf16.mxu0 %v2744
  %3798 = vmatmul.mubr.bf16.gmra.mrb[0].mxu0 %v2743
  %v3799 = vpop.f32.mrb[0].mxu0
  %v3800 = vadd.f32 %v3759, %v3799
  %v3801 = vpop.f32.mrb[0].mxu0
  %v3802 = vadd.f32 %v3761, %v3801
  %v3803 = vpop.f32.mrb[0].mxu0
  %v3804 = vpop.f32.mrb[0].mxu0
  %3805 = vdwg.mxu0
  %3806 = vmatprep.subr.bf16.mxu0 %v3533
  %3807 = vmatpush1.bf16.msra.mxu0 %v3532
  %3808 = vmatprep.subr.bf16.mxu0 %v3536
  %3809 = vmatpush1.bf16.msra.mxu0 %v3535
  %3810 = vmatprep.subr.bf16.mxu0 %v3539
  %3811 = vmatpush1.bf16.msra.mxu0 %v3538
  %3812 = vmatprep.subr.bf16.mxu0 %v3542
  %3813 = vmatpush1.bf16.msra.mxu0 %v3541
  %3814 = vmatprep.subr.bf16.mxu0 %v3545
  %3815 = vmatpush1.bf16.msra.mxu0 %v3544
  %3816 = vmatprep.subr.bf16.mxu0 %v3548
  %3817 = vmatpush1.bf16.msra.mxu0 %v3547
  %3818 = vmatprep.subr.bf16.mxu0 %v3551
  %3819 = vmatpush1.bf16.msra.mxu0 %v3550
  %3820 = vmatprep.subr.bf16.mxu0 %v3554
  %3821 = vmatpush1.bf16.msra.mxu0 %v3553
  %3822 = vmatprep.subr.bf16.mxu0 %v3557
  %3823 = vmatpush1.bf16.msra.mxu0 %v3556
  %3824 = vmatprep.subr.bf16.mxu0 %v3560
  %3825 = vmatpush1.bf16.msra.mxu0 %v3559
  %3826 = vmatprep.subr.bf16.mxu0 %v3563
  %3827 = vmatpush1.bf16.msra.mxu0 %v3562
  %3828 = vmatprep.subr.bf16.mxu0 %v3566
  %3829 = vmatpush1.bf16.msra.mxu0 %v3565
  %3830 = vmatprep.subr.bf16.mxu0 %v3569
  %3831 = vmatpush1.bf16.msra.mxu0 %v3568
  %3832 = vmatprep.subr.bf16.mxu0 %v3572
  %3833 = vmatpush1.bf16.msra.mxu0 %v3571
  %3834 = vmatprep.subr.bf16.mxu0 %v3575
  %3835 = vmatpush1.bf16.msra.mxu0 %v3574
  %3836 = vmatprep.subr.bf16.mxu0 %v3578
  %3837 = vmatpush1.bf16.msra.mxu0 %v3577
  %3838 = vmatprep.mubr.bf16.mxu0 %v2746
  %3839 = vmatmul.mubr.bf16.gmra.mrb[0].mxu0 %v2745
  %v3840 = vpop.f32.mrb[0].mxu0
  %v3841 = vadd.f32 %v3800, %v3840
  %v3842 = vpop.f32.mrb[0].mxu0
  %v3843 = vadd.f32 %v3802, %v3842
  %v3844 = vpop.f32.mrb[0].mxu0
  %v3845 = vpop.f32.mrb[0].mxu0
  %3846 = vdwg.mxu0
  %3847 = vmatprep.subr.bf16.mxu0 0
  %3848 = vmatpush1.bf16.msra.mxu0 %v3438
  %3849 = vmatprep.subr.bf16.mxu0 0
  %3850 = vmatpush1.bf16.msra.mxu0 %v3441
  %3851 = vmatprep.subr.bf16.mxu0 0
  %3852 = vmatpush1.bf16.msra.mxu0 %v3444
  %3853 = vmatprep.subr.bf16.mxu0 0
  %3854 = vmatpush1.bf16.msra.mxu0 %v3447
  %3855 = vmatprep.subr.bf16.mxu0 0
  %3856 = vmatpush1.bf16.msra.mxu0 %v3450
  %3857 = vmatprep.subr.bf16.mxu0 0
  %3858 = vmatpush1.bf16.msra.mxu0 %v3453
  %3859 = vmatprep.subr.bf16.mxu0 0
  %3860 = vmatpush1.bf16.msra.mxu0 %v3456
  %3861 = vmatprep.subr.bf16.mxu0 0
  %3862 = vmatpush1.bf16.msra.mxu0 %v3459
  %3863 = vmatprep.subr.bf16.mxu0 0
  %3864 = vmatpush1.bf16.msra.mxu0 %v3462
  %3865 = vmatprep.subr.bf16.mxu0 0
  %3866 = vmatpush1.bf16.msra.mxu0 %v3465
  %3867 = vmatprep.subr.bf16.mxu0 0
  %3868 = vmatpush1.bf16.msra.mxu0 %v3468
  %3869 = vmatprep.subr.bf16.mxu0 0
  %3870 = vmatpush1.bf16.msra.mxu0 %v3471
  %3871 = vmatprep.subr.bf16.mxu0 0
  %3872 = vmatpush1.bf16.msra.mxu0 %v3474
  %3873 = vmatprep.subr.bf16.mxu0 0
  %3874 = vmatpush1.bf16.msra.mxu0 %v3477
  %3875 = vmatprep.subr.bf16.mxu0 0
  %3876 = vmatpush1.bf16.msra.mxu0 %v3480
  %3877 = vmatprep.subr.bf16.mxu0 0
  %3878 = vmatpush1.bf16.msra.mxu0 %v3483
  %3879 = vmatprep.mubr.bf16.mxu0 %v2742
  %3880 = vmatmul.mubr.bf16.gmra.mrb[0].mxu0 %v2741
  %v3881 = vpop.f32.mrb[0].mxu0
  %v3882 = vadd.f32 %v2952, %v3881
  %v3883 = vpop.f32.mrb[0].mxu0
  %v3884 = vpop.f32.mrb[0].mxu0
  %v3885 = vpop.f32.mrb[0].mxu0
  %3886 = vdwg.mxu0
  %3887 = vmatprep.subr.bf16.mxu0 0
  %3888 = vmatpush1.bf16.msra.mxu0 %v3486
  %3889 = vmatprep.subr.bf16.mxu0 0
  %3890 = vmatpush1.bf16.msra.mxu0 %v3489
  %3891 = vmatprep.subr.bf16.mxu0 0
  %3892 = vmatpush1.bf16.msra.mxu0 %v3492
  %3893 = vmatprep.subr.bf16.mxu0 0
  %3894 = vmatpush1.bf16.msra.mxu0 %v3495
  %3895 = vmatprep.subr.bf16.mxu0 0
  %3896 = vmatpush1.bf16.msra.mxu0 %v3498
  %3897 = vmatprep.subr.bf16.mxu0 0
  %3898 = vmatpush1.bf16.msra.mxu0 %v3501
  %3899 = vmatprep.subr.bf16.mxu0 0
  %3900 = vmatpush1.bf16.msra.mxu0 %v3504
  %3901 = vmatprep.subr.bf16.mxu0 0
  %3902 = vmatpush1.bf16.msra.mxu0 %v3507
  %3903 = vmatprep.subr.bf16.mxu0 0
  %3904 = vmatpush1.bf16.msra.mxu0 %v3510
  %3905 = vmatprep.subr.bf16.mxu0 0
  %3906 = vmatpush1.bf16.msra.mxu0 %v3513
  %3907 = vmatprep.subr.bf16.mxu0 0
  %3908 = vmatpush1.bf16.msra.mxu0 %v3516
  %3909 = vmatprep.subr.bf16.mxu0 0
  %3910 = vmatpush1.bf16.msra.mxu0 %v3519
  %3911 = vmatprep.subr.bf16.mxu0 0
  %3912 = vmatpush1.bf16.msra.mxu0 %v3522
  %3913 = vmatprep.subr.bf16.mxu0 0
  %3914 = vmatpush1.bf16.msra.mxu0 %v3525
  %3915 = vmatprep.subr.bf16.mxu0 0
  %3916 = vmatpush1.bf16.msra.mxu0 %v3528
  %3917 = vmatprep.subr.bf16.mxu0 0
  %3918 = vmatpush1.bf16.msra.mxu0 %v3531
  %3919 = vmatprep.mubr.bf16.mxu0 %v2744
  %3920 = vmatmul.mubr.bf16.gmra.mrb[0].mxu0 %v2743
  %v3921 = vpop.f32.mrb[0].mxu0
  %v3922 = vadd.f32 %v3882, %v3921
  %v3923 = vpop.f32.mrb[0].mxu0
  %v3924 = vpop.f32.mrb[0].mxu0
  %v3925 = vpop.f32.mrb[0].mxu0
  %3926 = vdwg.mxu0
  %3927 = vmatprep.subr.bf16.mxu0 0
  %3928 = vmatpush1.bf16.msra.mxu0 %v3534
  %3929 = vmatprep.subr.bf16.mxu0 0
  %3930 = vmatpush1.bf16.msra.mxu0 %v3537
  %3931 = vmatprep.subr.bf16.mxu0 0
  %3932 = vmatpush1.bf16.msra.mxu0 %v3540
  %3933 = vmatprep.subr.bf16.mxu0 0
  %3934 = vmatpush1.bf16.msra.mxu0 %v3543
  %3935 = vmatprep.subr.bf16.mxu0 0
  %3936 = vmatpush1.bf16.msra.mxu0 %v3546
  %3937 = vmatprep.subr.bf16.mxu0 0
  %3938 = vmatpush1.bf16.msra.mxu0 %v3549
  %3939 = vmatprep.subr.bf16.mxu0 0
  %3940 = vmatpush1.bf16.msra.mxu0 %v3552
  %3941 = vmatprep.subr.bf16.mxu0 0
  %3942 = vmatpush1.bf16.msra.mxu0 %v3555
  %3943 = vmatprep.subr.bf16.mxu0 0
  %3944 = vmatpush1.bf16.msra.mxu0 %v3558
  %3945 = vmatprep.subr.bf16.mxu0 0
  %3946 = vmatpush1.bf16.msra.mxu0 %v3561
  %3947 = vmatprep.subr.bf16.mxu0 0
  %3948 = vmatpush1.bf16.msra.mxu0 %v3564
  %3949 = vmatprep.subr.bf16.mxu0 0
  %3950 = vmatpush1.bf16.msra.mxu0 %v3567
  %3951 = vmatprep.subr.bf16.mxu0 0
  %3952 = vmatpush1.bf16.msra.mxu0 %v3570
  %3953 = vmatprep.subr.bf16.mxu0 0
  %3954 = vmatpush1.bf16.msra.mxu0 %v3573
  %3955 = vmatprep.subr.bf16.mxu0 0
  %3956 = vmatpush1.bf16.msra.mxu0 %v3576
  %3957 = vmatprep.subr.bf16.mxu0 0
  %3958 = vmatpush1.bf16.msra.mxu0 %v3579
  %3959 = vmatprep.mubr.bf16.mxu0 %v2746
  %3960 = vmatmul.mubr.bf16.gmra.mrb[0].mxu0 %v2745
  %v3961 = vpop.f32.mrb[0].mxu0
  %v3962 = vadd.f32 %v3922, %v3961
  %v3963 = vpop.f32.mrb[0].mxu0
  %v3964 = vpop.f32.mrb[0].mxu0
  %v3965 = vpop.f32.mrb[0].mxu0
  %3966 = vdwg.mxu0
  %v3967 = vmax.f32 %v3841, 0.0
  %v3968 = vmax.f32 %v3843, 0.0
  %v3969 = vmax.f32 %v3962, 0.0
  %v3970 = vpack.c.bf16 %v3967, %v3967
  %v3971 = vpack.c.bf16 %v3968, %v3968
  %v3972 = vpack.c.bf16 %v3969, %v3969
  %v3973 = vld [vmem:[%s9] sm:$0xf]
  %v3974 = vld [vmem:[%s9 + $0x4] sm:$0xf]
  %v3975 = vld [vmem:[%s9 + $0x8] sm:$0xf]
  %v3976 = vld [vmem:[%s9 + $0xc] sm:$0xf]
  %v3977 = vld [vmem:[%s9 + $0x10] sm:$0xf]
  %v3978 = vld [vmem:[%s9 + $0x14] sm:$0xf]
  %v3979 = vld [vmem:[%s9 + $0x18] sm:$0xf]
  %v3980 = vld [vmem:[%s9 + $0x1c] sm:$0xf]
  %v3981 = vld [vmem:[%s9 + $0x20] sm:$0xf]
  %v3982 = vld [vmem:[%s9 + $0x24] sm:$0xf]
  %v3983 = vld [vmem:[%s9 + $0x28] sm:$0xf]
  %v3984 = vld [vmem:[%s9 + $0x2c] sm:$0xf]
  %v3985 = vld [vmem:[%s9 + $0x30] sm:$0xf]
  %v3986 = vld [vmem:[%s9 + $0x34] sm:$0xf]
  %v3987 = vld [vmem:[%s9 + $0x38] sm:$0xf]
  %v3988 = vld [vmem:[%s9 + $0x3c] sm:$0xf]
  %v3989 = vld [vmem:[%s9 + $0x40] sm:$0xf]
  %v3990 = vld [vmem:[%s9 + $0x44] sm:$0xf]
  %v3991 = vld [vmem:[%s9 + $0x48] sm:$0xf]
  %v3992 = vld [vmem:[%s9 + $0x4c] sm:$0xf]
  %v3993 = vld [vmem:[%s9 + $0x50] sm:$0xf]
  %v3994 = vld [vmem:[%s9 + $0x54] sm:$0xf]
  %v3995 = vld [vmem:[%s9 + $0x58] sm:$0xf]
  %v3996 = vld [vmem:[%s9 + $0x5c] sm:$0xf]
  %v3997 = vld [vmem:[%s9 + $0x60] sm:$0xf]
  %v3998 = vld [vmem:[%s9 + $0x64] sm:$0xf]
  %v3999 = vld [vmem:[%s9 + $0x68] sm:$0xf]
  %v4000 = vld [vmem:[%s9 + $0x6c] sm:$0xf]
  %v4001 = vld [vmem:[%s9 + $0x70] sm:$0xf]
  %v4002 = vld [vmem:[%s9 + $0x74] sm:$0xf]
  %v4003 = vld [vmem:[%s9 + $0x78] sm:$0xf]
  %v4004 = vld [vmem:[%s9 + $0x7c] sm:$0xf]
  %v4005 = vld [vmem:[%s9 + $0x80] sm:$0xf]
  %v4006 = vld [vmem:[%s9 + $0x84] sm:$0xf]
  %v4007 = vld [vmem:[%s9 + $0x88] sm:$0xf]
  %v4008 = vld [vmem:[%s9 + $0x8c] sm:$0xf]
  %v4009 = vld [vmem:[%s9 + $0x90] sm:$0xf]
  %v4010 = vld [vmem:[%s9 + $0x94] sm:$0xf]
  %v4011 = vld [vmem:[%s9 + $0x98] sm:$0xf]
  %v4012 = vld [vmem:[%s9 + $0x9c] sm:$0xf]
  %v4013 = vld [vmem:[%s9 + $0xa0] sm:$0xf]
  %v4014 = vld [vmem:[%s9 + $0xa4] sm:$0xf]
  %v4015 = vld [vmem:[%s9 + $0xa8] sm:$0xf]
  %v4016 = vld [vmem:[%s9 + $0xac] sm:$0xf]
  %v4017 = vld [vmem:[%s9 + $0xb0] sm:$0xf]
  %v4018 = vld [vmem:[%s9 + $0xb4] sm:$0xf]
  %v4019 = vld [vmem:[%s9 + $0xb8] sm:$0xf]
  %v4020 = vld [vmem:[%s9 + $0xbc] sm:$0xf]
  %v4021 = vld [vmem:[%s10] sm:$0x1]
  %v4023 = vlaneseq
  %v4024 = vshrl.u32 %v4023, 7
  %v4025 = vsub.s32 0, %v4024
  %v4026 = vrot.slane %v4021, %v4025
  %v4076 = vunpack.c.l.b16 %v3973
  %v4077 = vunpack.c.l.b16 %v3974
  %v4078 = vunpack.c.l.b16 %v3975
  %v4079 = vunpack.c.l.b16 %v3976
  %v4080 = vunpack.c.l.b16 %v3977
  %v4081 = vunpack.c.l.b16 %v3978
  %v4082 = vunpack.c.l.b16 %v3979
  %v4083 = vunpack.c.l.b16 %v3980
  %v4084 = vunpack.c.l.b16 %v3981
  %v4085 = vunpack.c.l.b16 %v3982
  %v4086 = vunpack.c.l.b16 %v3983
  %v4087 = vunpack.c.l.b16 %v3984
  %v4088 = vunpack.c.l.b16 %v3985
  %v4089 = vunpack.c.l.b16 %v3986
  %v4090 = vunpack.c.l.b16 %v3987
  %v4091 = vunpack.c.l.b16 %v3988
  %v4092 = vunpack.c.l.b16 %v3989
  %v4093 = vunpack.c.l.b16 %v3990
  %v4094 = vunpack.c.l.b16 %v3991
  %v4095 = vunpack.c.l.b16 %v3992
  %v4096 = vunpack.c.l.b16 %v3993
  %v4097 = vunpack.c.l.b16 %v3994
  %v4098 = vunpack.c.l.b16 %v3995
  %v4099 = vunpack.c.l.b16 %v3996
  %v4100 = vunpack.c.l.b16 %v3997
  %v4101 = vunpack.c.l.b16 %v3998
  %v4102 = vunpack.c.l.b16 %v3999
  %v4103 = vunpack.c.l.b16 %v4000
  %v4104 = vunpack.c.l.b16 %v4001
  %v4105 = vunpack.c.l.b16 %v4002
  %v4106 = vunpack.c.l.b16 %v4003
  %v4107 = vunpack.c.l.b16 %v4004
  %v4108 = vunpack.c.l.b16 %v4005
  %v4109 = vunpack.c.l.b16 %v4006
  %v4110 = vunpack.c.l.b16 %v4007
  %v4111 = vunpack.c.l.b16 %v4008
  %v4112 = vunpack.c.l.b16 %v4009
  %v4113 = vunpack.c.l.b16 %v4010
  %v4114 = vunpack.c.l.b16 %v4011
  %v4115 = vunpack.c.l.b16 %v4012
  %v4116 = vunpack.c.l.b16 %v4013
  %v4117 = vunpack.c.l.b16 %v4014
  %v4118 = vunpack.c.l.b16 %v4015
  %v4119 = vunpack.c.l.b16 %v4016
  %v4120 = vunpack.c.l.b16 %v4017
  %v4121 = vunpack.c.l.b16 %v4018
  %v4122 = vunpack.c.l.b16 %v4019
  %v4123 = vunpack.c.l.b16 %v4020
  %v4124 = vpack.c.b16 %v4077, %v4076
  %v4125 = vpack.c.b16 %v4079, %v4078
  %v4126 = vpack.c.b16 %v4081, %v4080
  %v4127 = vpack.c.b16 %v4083, %v4082
  %v4128 = vpack.c.b16 %v4085, %v4084
  %v4129 = vpack.c.b16 %v4087, %v4086
  %v4130 = vpack.c.b16 %v4089, %v4088
  %v4131 = vpack.c.b16 %v4091, %v4090
  %v4132 = vpack.c.b16 %v4093, %v4092
  %v4133 = vpack.c.b16 %v4095, %v4094
  %v4134 = vpack.c.b16 %v4097, %v4096
  %v4135 = vpack.c.b16 %v4099, %v4098
  %v4136 = vpack.c.b16 %v4101, %v4100
  %v4137 = vpack.c.b16 %v4103, %v4102
  %v4138 = vpack.c.b16 %v4105, %v4104
  %v4139 = vpack.c.b16 %v4107, %v4106
  %v4140 = vpack.c.b16 %v4109, %v4108
  %v4141 = vpack.c.b16 %v4111, %v4110
  %v4142 = vpack.c.b16 %v4113, %v4112
  %v4143 = vpack.c.b16 %v4115, %v4114
  %v4144 = vpack.c.b16 %v4117, %v4116
  %v4145 = vpack.c.b16 %v4119, %v4118
  %v4146 = vpack.c.b16 %v4121, %v4120
  %v4147 = vpack.c.b16 %v4123, %v4122
  %4172 = vmatprep.subr.bf16.mxu0 0
  %4173 = vmatpush1.bf16.msra.mxu0 %v4124
  %4174 = vmatprep.subr.bf16.mxu0 0
  %4175 = vmatpush1.bf16.msra.mxu0 %v4125
  %4176 = vmatprep.subr.bf16.mxu0 0
  %4177 = vmatpush1.bf16.msra.mxu0 %v4126
  %4178 = vmatprep.subr.bf16.mxu0 0
  %4179 = vmatpush1.bf16.msra.mxu0 %v4127
  %4180 = vmatprep.subr.bf16.mxu0 0
  %4181 = vmatpush1.bf16.msra.mxu0 %v4128
  %4182 = vmatprep.subr.bf16.mxu0 0
  %4183 = vmatpush1.bf16.msra.mxu0 %v4129
  %4184 = vmatprep.subr.bf16.mxu0 0
  %4185 = vmatpush1.bf16.msra.mxu0 %v4130
  %4186 = vmatprep.subr.bf16.mxu0 0
  %4187 = vmatpush1.bf16.msra.mxu0 %v4131
  %4188 = vmatprep.subr.bf16.mxu0 0
  %4189 = vmatpush1.bf16.msra.mxu0 %v4132
  %4190 = vmatprep.subr.bf16.mxu0 0
  %4191 = vmatpush1.bf16.msra.mxu0 %v4133
  %4192 = vmatprep.subr.bf16.mxu0 0
  %4193 = vmatpush1.bf16.msra.mxu0 %v4134
  %4194 = vmatprep.subr.bf16.mxu0 0
  %4195 = vmatpush1.bf16.msra.mxu0 %v4135
  %4196 = vmatprep.subr.bf16.mxu0 0
  %4197 = vmatpush1.bf16.msra.mxu0 %v4136
  %4198 = vmatprep.subr.bf16.mxu0 0
  %4199 = vmatpush1.bf16.msra.mxu0 %v4137
  %4200 = vmatprep.subr.bf16.mxu0 0
  %4201 = vmatpush1.bf16.msra.mxu0 %v4138
  %4202 = vmatprep.subr.bf16.mxu0 0
  %4203 = vmatpush1.bf16.msra.mxu0 %v4139
  %4204 = vmatprep.mubr.bf16.mxu0 %v3971
  %4205 = vmatmul.mubr.bf16.gmra.mrb[0].mxu0 %v3970
  %v4206 = vpop.f32.mrb[0].mxu0
  %v4207 = vadd.f32 %v4026, %v4206
  %v4208 = vpop.f32.mrb[0].mxu0
  %v4209 = vpop.f32.mrb[0].mxu0
  %v4210 = vpop.f32.mrb[0].mxu0
  %4211 = vdwg.mxu0
  %4212 = vmatprep.subr.bf16.mxu0 0
  %4213 = vmatpush1.bf16.msra.mxu0 %v4140
  %4214 = vmatprep.subr.bf16.mxu0 0
  %4215 = vmatpush1.bf16.msra.mxu0 %v4141
  %4216 = vmatprep.subr.bf16.mxu0 0
  %4217 = vmatpush1.bf16.msra.mxu0 %v4142
  %4218 = vmatprep.subr.bf16.mxu0 0
  %4219 = vmatpush1.bf16.msra.mxu0 %v4143
  %4220 = vmatprep.subr.bf16.mxu0 0
  %4221 = vmatpush1.bf16.msra.mxu0 %v4144
  %4222 = vmatprep.subr.bf16.mxu0 0
  %4223 = vmatpush1.bf16.msra.mxu0 %v4145
  %4224 = vmatprep.subr.bf16.mxu0 0
  %4225 = vmatpush1.bf16.msra.mxu0 %v4146
  %4226 = vmatprep.subr.bf16.mxu0 0
  %4227 = vmatpush1.bf16.msra.mxu0 %v4147
  %4228 = vmatprep.subr.bf16.mxu0 0
  %4229 = vmatpush1.bf16.msra.mxu0 0
  %4230 = vmatprep.subr.bf16.mxu0 0
  %4231 = vmatpush1.bf16.msra.mxu0 0
  %4232 = vmatprep.subr.bf16.mxu0 0
  %4233 = vmatpush1.bf16.msra.mxu0 0
  %4234 = vmatprep.subr.bf16.mxu0 0
  %4235 = vmatpush1.bf16.msra.mxu0 0
  %4236 = vmatprep.subr.bf16.mxu0 0
  %4237 = vmatpush1.bf16.msra.mxu0 0
  %4238 = vmatprep.subr.bf16.mxu0 0
  %4239 = vmatpush1.bf16.msra.mxu0 0
  %4240 = vmatprep.subr.bf16.mxu0 0
  %4241 = vmatpush1.bf16.msra.mxu0 0
  %4242 = vmatprep.subr.bf16.mxu0 0
  %4243 = vmatpush1.bf16.msra.mxu0 0
  %4244 = vmatprep.mubr.bf16.mxu0 0
  %4245 = vmatmul.mubr.bf16.gmra.mrb[0].mxu0 %v3972
  %v4246 = vpop.f32.mrb[0].mxu0
  %v4247 = vadd.f32 %v4207, %v4246
  %v4248 = vpop.f32.mrb[0].mxu0
  %v4249 = vpop.f32.mrb[0].mxu0
  %v4250 = vpop.f32.mrb[0].mxu0
  %4251 = vdwg.mxu0
  %v4252 = vlaneseq
  %v4253 = vand.u32 %v4252, 127
  %vm4254 = vcmp.eq.s32.totalorder %v4253, 5
  %v4255 = vxor.u32 %v4247, 2147483648
  %v4256 = vmul.f32 %v4255, 1.442695
  %v4257 = vpow.pop %v4256
  %v4258 = vadd.f32 %v4257, 1.0
  %v4259 = vrcp.pop %v4258
  %v4260 = vmul.f32 1.0, %v4259
  %v4261 = vsel %vm4254, %v4260, %v4247
  %4262 = vst [vmem:[%s11] sm:$0xff] %v4261
  // Predicated region
  $region46: #{modern_nucleus_classifier_forward.1} parent=0 // pred_check
    _
  $region47: #{modern_nucleus_classifier_forward.1} parent=0 // pred_check_branch
    %4264 = sbr.rel (0) target = $region49
  $region48: #{modern_nucleus_classifier_forward.1} parent=0 // pred_region
    _
  $region49: #{modern_nucleus_classifier_forward.1} parent=0 // pred_fallthru
    _
  // Predicated region
  $region50: #{modern_nucleus_classifier_forward.1} parent=0 // pred_check
    _
  $region51: #{modern_nucleus_classifier_forward.1} parent=0 // pred_check_branch
    %4266 = sbr.rel (0) target = $region53
  $region52: #{modern_nucleus_classifier_forward.1} parent=0 // pred_region
    _
  $region53: #{modern_nucleus_classifier_forward.1} parent=0 // pred_fallthru
    _
  // Predicated region
  $region54: #{modern_nucleus_classifier_forward.1} parent=0 // pred_check
    _
  $region55: #{modern_nucleus_classifier_forward.1} parent=0 // pred_check_branch
    %4268 = sbr.rel (0) target = $region57
  $region56: #{modern_nucleus_classifier_forward.1} parent=0 // pred_region
    _
  $region57: #{modern_nucleus_classifier_forward.1} parent=0 // pred_fallthru
    _
  // Predicated region
  $region58: #{modern_nucleus_classifier_forward.1} parent=0 // pred_check
    _
  $region59: #{modern_nucleus_classifier_forward.1} parent=0 // pred_check_branch
    %4270 = sbr.rel (0) target = $region61
  $region60: #{modern_nucleus_classifier_forward.1} parent=0 // pred_region
    _
  $region61: #{modern_nucleus_classifier_forward.1} parent=0 // pred_fallthru
    _

</llo_original>
